<compile_context>
chip_gen: v7x
topology: tpu7x:2x2x1
jax: 0.10.0
libtpu: 0.0.40
codegen_flags: <defaults>
</compile_context>

<pallas_src>
import functools
import math

import jax
import jax.numpy as jnp
from jax.experimental import pallas as pl
from jax.experimental.pallas import tpu as pltpu


CPAD = 128                       # lane width: conv OUTPUT channels padded to this
VMEM_BUDGET = 24 * 1024 * 1024   # per-call double-buffered footprint cap (v7x-safe)
BBOX_XFORM_CLIP = math.log(1000.0 / 16.0)


def _round_up(x, m):
    return ((x + m - 1) // m) * m


def _pick_tile(dim, candidates):
    for c in candidates:
        if dim % c == 0:
            return c
    return dim  # dim itself is always a legal block extent


# ----------------------------------------------------------------------------
# Pallas kernel 1a: single-shot matmul + bias + optional ReLU (K fits VMEM)
# ----------------------------------------------------------------------------
def _mm_bias_act_single_kernel(x_ref, w_ref, b_ref, o_ref, *, act):
    r = jnp.dot(x_ref[...], w_ref[...], preferred_element_type=jnp.float32)
    r = r + b_ref[...]
    if act == "relu":
        r = jnp.maximum(r, 0.0)
    o_ref[...] = r.astype(o_ref.dtype)


# ----------------------------------------------------------------------------
# Pallas kernel 1b: K-tiled matmul + bias + optional ReLU (f32 acc scratch,
# direct write on k==0, cast to output dtype on the last k step)
# ----------------------------------------------------------------------------
def _mm_bias_act_multi_kernel(x_ref, w_ref, b_ref, o_ref, acc_ref, *, act):
    k = pl.program_id(2)
    d = jnp.dot(x_ref[...], w_ref[...], preferred_element_type=jnp.float32)

    @pl.when(k == 0)
    def _():
        acc_ref[...] = d

    @pl.when(k > 0)
    def _():
        acc_ref[...] += d

    @pl.when(k == pl.num_programs(2) - 1)
    def _():
        r = acc_ref[...] + b_ref[...]
        if act == "relu":
            r = jnp.maximum(r, 0.0)
        o_ref[...] = r.astype(o_ref.dtype)


def _pallas_mm(xp, wp, bp, act, out_dtype):
    """xp: (Mp, Kp) bf16, wp: (Kp, Np) bf16, bp: (1, Np) f32 -> (Mp, Np) out_dtype."""
    Mp, Kp = xp.shape
    _, Np = wp.shape
    out_bytes = jnp.dtype(out_dtype).itemsize

    tn = _pick_tile(Np, (256, 128))
    tm = _pick_tile(Mp, (2048, 1024, 512, 256, 128, 64, 32, 16))
    # guarantee >=2 blocks on a parallel axis so both v7x TensorCores get work
    if Mp // tm == 1 and Np // tn == 1 and tm % 32 == 0:
        tm //= 2

    def footprint(tk_):
        return (2 * tm * tk_ * 2 + 2 * tk_ * tn * 2
                + 2 * tm * tn * out_bytes + tm * tn * 4)

    if footprint(Kp) <= VMEM_BUDGET:
        tk = Kp
    else:
        tk = 128
        for c in (1024, 768, 640, 576, 512, 384, 256):
            if Kp % c == 0 and footprint(c) <= VMEM_BUDGET:
                tk = c
                break

    single = tk == Kp
    cparams = pltpu.CompilerParams(
        dimension_semantics=(("parallel", "parallel") if single
                             else ("parallel", "parallel", "arbitrary")),
        vmem_limit_bytes=32 * 1024 * 1024,
    )

    if single:
        return pl.pallas_call(
            functools.partial(_mm_bias_act_single_kernel, act=act),
            out_shape=jax.ShapeDtypeStruct((Mp, Np), out_dtype),
            grid_spec=pltpu.PrefetchScalarGridSpec(
                num_scalar_prefetch=0,
                grid=(Mp // tm, Np // tn),
                in_specs=[
                    pl.BlockSpec((tm, Kp), lambda i, j: (i, 0)),
                    pl.BlockSpec((Kp, tn), lambda i, j: (0, j)),
                    pl.BlockSpec((1, tn), lambda i, j: (0, j)),
                ],
                out_specs=pl.BlockSpec((tm, tn), lambda i, j: (i, j)),
            ),
            compiler_params=cparams,
        )(xp, wp, bp)

    return pl.pallas_call(
        functools.partial(_mm_bias_act_multi_kernel, act=act),
        out_shape=jax.ShapeDtypeStruct((Mp, Np), out_dtype),
        grid_spec=pltpu.PrefetchScalarGridSpec(
            num_scalar_prefetch=0,
            grid=(Mp // tm, Np // tn, Kp // tk),
            in_specs=[
                pl.BlockSpec((tm, tk), lambda i, j, k: (i, k)),
                pl.BlockSpec((tk, tn), lambda i, j, k: (k, j)),
                pl.BlockSpec((1, tn), lambda i, j, k: (0, j)),
            ],
            out_specs=pl.BlockSpec((tm, tn), lambda i, j, k: (i, j)),
            scratch_shapes=[pltpu.VMEM((tm, tn), jnp.float32)],
        ),
        compiler_params=cparams,
    )(xp, wp, bp)


def pallas_linear(x, wp, bp, act="none", out_dtype=jnp.float32):
    """x: (M, K) any float; wp/bp pre-padded bf16/f32. Returns (M, Np) out_dtype."""
    M, K = x.shape
    Kp, Np = wp.shape
    Mp = _round_up(M, 16)                 # bf16 sublane packing: (16,128) min tile
    xb = x.astype(jnp.bfloat16)
    if Mp != M or Kp != K:
        xb = jnp.pad(xb, ((0, Mp - M), (0, Kp - K)))
    out = _pallas_mm(xb, wp, bp, act, out_dtype)
    return out[:M] if Mp != M else out


# ----------------------------------------------------------------------------
# Pallas kernel 2: fused RoI head  fc1 -> ReLU -> fc2 -> ReLU -> (cls ++ reg)
#   M = N*P is tiny, so all weights live in VMEM and we launch once.
# ----------------------------------------------------------------------------
def _roi_head_kernel(x_ref, w1_ref, b1_ref, w2_ref, b2_ref, w3_ref, b3_ref, o_ref):
    h1 = jnp.dot(x_ref[...], w1_ref[...], preferred_element_type=jnp.float32)
    h1 = jnp.maximum(h1 + b1_ref[...], 0.0)
    h2 = jnp.dot(h1.astype(jnp.bfloat16), w2_ref[...],
                 preferred_element_type=jnp.float32)
    h2 = jnp.maximum(h2 + b2_ref[...], 0.0)
    o = jnp.dot(h2.astype(jnp.bfloat16), w3_ref[...],
                preferred_element_type=jnp.float32)
    o_ref[...] = o + b3_ref[...]


def roi_head_pallas(x, w1, b1, w2, b2, w3, b3):
    M, K = x.shape
    Mp = _round_up(M, 16)
    xb = x.astype(jnp.bfloat16)
    if Mp != M:
        xb = jnp.pad(xb, ((0, Mp - M), (0, 0)))
    No = w3.shape[1]
    out = pl.pallas_call(
        _roi_head_kernel,
        out_shape=jax.ShapeDtypeStruct((Mp, No), jnp.float32),
        grid_spec=pltpu.PrefetchScalarGridSpec(
            num_scalar_prefetch=0,
            grid=(1,),
            in_specs=[
                pl.BlockSpec((Mp, K), lambda i: (0, 0)),
                pl.BlockSpec(w1.shape, lambda i: (0, 0)),
                pl.BlockSpec(b1.shape, lambda i: (0, 0)),
                pl.BlockSpec(w2.shape, lambda i: (0, 0)),
                pl.BlockSpec(b2.shape, lambda i: (0, 0)),
                pl.BlockSpec(w3.shape, lambda i: (0, 0)),
                pl.BlockSpec(b3.shape, lambda i: (0, 0)),
            ],
            out_specs=pl.BlockSpec((Mp, No), lambda i: (0, 0)),
        ),
        compiler_params=pltpu.CompilerParams(vmem_limit_bytes=32 * 1024 * 1024),
    )(xb, w1, b1, w2, b2, w3, b3)
    return out[:M] if Mp != M else out


# ----------------------------------------------------------------------------
# Conv / pool glue (compact-K im2col feeds the Pallas matmul, all bf16)
# ----------------------------------------------------------------------------
def im2col(x, kh, kw, stride, pad):
    # x: (N, H, W, C) -> (N, Ho, Wo, kh*kw*C)
    N, H, W, C = x.shape
    xp = jnp.pad(x, ((0, 0), (pad, pad), (pad, pad), (0, 0)))
    Ho = (H + 2 * pad - kh) // stride + 1
    Wo = (W + 2 * pad - kw) // stride + 1
    cols = []
    for i in range(kh):
        for j in range(kw):
            cols.append(xp[:, i:i + stride * Ho:stride, j:j + stride * Wo:stride, :])
    return jnp.concatenate(cols, axis=-1), Ho, Wo


def conv2d(x, wp, bp, kh, kw, stride=1, pad=0, act="none", cin=None,
           out_dtype=jnp.bfloat16):
    # wp: pre-packed compact-K weight (round_up(kh*kw*cin,128), CPAD) bf16.
    # TODO(synk): a stride-aware implicit-GEMM Pallas conv (tap index as an extra
    # grid axis) would remove the im2col HBM materialization entirely; with the
    # compact-K packing the im2col here only carries the real Cin taps.
    N = x.shape[0]
    if cin is not None and x.shape[-1] != cin:
        x = x[..., :cin]                   # drop dead lane padding before im2col
    cols, Ho, Wo = im2col(x.astype(jnp.bfloat16), kh, kw, stride, pad)
    out = pallas_linear(cols.reshape(N * Ho * Wo, cols.shape[-1]), wp, bp,
                        act=act, out_dtype=out_dtype)
    return out.reshape(N, Ho, Wo, out.shape[-1])


def conv1x1(x, wp, bp, act="none", cin=None, out_dtype=jnp.float32):
    # 1x1 conv: no im2col, just a reshape into the matmul kernel.
    N, H, W, C = x.shape
    if cin is not None and C != cin:
        x = x[..., :cin]
    out = pallas_linear(x.reshape(N * H * W, x.shape[-1]), wp, bp, act=act,
                        out_dtype=out_dtype)
    return out.reshape(N, H, W, out.shape[-1])


def maxpool2d(x, k=3, stride=2, pad=1):
    N, H, W, C = x.shape
    xp = jnp.pad(x, ((0, 0), (pad, pad), (pad, pad), (0, 0)),
                 constant_values=-1e30)
    Ho = (H + 2 * pad - k) // stride + 1
    Wo = (W + 2 * pad - k) // stride + 1
    out = None
    for i in range(k):
        for j in range(k):
            patch = xp[:, i:i + stride * Ho:stride, j:j + stride * Wo:stride, :]
            out = patch if out is None else jnp.maximum(out, patch)
    return out


# ----------------------------------------------------------------------------
# Box utilities (glue)
# ----------------------------------------------------------------------------
def make_anchors(Hf, Wf, downsample, scales, ratios):
    ys = (jnp.arange(Hf, dtype=jnp.float32) + 0.5) * downsample
    xs = (jnp.arange(Wf, dtype=jnp.float32) + 0.5) * downsample
    cy, cx = jnp.meshgrid(ys, xs, indexing="ij")  # (Hf, Wf)
    per_cell = []
    for s in scales:
        for r in ratios:
            h = s * (r ** 0.5)
            w = s / (r ** 0.5)
            per_cell.append(
                jnp.stack([cx - w / 2, cy - h / 2, cx + w / 2, cy + h / 2], axis=-1))
    anchors = jnp.stack(per_cell, axis=2)  # (Hf, Wf, A, 4)
    return anchors.reshape(-1, 4)


def decode_boxes(ref_boxes, deltas, weights, img_h, img_w):
    wx, wy, ww, wh = weights
    x1, y1, x2, y2 = (ref_boxes[..., i] for i in range(4))
    bw = x2 - x1
    bh = y2 - y1
    cx = x1 + 0.5 * bw
    cy = y1 + 0.5 * bh
    dx = deltas[..., 0] / wx
    dy = deltas[..., 1] / wy
    dw = jnp.clip(deltas[..., 2] / ww, -BBOX_XFORM_CLIP, BBOX_XFORM_CLIP)
    dh = jnp.clip(deltas[..., 3] / wh, -BBOX_XFORM_CLIP, BBOX_XFORM_CLIP)
    pcx = cx + dx * bw
    pcy = cy + dy * bh
    pw = bw * jnp.exp(dw)
    ph = bh * jnp.exp(dh)
    nx1 = jnp.clip(pcx - 0.5 * pw, 0.0, img_w)
    ny1 = jnp.clip(pcy - 0.5 * ph, 0.0, img_h)
    nx2 = jnp.clip(pcx + 0.5 * pw, 0.0, img_w)
    ny2 = jnp.clip(pcy + 0.5 * ph, 0.0, img_h)
    return jnp.stack([nx1, ny1, nx2, ny2], axis=-1)


def roi_pool(features, proposals, out_size, downsample):
    # RoIPool-style nearest (floor) sampling.  features: (N, Hf, Wf, C)
    # TODO(synk): torchvision uses MultiScaleRoIAlign (bilinear); and for large
    # proposal counts this gather belongs inside the RoI-head kernel via
    # scalar-prefetched indices + pl.ds DMAs instead of an XLA gather.
    N, Hf, Wf, C = features.shape
    boxes = proposals / downsample
    x1, y1, x2, y2 = (boxes[..., i] for i in range(4))
    bw = jnp.maximum(x2 - x1, 1e-3)
    bh = jnp.maximum(y2 - y1, 1e-3)
    centers = (jnp.arange(out_size, dtype=jnp.float32) + 0.5) / out_size  # (S,)
    sx = x1[..., None] + bw[..., None] * centers  # (N, P, S)
    sy = y1[..., None] + bh[..., None] * centers  # (N, P, S)
    xi = jnp.clip(jnp.floor(sx).astype(jnp.int32), 0, Wf - 1)
    yi = jnp.clip(jnp.floor(sy).astype(jnp.int32), 0, Hf - 1)
    b_idx = jnp.arange(N)[:, None, None, None]
    pooled = features[b_idx, yi[:, :, :, None], xi[:, :, None, :], :]  # (N,P,S,S,C)
    return pooled


# ----------------------------------------------------------------------------
# Deterministic parameter init (synthetic, scaled-down Faster-RCNN)
# ----------------------------------------------------------------------------
RPN_CONFIG = dict(
    anchor_scale=[24.0],
    anchor_aspect_ratio=[0.5, 1.0, 2.0],
    downsample=16,
    in_channels=64,
    num_anchors=3,
    bbox_reg_weights=(1.0, 1.0, 1.0, 1.0),
    top_n_test=8,
)
FASTRCNN_CONFIG = dict(
    output_size=2,
    downsample=16,
    out_channels=64,
    num_classes=5,
    bbox_reg_weights=(10.0, 10.0, 5.0, 5.0),
    top_n=8,
)


def init_params(key):
    def nrm(k, shape, scale=0.05):
        return scale * jax.random.normal(k, shape, dtype=jnp.float32)

    ks = jax.random.split(key, 16)
    p = {}
    # backbone (resnet50 children[:7] analogue: conv1 / maxpool / layer1-3, stride 16)
    p["conv1_w"] = nrm(ks[0], (7, 7, 3, 8))
    p["conv1_b"] = jnp.zeros((8,), jnp.float32)
    p["layer1_w"] = nrm(ks[1], (3, 3, 8, 16))
    p["layer1_b"] = jnp.zeros((16,), jnp.float32)
    p["layer2_w"] = nrm(ks[2], (3, 3, 16, 32))
    p["layer2_b"] = jnp.zeros((32,), jnp.float32)
    p["layer3_w"] = nrm(ks[3], (3, 3, 32, 64))
    p["layer3_b"] = jnp.zeros((64,), jnp.float32)
    # RPN head: 3x3 conv + 1x1 cls + 1x1 reg
    p["rpn_conv_w"] = nrm(ks[4], (3, 3, 64, 64))
    p["rpn_conv_b"] = jnp.zeros((64,), jnp.float32)
    p["rpn_cls_w"] = nrm(ks[5], (1, 1, 64, 3))       # num_anchors = 3
    p["rpn_cls_b"] = jnp.zeros((3,), jnp.float32)
    p["rpn_reg_w"] = nrm(ks[6], (1, 1, 64, 12))      # 4 * num_anchors
    p["rpn_reg_b"] = jnp.zeros((12,), jnp.float32)
    # FastRCNN RoI head fc (Linear(C*S*S,H), Linear(H,H)) + cls / reg heads
    fc_in = 64 * 2 * 2        # real feature channels * S * S (rows in (sy,sx,c) order)
    hid = 128
    ncls = 5
    p["fc1_w"] = nrm(ks[7], (fc_in, hid))
    p["fc1_b"] = jnp.zeros((hid,), jnp.float32)
    p["fc2_w"] = nrm(ks[8], (hid, hid))
    p["fc2_b"] = jnp.zeros((hid,), jnp.float32)
    p["cls_w"] = nrm(ks[9], (hid, ncls))
    p["cls_b"] = jnp.zeros((ncls,), jnp.float32)
    p["reg_w"] = nrm(ks[10], (hid, ncls * 4))
    p["reg_b"] = jnp.zeros((ncls * 4,), jnp.float32)
    return p


# --- pad / pack everything ONCE at init (bf16 weights, f32 biases, compact K) -
def _pad2d(w, rows, cols):
    out = jnp.zeros((rows, cols), jnp.bfloat16)
    return out.at[: w.shape[0], : w.shape[1]].set(w.astype(jnp.bfloat16))


def _pad_bias(b, cols):
    return jnp.zeros((1, cols), jnp.float32).at[0, : b.shape[0]].set(
        b.astype(jnp.float32))


def _pack_conv_w(w):
    # compact K: (kh, kw, cin, cout) -> (round_up(kh*kw*cin, 128), CPAD) bf16
    kh, kw, cin, cout = w.shape
    K = kh * kw * cin
    return _pad2d(w.reshape(K, cout), _round_up(K, 128), CPAD)


def prepare_params(p):
    """One-time compact-K packing / lane padding of all weights."""
    ncls = FASTRCNN_CONFIG["num_classes"]
    A = RPN_CONFIG["num_anchors"]
    hid = p["fc1_w"].shape[1]
    pp = {}
    for name in ("conv1", "layer1", "layer2", "layer3", "rpn_conv"):
        pp[name + "_w"] = _pack_conv_w(p[name + "_w"])
        pp[name + "_b"] = _pad_bias(p[name + "_b"], CPAD)
    # fused RPN 1x1 head: 64 real K rows -> pad to 128; cols = [cls(A) | reg(4A)]
    rw = jnp.zeros((128, CPAD), jnp.bfloat16)
    rw = rw.at[:64, :A].set(p["rpn_cls_w"].reshape(64, A).astype(jnp.bfloat16))
    rw = rw.at[:64, A:A + 4 * A].set(
        p["rpn_reg_w"].reshape(64, 4 * A).astype(jnp.bfloat16))
    pp["rpn_head_w"] = rw
    rb = jnp.zeros((1, CPAD), jnp.float32)
    rb = rb.at[0, :A].set(p["rpn_cls_b"])
    rb = rb.at[0, A:A + 4 * A].set(p["rpn_reg_b"])
    pp["rpn_head_b"] = rb
    # RoI head fc1: rows are (sy, sx, c) over the REAL 64 feature channels
    pp["fc1_w"] = _pad2d(p["fc1_w"], _round_up(p["fc1_w"].shape[0], 128), CPAD)
    pp["fc1_b"] = _pad_bias(p["fc1_b"], CPAD)
    pp["fc2_w"] = _pad2d(p["fc2_w"], CPAD, CPAD)
    pp["fc2_b"] = _pad_bias(p["fc2_b"], CPAD)
    # fused cls/reg head: [cls(5) | reg(20)] in one (128,128) weight
    hw = jnp.zeros((CPAD, CPAD), jnp.bfloat16)
    hw = hw.at[:hid, :ncls].set(p["cls_w"].astype(jnp.bfloat16))
    hw = hw.at[:hid, ncls:ncls + 4 * ncls].set(p["reg_w"].astype(jnp.bfloat16))
    pp["head_w"] = hw
    hb = jnp.zeros((1, CPAD), jnp.float32)
    hb = hb.at[0, :ncls].set(p["cls_b"])
    hb = hb.at[0, ncls:ncls + 4 * ncls].set(p["reg_b"])
    pp["head_b"] = hb
    return pp


# ----------------------------------------------------------------------------
# FasterRCNN forward (inference semantics: GT-dependent losses are zero)
# ----------------------------------------------------------------------------
def faster_rcnn_forward(pp, images_nchw):
    # layout: convert NCHW (PyTorch) -> NHWC for TPU-friendly conv lowering
    x = jnp.transpose(images_nchw, (0, 2, 3, 1)).astype(jnp.float32)
    N, img_h, img_w = x.shape[0], x.shape[1], x.shape[2]

    # ---- backbone (Pallas matmul kernels; bf16 features, compact-K contractions,
    #      output channels lane-padded to 128 for unmasked stores) ----
    f = conv2d(x, pp["conv1_w"], pp["conv1_b"], 7, 7, stride=2, pad=3,
               act="relu", cin=3)
    f = maxpool2d(f, k=3, stride=2, pad=1)
    f = conv2d(f, pp["layer1_w"], pp["layer1_b"], 3, 3, stride=1, pad=1,
               act="relu", cin=8)
    f = conv2d(f, pp["layer2_w"], pp["layer2_b"], 3, 3, stride=2, pad=1,
               act="relu", cin=16)
    features = conv2d(f, pp["layer3_w"], pp["layer3_b"], 3, 3, stride=2, pad=1,
                      act="relu", cin=32)            # (N, Hf, Wf, 128) [64 real]
    Hf, Wf = features.shape[1], features.shape[2]

    # ---- RPN ----
    rpn_h = conv2d(features, pp["rpn_conv_w"], pp["rpn_conv_b"], 3, 3,
                   stride=1, pad=1, act="relu", cin=64)
    rpn_out = conv1x1(rpn_h, pp["rpn_head_w"], pp["rpn_head_b"], cin=64,
                      out_dtype=jnp.float32)          # fused cls+reg, f32
    A = RPN_CONFIG["num_anchors"]
    rpn_cls = rpn_out[..., :A]                        # (N, Hf, Wf, A)
    rpn_reg = rpn_out[..., A:A + 4 * A]               # (N, Hf, Wf, 4A)

    anchors = make_anchors(Hf, Wf, RPN_CONFIG["downsample"],
                           RPN_CONFIG["anchor_scale"],
                           RPN_CONFIG["anchor_aspect_ratio"])      # (Hf*Wf*A, 4)
    obj = rpn_cls.reshape(N, Hf * Wf * A)
    deltas = rpn_reg.reshape(N, Hf * Wf * A, 4)
    all_boxes = decode_boxes(anchors[None], deltas, RPN_CONFIG["bbox_reg_weights"],
                             float(img_h), float(img_w))           # (N, HWA, 4)

    top_n = RPN_CONFIG["top_n_test"]
    _, top_idx = jax.lax.top_k(obj, top_n)                         # (N, top_n)
    proposals = jnp.take_along_axis(all_boxes, top_idx[..., None], axis=1)
    # TODO(synk): RPN NMS + GT anchor matching/sampling + cls/loc losses are
    # data-dependent (dynamic shapes); not expressible as a static Pallas kernel.
    rpn_cls_loss = jnp.float32(0.0)
    rpn_loc_loss = jnp.float32(0.0)

    # ---- FastRCNN / RoI head (single fused Pallas kernel) ----
    S = FASTRCNN_CONFIG["output_size"]
    C_real = FASTRCNN_CONFIG["out_channels"]
    pooled = roi_pool(features[..., :C_real], proposals, S,
                      FASTRCNN_CONFIG["downsample"])               # (N,P,S,S,64)
    P = proposals.shape[1]
    flat = pooled.reshape(N * P, S * S * C_real)                   # (NP, 256)

    head_out = roi_head_pallas(flat, pp["fc1_w"], pp["fc1_b"],
                               pp["fc2_w"], pp["fc2_b"],
                               pp["head_w"], pp["head_b"])         # (NP, 128)
    ncls = FASTRCNN_CONFIG["num_classes"]
    cls_logits = head_out[:, :ncls]                                # (NP, C)
    box_deltas = head_out[:, ncls:ncls + 4 * ncls]                 # (NP, 4C)

    probs = jax.nn.softmax(cls_logits, axis=-1)
    labels = jnp.argmax(probs, axis=-1)                            # (NP,)
    scores = jnp.max(probs, axis=-1)                               # (NP,)
    box_deltas = box_deltas.reshape(N * P, ncls, 4)
    sel_deltas = jnp.take_along_axis(
        box_deltas, labels[:, None, None].astype(jnp.int32), axis=1)[:, 0, :]
    detections = decode_boxes(proposals.reshape(N * P, 4), sel_deltas,
                              FASTRCNN_CONFIG["bbox_reg_weights"],
                              float(img_h), float(img_w))          # (NP, 4)
    # TODO(synk): RoI score-threshold + per-class NMS + GT sampling/losses omitted
    # (dynamic-shape ops with no clean Pallas equivalent).
    roi_cls_loss = jnp.float32(0.0)
    roi_loc_loss = jnp.float32(0.0)

    labels = labels.reshape(N, P)
    scores = scores.reshape(N, P)
    detections = detections.reshape(N, P, 4)
    return (rpn_cls_loss, rpn_loc_loss, roi_cls_loss, roi_loc_loss,
            labels, scores, detections)


if __name__ == "__main__":
    key = jax.random.PRNGKey(0)
    k_img, k_par = jax.random.split(key)
    # small shapes: batch=2, channels=3, spatial=64 (NCHW, matching PyTorch input)
    images = jax.random.normal(k_img, (2, 3, 64, 64), dtype=jnp.float32)
    params = init_params(k_par)
    prepped = prepare_params(params)   # weights padded/packed ONCE, outside the step

    fwd = jax.jit(faster_rcnn_forward)
    outs = fwd(prepped, images)
    outs = jax.block_until_ready(outs)

    rpn_cls_loss, rpn_loc_loss, roi_cls_loss, roi_loc_loss, labels, scores, dets = outs
    assert labels.shape == (2, 8)
    assert scores.shape == (2, 8)
    assert dets.shape == (2, 8, 4)
    assert bool(jnp.all(jnp.isfinite(dets)))
    assert bool(jnp.all(jnp.isfinite(scores)))
    print("KERNEL_OK")
</pallas_src>

<mosaic_0001>
module attributes {stable_mosaic.version = 11 : i64} {
  func.func @_mm_bias_act_single_kernel(%arg0: i32, %arg1: i32, %arg2: memref<1024x256xbf16, #tpu.memory_space<vmem>>, %arg3: memref<256x128xbf16, #tpu.memory_space<vmem>>, %arg4: memref<1x128xf32, #tpu.memory_space<vmem>>, %arg5: memref<1024x128xbf16, #tpu.memory_space<vmem>>) attributes {dimension_semantics = [#tpu.dimension_semantics<parallel>, #tpu.dimension_semantics<parallel>], iteration_bounds = array<i64: 2, 1>, scalar_prefetch = 0 : i64, scratch_operands = 0 : i64, tpu.core_type = #tpu.core_type<tc>, window_params = [{transform_indices = @transform_0, window_bounds = array<i64: 1024, 256>}, {transform_indices = @transform_1, window_bounds = array<i64: 256, 128>}, {transform_indices = @transform_2, window_bounds = array<i64: 1, 128>}, {transform_indices = @transform_3, window_bounds = array<i64: 1024, 128>}]} {
    %c0 = arith.constant 0 : index
    %c0_0 = arith.constant 0 : index
    %0 = vector.load %arg2[%c0, %c0_0] : memref<1024x256xbf16, #tpu.memory_space<vmem>>, vector<1024x256xbf16>
    %c0_1 = arith.constant 0 : index
    %c0_2 = arith.constant 0 : index
    %1 = vector.load %arg3[%c0_1, %c0_2] : memref<256x128xbf16, #tpu.memory_space<vmem>>, vector<256x128xbf16>
    %cst = arith.constant dense<0.000000e+00> : vector<1024x128xf32>
    %2 = tpu.matmul %0, %1, %cst {dimension_numbers = #tpu.dot_dimension_numbers<[1], [0], [0], [1], [0, 0, 1, 1], [], []>} : vector<1024x256xbf16>, vector<256x128xbf16>, vector<1024x128xf32> -> vector<1024x128xf32>
    %c0_3 = arith.constant 0 : index
    %c0_4 = arith.constant 0 : index
    %3 = vector.load %arg4[%c0_3, %c0_4] : memref<1x128xf32, #tpu.memory_space<vmem>>, vector<1x128xf32>
    %4 = vector.broadcast %3 : vector<1x128xf32> to vector<1024x128xf32>
    %5 = arith.addf %2, %4 : vector<1024x128xf32>
    %cst_5 = arith.constant 0.000000e+00 : f32
    %6 = vector.broadcast %cst_5 : f32 to vector<1024x128xf32>
    %7 = arith.maximumf %5, %6 : vector<1024x128xf32>
    %8 = arith.truncf %7 : vector<1024x128xf32> to vector<1024x128xbf16>
    %c0_6 = arith.constant 0 : index
    %c0_7 = arith.constant 0 : index
    %9 = vector.load %arg5[%c0_6, %c0_7] : memref<1024x128xbf16, #tpu.memory_space<vmem>>, vector<1024x128xbf16>
    tpu.vector_store %arg5[%c0_6, %c0_7], %8 {strides = array<i32>} : memref<1024x128xbf16, #tpu.memory_space<vmem>>, vector<1024x128xbf16>,
    return
  }
  func.func @transform_0(%arg0: i32, %arg1: i32) -> (i32, i32) {
    %c0_i32 = arith.constant 0 : i32
    %c0_i32_0 = arith.constant 0 : i32
    return %arg0, %c0_i32 : i32, i32
  }
  func.func @transform_1(%arg0: i32, %arg1: i32) -> (i32, i32) {
    %c0_i32 = arith.constant 0 : i32
    %c0_i32_0 = arith.constant 0 : i32
    return %c0_i32, %arg1 : i32, i32
  }
  func.func @transform_2(%arg0: i32, %arg1: i32) -> (i32, i32) {
    %c0_i32 = arith.constant 0 : i32
    %c0_i32_0 = arith.constant 0 : i32
    return %c0_i32, %arg1 : i32, i32
  }
  func.func @transform_3(%arg0: i32, %arg1: i32) -> (i32, i32) {
    %c0_i32 = arith.constant 0 : i32
    return %arg0, %arg1 : i32, i32
  }
}

module attributes {stable_mosaic.version = 11 : i64} {
  func.func @_mm_bias_act_single_kernel(%arg0: i32, %arg1: i32, %arg2: memref<256x128xbf16, #tpu.memory_space<vmem>>, %arg3: memref<128x128xbf16, #tpu.memory_space<vmem>>, %arg4: memref<1x128xf32, #tpu.memory_space<vmem>>, %arg5: memref<256x128xbf16, #tpu.memory_space<vmem>>) attributes {dimension_semantics = [#tpu.dimension_semantics<parallel>, #tpu.dimension_semantics<parallel>], iteration_bounds = array<i64: 2, 1>, scalar_prefetch = 0 : i64, scratch_operands = 0 : i64, tpu.core_type = #tpu.core_type<tc>, window_params = [{transform_indices = @transform_0, window_bounds = array<i64: 256, 128>}, {transform_indices = @transform_1, window_bounds = array<i64: 128, 128>}, {transform_indices = @transform_2, window_bounds = array<i64: 1, 128>}, {transform_indices = @transform_3, window_bounds = array<i64: 256, 128>}]} {
    %c0 = arith.constant 0 : index
    %c0_0 = arith.constant 0 : index
    %0 = vector.load %arg2[%c0, %c0_0] : memref<256x128xbf16, #tpu.memory_space<vmem>>, vector<256x128xbf16>
    %c0_1 = arith.constant 0 : index
    %c0_2 = arith.constant 0 : index
    %1 = vector.load %arg3[%c0_1, %c0_2] : memref<128x128xbf16, #tpu.memory_space<vmem>>, vector<128x128xbf16>
    %cst = arith.constant dense<0.000000e+00> : vector<256x128xf32>
    %2 = tpu.matmul %0, %1, %cst {dimension_numbers = #tpu.dot_dimension_numbers<[1], [0], [0], [1], [0, 0, 1, 1], [], []>} : vector<256x128xbf16>, vector<128x128xbf16>, vector<256x128xf32> -> vector<256x128xf32>
    %c0_3 = arith.constant 0 : index
    %c0_4 = arith.constant 0 : index
    %3 = vector.load %arg4[%c0_3, %c0_4] : memref<1x128xf32, #tpu.memory_space<vmem>>, vector<1x128xf32>
    %4 = vector.broadcast %3 : vector<1x128xf32> to vector<256x128xf32>
    %5 = arith.addf %2, %4 : vector<256x128xf32>
    %cst_5 = arith.constant 0.000000e+00 : f32
    %6 = vector.broadcast %cst_5 : f32 to vector<256x128xf32>
    %7 = arith.maximumf %5, %6 : vector<256x128xf32>
    %8 = arith.truncf %7 : vector<256x128xf32> to vector<256x128xbf16>
    %c0_6 = arith.constant 0 : index
    %c0_7 = arith.constant 0 : index
    %9 = vector.load %arg5[%c0_6, %c0_7] : memref<256x128xbf16, #tpu.memory_space<vmem>>, vector<256x128xbf16>
    tpu.vector_store %arg5[%c0_6, %c0_7], %8 {strides = array<i32>} : memref<256x128xbf16, #tpu.memory_space<vmem>>, vector<256x128xbf16>,
    return
  }
  func.func @transform_0(%arg0: i32, %arg1: i32) -> (i32, i32) {
    %c0_i32 = arith.constant 0 : i32
    %c0_i32_0 = arith.constant 0 : i32
    return %arg0, %c0_i32 : i32, i32
  }
  func.func @transform_1(%arg0: i32, %arg1: i32) -> (i32, i32) {
    %c0_i32 = arith.constant 0 : i32
    %c0_i32_0 = arith.constant 0 : i32
    return %c0_i32, %arg1 : i32, i32
  }
  func.func @transform_2(%arg0: i32, %arg1: i32) -> (i32, i32) {
    %c0_i32 = arith.constant 0 : i32
    %c0_i32_0 = arith.constant 0 : i32
    return %c0_i32, %arg1 : i32, i32
  }
  func.func @transform_3(%arg0: i32, %arg1: i32) -> (i32, i32) {
    %c0_i32 = arith.constant 0 : i32
    return %arg0, %arg1 : i32, i32
  }
}

module attributes {stable_mosaic.version = 11 : i64} {
  func.func @_mm_bias_act_single_kernel(%arg0: i32, %arg1: i32, %arg2: memref<64x256xbf16, #tpu.memory_space<vmem>>, %arg3: memref<256x128xbf16, #tpu.memory_space<vmem>>, %arg4: memref<1x128xf32, #tpu.memory_space<vmem>>, %arg5: memref<64x128xbf16, #tpu.memory_space<vmem>>) attributes {dimension_semantics = [#tpu.dimension_semantics<parallel>, #tpu.dimension_semantics<parallel>], iteration_bounds = array<i64: 2, 1>, scalar_prefetch = 0 : i64, scratch_operands = 0 : i64, tpu.core_type = #tpu.core_type<tc>, window_params = [{transform_indices = @transform_0, window_bounds = array<i64: 64, 256>}, {transform_indices = @transform_1, window_bounds = array<i64: 256, 128>}, {transform_indices = @transform_2, window_bounds = array<i64: 1, 128>}, {transform_indices = @transform_3, window_bounds = array<i64: 64, 128>}]} {
    %c0 = arith.constant 0 : index
    %c0_0 = arith.constant 0 : index
    %0 = vector.load %arg2[%c0, %c0_0] : memref<64x256xbf16, #tpu.memory_space<vmem>>, vector<64x256xbf16>
    %c0_1 = arith.constant 0 : index
    %c0_2 = arith.constant 0 : index
    %1 = vector.load %arg3[%c0_1, %c0_2] : memref<256x128xbf16, #tpu.memory_space<vmem>>, vector<256x128xbf16>
    %cst = arith.constant dense<0.000000e+00> : vector<64x128xf32>
    %2 = tpu.matmul %0, %1, %cst {dimension_numbers = #tpu.dot_dimension_numbers<[1], [0], [0], [1], [0, 0, 1, 1], [], []>} : vector<64x256xbf16>, vector<256x128xbf16>, vector<64x128xf32> -> vector<64x128xf32>
    %c0_3 = arith.constant 0 : index
    %c0_4 = arith.constant 0 : index
    %3 = vector.load %arg4[%c0_3, %c0_4] : memref<1x128xf32, #tpu.memory_space<vmem>>, vector<1x128xf32>
    %4 = vector.broadcast %3 : vector<1x128xf32> to vector<64x128xf32>
    %5 = arith.addf %2, %4 : vector<64x128xf32>
    %cst_5 = arith.constant 0.000000e+00 : f32
    %6 = vector.broadcast %cst_5 : f32 to vector<64x128xf32>
    %7 = arith.maximumf %5, %6 : vector<64x128xf32>
    %8 = arith.truncf %7 : vector<64x128xf32> to vector<64x128xbf16>
    %c0_6 = arith.constant 0 : index
    %c0_7 = arith.constant 0 : index
    %9 = vector.load %arg5[%c0_6, %c0_7] : memref<64x128xbf16, #tpu.memory_space<vmem>>, vector<64x128xbf16>
    tpu.vector_store %arg5[%c0_6, %c0_7], %8 {strides = array<i32>} : memref<64x128xbf16, #tpu.memory_space<vmem>>, vector<64x128xbf16>,
    return
  }
  func.func @transform_0(%arg0: i32, %arg1: i32) -> (i32, i32) {
    %c0_i32 = arith.constant 0 : i32
    %c0_i32_0 = arith.constant 0 : i32
    return %arg0, %c0_i32 : i32, i32
  }
  func.func @transform_1(%arg0: i32, %arg1: i32) -> (i32, i32) {
    %c0_i32 = arith.constant 0 : i32
    %c0_i32_0 = arith.constant 0 : i32
    return %c0_i32, %arg1 : i32, i32
  }
  func.func @transform_2(%arg0: i32, %arg1: i32) -> (i32, i32) {
    %c0_i32 = arith.constant 0 : i32
    %c0_i32_0 = arith.constant 0 : i32
    return %c0_i32, %arg1 : i32, i32
  }
  func.func @transform_3(%arg0: i32, %arg1: i32) -> (i32, i32) {
    %c0_i32 = arith.constant 0 : i32
    return %arg0, %arg1 : i32, i32
  }
}

module attributes {stable_mosaic.version = 11 : i64} {
  func.func @_mm_bias_act_single_kernel(%arg0: i32, %arg1: i32, %arg2: memref<16x384xbf16, #tpu.memory_space<vmem>>, %arg3: memref<384x128xbf16, #tpu.memory_space<vmem>>, %arg4: memref<1x128xf32, #tpu.memory_space<vmem>>, %arg5: memref<16x128xbf16, #tpu.memory_space<vmem>>) attributes {dimension_semantics = [#tpu.dimension_semantics<parallel>, #tpu.dimension_semantics<parallel>], iteration_bounds = array<i64: 2, 1>, scalar_prefetch = 0 : i64, scratch_operands = 0 : i64, tpu.core_type = #tpu.core_type<tc>, window_params = [{transform_indices = @transform_0, window_bounds = array<i64: 16, 384>}, {transform_indices = @transform_1, window_bounds = array<i64: 384, 128>}, {transform_indices = @transform_2, window_bounds = array<i64: 1, 128>}, {transform_indices = @transform_3, window_bounds = array<i64: 16, 128>}]} {
    %c0 = arith.constant 0 : index
    %c0_0 = arith.constant 0 : index
    %0 = vector.load %arg2[%c0, %c0_0] : memref<16x384xbf16, #tpu.memory_space<vmem>>, vector<16x384xbf16>
    %c0_1 = arith.constant 0 : index
    %c0_2 = arith.constant 0 : index
    %1 = vector.load %arg3[%c0_1, %c0_2] : memref<384x128xbf16, #tpu.memory_space<vmem>>, vector<384x128xbf16>
    %cst = arith.constant dense<0.000000e+00> : vector<16x128xf32>
    %2 = tpu.matmul %0, %1, %cst {dimension_numbers = #tpu.dot_dimension_numbers<[1], [0], [0], [1], [0, 0, 1, 1], [], []>} : vector<16x384xbf16>, vector<384x128xbf16>, vector<16x128xf32> -> vector<16x128xf32>
    %c0_3 = arith.constant 0 : index
    %c0_4 = arith.constant 0 : index
    %3 = vector.load %arg4[%c0_3, %c0_4] : memref<1x128xf32, #tpu.memory_space<vmem>>, vector<1x128xf32>
    %4 = vector.broadcast %3 : vector<1x128xf32> to vector<16x128xf32>
    %5 = arith.addf %2, %4 : vector<16x128xf32>
    %cst_5 = arith.constant 0.000000e+00 : f32
    %6 = vector.broadcast %cst_5 : f32 to vector<16x128xf32>
    %7 = arith.maximumf %5, %6 : vector<16x128xf32>
    %8 = arith.truncf %7 : vector<16x128xf32> to vector<16x128xbf16>
    %c0_6 = arith.constant 0 : index
    %c0_7 = arith.constant 0 : index
    %9 = vector.load %arg5[%c0_6, %c0_7] : memref<16x128xbf16, #tpu.memory_space<vmem>>, vector<16x128xbf16>
    tpu.vector_store %arg5[%c0_6, %c0_7], %8 {strides = array<i32>} : memref<16x128xbf16, #tpu.memory_space<vmem>>, vector<16x128xbf16>,
    return
  }
  func.func @transform_0(%arg0: i32, %arg1: i32) -> (i32, i32) {
    %c0_i32 = arith.constant 0 : i32
    %c0_i32_0 = arith.constant 0 : i32
    return %arg0, %c0_i32 : i32, i32
  }
  func.func @transform_1(%arg0: i32, %arg1: i32) -> (i32, i32) {
    %c0_i32 = arith.constant 0 : i32
    %c0_i32_0 = arith.constant 0 : i32
    return %c0_i32, %arg1 : i32, i32
  }
  func.func @transform_2(%arg0: i32, %arg1: i32) -> (i32, i32) {
    %c0_i32 = arith.constant 0 : i32
    %c0_i32_0 = arith.constant 0 : i32
    return %c0_i32, %arg1 : i32, i32
  }
  func.func @transform_3(%arg0: i32, %arg1: i32) -> (i32, i32) {
    %c0_i32 = arith.constant 0 : i32
    return %arg0, %arg1 : i32, i32
  }
}

module attributes {stable_mosaic.version = 11 : i64} {
  func.func @_mm_bias_act_single_kernel(%arg0: i32, %arg1: i32, %arg2: memref<16x640xbf16, #tpu.memory_space<vmem>>, %arg3: memref<640x128xbf16, #tpu.memory_space<vmem>>, %arg4: memref<1x128xf32, #tpu.memory_space<vmem>>, %arg5: memref<16x128xbf16, #tpu.memory_space<vmem>>) attributes {dimension_semantics = [#tpu.dimension_semantics<parallel>, #tpu.dimension_semantics<parallel>], iteration_bounds = array<i64: 2, 1>, scalar_prefetch = 0 : i64, scratch_operands = 0 : i64, tpu.core_type = #tpu.core_type<tc>, window_params = [{transform_indices = @transform_0, window_bounds = array<i64: 16, 640>}, {transform_indices = @transform_1, window_bounds = array<i64: 640, 128>}, {transform_indices = @transform_2, window_bounds = array<i64: 1, 128>}, {transform_indices = @transform_3, window_bounds = array<i64: 16, 128>}]} {
    %c0 = arith.constant 0 : index
    %c0_0 = arith.constant 0 : index
    %0 = vector.load %arg2[%c0, %c0_0] : memref<16x640xbf16, #tpu.memory_space<vmem>>, vector<16x640xbf16>
    %c0_1 = arith.constant 0 : index
    %c0_2 = arith.constant 0 : index
    %1 = vector.load %arg3[%c0_1, %c0_2] : memref<640x128xbf16, #tpu.memory_space<vmem>>, vector<640x128xbf16>
    %cst = arith.constant dense<0.000000e+00> : vector<16x128xf32>
    %2 = tpu.matmul %0, %1, %cst {dimension_numbers = #tpu.dot_dimension_numbers<[1], [0], [0], [1], [0, 0, 1, 1], [], []>} : vector<16x640xbf16>, vector<640x128xbf16>, vector<16x128xf32> -> vector<16x128xf32>
    %c0_3 = arith.constant 0 : index
    %c0_4 = arith.constant 0 : index
    %3 = vector.load %arg4[%c0_3, %c0_4] : memref<1x128xf32, #tpu.memory_space<vmem>>, vector<1x128xf32>
    %4 = vector.broadcast %3 : vector<1x128xf32> to vector<16x128xf32>
    %5 = arith.addf %2, %4 : vector<16x128xf32>
    %cst_5 = arith.constant 0.000000e+00 : f32
    %6 = vector.broadcast %cst_5 : f32 to vector<16x128xf32>
    %7 = arith.maximumf %5, %6 : vector<16x128xf32>
    %8 = arith.truncf %7 : vector<16x128xf32> to vector<16x128xbf16>
    %c0_6 = arith.constant 0 : index
    %c0_7 = arith.constant 0 : index
    %9 = vector.load %arg5[%c0_6, %c0_7] : memref<16x128xbf16, #tpu.memory_space<vmem>>, vector<16x128xbf16>
    tpu.vector_store %arg5[%c0_6, %c0_7], %8 {strides = array<i32>} : memref<16x128xbf16, #tpu.memory_space<vmem>>, vector<16x128xbf16>,
    return
  }
  func.func @transform_0(%arg0: i32, %arg1: i32) -> (i32, i32) {
    %c0_i32 = arith.constant 0 : i32
    %c0_i32_0 = arith.constant 0 : i32
    return %arg0, %c0_i32 : i32, i32
  }
  func.func @transform_1(%arg0: i32, %arg1: i32) -> (i32, i32) {
    %c0_i32 = arith.constant 0 : i32
    %c0_i32_0 = arith.constant 0 : i32
    return %c0_i32, %arg1 : i32, i32
  }
  func.func @transform_2(%arg0: i32, %arg1: i32) -> (i32, i32) {
    %c0_i32 = arith.constant 0 : i32
    %c0_i32_0 = arith.constant 0 : i32
    return %c0_i32, %arg1 : i32, i32
  }
  func.func @transform_3(%arg0: i32, %arg1: i32) -> (i32, i32) {
    %c0_i32 = arith.constant 0 : i32
    return %arg0, %arg1 : i32, i32
  }
}

module attributes {stable_mosaic.version = 11 : i64} {
  func.func @_mm_bias_act_single_kernel(%arg0: i32, %arg1: i32, %arg2: memref<16x128xbf16, #tpu.memory_space<vmem>>, %arg3: memref<128x128xbf16, #tpu.memory_space<vmem>>, %arg4: memref<1x128xf32, #tpu.memory_space<vmem>>, %arg5: memref<16x128xf32, #tpu.memory_space<vmem>>) attributes {dimension_semantics = [#tpu.dimension_semantics<parallel>, #tpu.dimension_semantics<parallel>], iteration_bounds = array<i64: 2, 1>, scalar_prefetch = 0 : i64, scratch_operands = 0 : i64, tpu.core_type = #tpu.core_type<tc>, window_params = [{transform_indices = @transform_0, window_bounds = array<i64: 16, 128>}, {transform_indices = @transform_1, window_bounds = array<i64: 128, 128>}, {transform_indices = @transform_2, window_bounds = array<i64: 1, 128>}, {transform_indices = @transform_3, window_bounds = array<i64: 16, 128>}]} {
    %c0 = arith.constant 0 : index
    %c0_0 = arith.constant 0 : index
    %0 = vector.load %arg2[%c0, %c0_0] : memref<16x128xbf16, #tpu.memory_space<vmem>>, vector<16x128xbf16>
    %c0_1 = arith.constant 0 : index
    %c0_2 = arith.constant 0 : index
    %1 = vector.load %arg3[%c0_1, %c0_2] : memref<128x128xbf16, #tpu.memory_space<vmem>>, vector<128x128xbf16>
    %cst = arith.constant dense<0.000000e+00> : vector<16x128xf32>
    %2 = tpu.matmul %0, %1, %cst {dimension_numbers = #tpu.dot_dimension_numbers<[1], [0], [0], [1], [0, 0, 1, 1], [], []>} : vector<16x128xbf16>, vector<128x128xbf16>, vector<16x128xf32> -> vector<16x128xf32>
    %c0_3 = arith.constant 0 : index
    %c0_4 = arith.constant 0 : index
    %3 = vector.load %arg4[%c0_3, %c0_4] : memref<1x128xf32, #tpu.memory_space<vmem>>, vector<1x128xf32>
    %4 = vector.broadcast %3 : vector<1x128xf32> to vector<16x128xf32>
    %5 = arith.addf %2, %4 : vector<16x128xf32>
    %c0_5 = arith.constant 0 : index
    %c0_6 = arith.constant 0 : index
    %6 = vector.load %arg5[%c0_5, %c0_6] : memref<16x128xf32, #tpu.memory_space<vmem>>, vector<16x128xf32>
    tpu.vector_store %arg5[%c0_5, %c0_6], %5 {strides = array<i32>} : memref<16x128xf32, #tpu.memory_space<vmem>>, vector<16x128xf32>,
    return
  }
  func.func @transform_0(%arg0: i32, %arg1: i32) -> (i32, i32) {
    %c0_i32 = arith.constant 0 : i32
    %c0_i32_0 = arith.constant 0 : i32
    return %arg0, %c0_i32 : i32, i32
  }
  func.func @transform_1(%arg0: i32, %arg1: i32) -> (i32, i32) {
    %c0_i32 = arith.constant 0 : i32
    %c0_i32_0 = arith.constant 0 : i32
    return %c0_i32, %arg1 : i32, i32
  }
  func.func @transform_2(%arg0: i32, %arg1: i32) -> (i32, i32) {
    %c0_i32 = arith.constant 0 : i32
    %c0_i32_0 = arith.constant 0 : i32
    return %c0_i32, %arg1 : i32, i32
  }
  func.func @transform_3(%arg0: i32, %arg1: i32) -> (i32, i32) {
    %c0_i32 = arith.constant 0 : i32
    return %arg0, %arg1 : i32, i32
  }
}

module attributes {stable_mosaic.version = 11 : i64} {
  func.func @_roi_head_kernel(%arg0: i32, %arg1: memref<16x256xbf16, #tpu.memory_space<vmem>>, %arg2: memref<256x128xbf16, #tpu.memory_space<vmem>>, %arg3: memref<1x128xf32, #tpu.memory_space<vmem>>, %arg4: memref<128x128xbf16, #tpu.memory_space<vmem>>, %arg5: memref<1x128xf32, #tpu.memory_space<vmem>>, %arg6: memref<128x128xbf16, #tpu.memory_space<vmem>>, %arg7: memref<1x128xf32, #tpu.memory_space<vmem>>, %arg8: memref<16x128xf32, #tpu.memory_space<vmem>>) attributes {dimension_semantics = [#tpu.dimension_semantics<arbitrary>], iteration_bounds = array<i64: 1>, scalar_prefetch = 0 : i64, scratch_operands = 0 : i64, tpu.core_type = #tpu.core_type<tc>, window_params = [{pipeline_mode = #tpu.pipeline_mode<synchronous>, transform_indices = @transform_0, window_bounds = array<i64: 16, 256>}, {pipeline_mode = #tpu.pipeline_mode<synchronous>, transform_indices = @transform_1, window_bounds = array<i64: 256, 128>}, {pipeline_mode = #tpu.pipeline_mode<synchronous>, transform_indices = @transform_2, window_bounds = array<i64: 1, 128>}, {pipeline_mode = #tpu.pipeline_mode<synchronous>, transform_indices = @transform_3, window_bounds = array<i64: 128, 128>}, {pipeline_mode = #tpu.pipeline_mode<synchronous>, transform_indices = @transform_4, window_bounds = array<i64: 1, 128>}, {pipeline_mode = #tpu.pipeline_mode<synchronous>, transform_indices = @transform_5, window_bounds = array<i64: 128, 128>}, {pipeline_mode = #tpu.pipeline_mode<synchronous>, transform_indices = @transform_6, window_bounds = array<i64: 1, 128>}, {pipeline_mode = #tpu.pipeline_mode<synchronous>, transform_indices = @transform_7, window_bounds = array<i64: 16, 128>}]} {
    %c0 = arith.constant 0 : index
    %c0_0 = arith.constant 0 : index
    %0 = vector.load %arg1[%c0, %c0_0] : memref<16x256xbf16, #tpu.memory_space<vmem>>, vector<16x256xbf16>
    %c0_1 = arith.constant 0 : index
    %c0_2 = arith.constant 0 : index
    %1 = vector.load %arg2[%c0_1, %c0_2] : memref<256x128xbf16, #tpu.memory_space<vmem>>, vector<256x128xbf16>
    %cst = arith.constant dense<0.000000e+00> : vector<16x128xf32>
    %2 = tpu.matmul %0, %1, %cst {dimension_numbers = #tpu.dot_dimension_numbers<[1], [0], [0], [1], [0, 0, 1, 1], [], []>} : vector<16x256xbf16>, vector<256x128xbf16>, vector<16x128xf32> -> vector<16x128xf32>
    %c0_3 = arith.constant 0 : index
    %c0_4 = arith.constant 0 : index
    %3 = vector.load %arg3[%c0_3, %c0_4] : memref<1x128xf32, #tpu.memory_space<vmem>>, vector<1x128xf32>
    %4 = vector.broadcast %3 : vector<1x128xf32> to vector<16x128xf32>
    %5 = arith.addf %2, %4 : vector<16x128xf32>
    %cst_5 = arith.constant 0.000000e+00 : f32
    %6 = vector.broadcast %cst_5 : f32 to vector<16x128xf32>
    %7 = arith.maximumf %5, %6 : vector<16x128xf32>
    %8 = arith.truncf %7 : vector<16x128xf32> to vector<16x128xbf16>
    %c0_6 = arith.constant 0 : index
    %c0_7 = arith.constant 0 : index
    %9 = vector.load %arg4[%c0_6, %c0_7] : memref<128x128xbf16, #tpu.memory_space<vmem>>, vector<128x128xbf16>
    %cst_8 = arith.constant dense<0.000000e+00> : vector<16x128xf32>
    %10 = tpu.matmul %8, %9, %cst_8 {dimension_numbers = #tpu.dot_dimension_numbers<[1], [0], [0], [1], [0, 0, 1, 1], [], []>} : vector<16x128xbf16>, vector<128x128xbf16>, vector<16x128xf32> -> vector<16x128xf32>
    %c0_9 = arith.constant 0 : index
    %c0_10 = arith.constant 0 : index
    %11 = vector.load %arg5[%c0_9, %c0_10] : memref<1x128xf32, #tpu.memory_space<vmem>>, vector<1x128xf32>
    %12 = vector.broadcast %11 : vector<1x128xf32> to vector<16x128xf32>
    %13 = arith.addf %10, %12 : vector<16x128xf32>
    %cst_11 = arith.constant 0.000000e+00 : f32
    %14 = vector.broadcast %cst_11 : f32 to vector<16x128xf32>
    %15 = arith.maximumf %13, %14 : vector<16x128xf32>
    %16 = arith.truncf %15 : vector<16x128xf32> to vector<16x128xbf16>
    %c0_12 = arith.constant 0 : index
    %c0_13 = arith.constant 0 : index
    %17 = vector.load %arg6[%c0_12, %c0_13] : memref<128x128xbf16, #tpu.memory_space<vmem>>, vector<128x128xbf16>
    %cst_14 = arith.constant dense<0.000000e+00> : vector<16x128xf32>
    %18 = tpu.matmul %16, %17, %cst_14 {dimension_numbers = #tpu.dot_dimension_numbers<[1], [0], [0], [1], [0, 0, 1, 1], [], []>} : vector<16x128xbf16>, vector<128x128xbf16>, vector<16x128xf32> -> vector<16x128xf32>
    %c0_15 = arith.constant 0 : index
    %c0_16 = arith.constant 0 : index
    %19 = vector.load %arg7[%c0_15, %c0_16] : memref<1x128xf32, #tpu.memory_space<vmem>>, vector<1x128xf32>
    %20 = vector.broadcast %19 : vector<1x128xf32> to vector<16x128xf32>
    %21 = arith.addf %18, %20 : vector<16x128xf32>
    %c0_17 = arith.constant 0 : index
    %c0_18 = arith.constant 0 : index
    %22 = vector.load %arg8[%c0_17, %c0_18] : memref<16x128xf32, #tpu.memory_space<vmem>>, vector<16x128xf32>
    tpu.vector_store %arg8[%c0_17, %c0_18], %21 {strides = array<i32>} : memref<16x128xf32, #tpu.memory_space<vmem>>, vector<16x128xf32>,
    return
  }
  func.func @transform_0(%arg0: i32) -> (i32, i32) {
    %c0_i32 = arith.constant 0 : i32
    %c0_i32_0 = arith.constant 0 : i32
    %c0_i32_1 = arith.constant 0 : i32
    return %c0_i32, %c0_i32_0 : i32, i32
  }
  func.func @transform_1(%arg0: i32) -> (i32, i32) {
    %c0_i32 = arith.constant 0 : i32
    %c0_i32_0 = arith.constant 0 : i32
    %c0_i32_1 = arith.constant 0 : i32
    return %c0_i32, %c0_i32_0 : i32, i32
  }
  func.func @transform_2(%arg0: i32) -> (i32, i32) {
    %c0_i32 = arith.constant 0 : i32
    %c0_i32_0 = arith.constant 0 : i32
    %c0_i32_1 = arith.constant 0 : i32
    return %c0_i32, %c0_i32_0 : i32, i32
  }
  func.func @transform_3(%arg0: i32) -> (i32, i32) {
    %c0_i32 = arith.constant 0 : i32
    %c0_i32_0 = arith.constant 0 : i32
    %c0_i32_1 = arith.constant 0 : i32
    return %c0_i32, %c0_i32_0 : i32, i32
  }
  func.func @transform_4(%arg0: i32) -> (i32, i32) {
    %c0_i32 = arith.constant 0 : i32
    %c0_i32_0 = arith.constant 0 : i32
    %c0_i32_1 = arith.constant 0 : i32
    return %c0_i32, %c0_i32_0 : i32, i32
  }
  func.func @transform_5(%arg0: i32) -> (i32, i32) {
    %c0_i32 = arith.constant 0 : i32
    %c0_i32_0 = arith.constant 0 : i32
    %c0_i32_1 = arith.constant 0 : i32
    return %c0_i32, %c0_i32_0 : i32, i32
  }
  func.func @transform_6(%arg0: i32) -> (i32, i32) {
    %c0_i32 = arith.constant 0 : i32
    %c0_i32_0 = arith.constant 0 : i32
    %c0_i32_1 = arith.constant 0 : i32
    return %c0_i32, %c0_i32_0 : i32, i32
  }
  func.func @transform_7(%arg0: i32) -> (i32, i32) {
    %c0_i32 = arith.constant 0 : i32
    %c0_i32_0 = arith.constant 0 : i32
    %c0_i32_1 = arith.constant 0 : i32
    return %c0_i32, %c0_i32_0 : i32, i32
  }
}

</mosaic_0001>

<llo_original>
// kernel: faster_rcnn_forward.7
$region0: #{faster_rcnn_forward.7}
  #allocation0 [shape = 'u32[]', space=smem, size = 0x4, offset = 0x4, fixed_abs, tag = 'smem constant byte address 0x4 - core index']
  #allocation1 [shape = 'u32[144,128]{1,0:T(1,128)}', space=vmem, size = 0x12000, scoped, tag = 'internal scratch']
  %s0 = inlined_call_operand.vmem [shape: bf16[2048,256], index: 0, kind: input, shape index: {}]
  %s1 = inlined_call_operand.vmem [shape: bf16[256,128], index: 1, kind: input, shape index: {}]
  %s2 = inlined_call_operand.vmem [shape: f32[1,128], index: 2, kind: input, shape index: {}]
  %s3 = inlined_call_operand.vmem [shape: bf16[2048,128], index: 3, kind: output, shape index: {}]
  %s4 = sld [smem:[#allocation0]]
  $region45: #{faster_rcnn_forward.7} parent=0
    _
  %s6 = ssub.s32 1, %s4
  %s7 = scalar_select 0, %s6, %s4
  loop: start=0, step=1, limit=4
  $region2: #{faster_rcnn_forward.7} parent=0 // loop_pre_header
    _
  $region3: #{faster_rcnn_forward.7} parent=0 // loop_header
    %s9 = sphi 0, %s13
    %p10 = scmp.ge.s32.totalorder %s9, 4
    %s16 = sphi 0, %s28
    %s17 = sphi 0, %s24
    %s18 = sphi 0, %s16
    %s19 = sphi 0, %s17
    %s20 = sphi 0, %s18
    %s21 = sphi 0, %s19
    %s31 = sphi 0, %s33
    %s34 = sphi 0, %s31
    %s35 = sphi 0, %s34
    %s51 = sphi 0, %s35
    %s57 = sphi 0, %s59
    %s60 = sphi 0, %s57
    %s61 = sphi 0, %s60
    %s77 = sphi 0, %s61
    %s83 = sphi 0, %s85
    %s86 = sphi 0, %s83
    %s87 = sphi 0, %s86
    %s103 = sphi 0, %s87
    %s111 = sphi 0, %s113
    %s114 = sphi 0, %s111
    %s115 = sphi 0, %s114
    %s131 = sphi 0, %s115
  $region4: #{faster_rcnn_forward.7} parent=0 // loop_header_branch
    %12 = sbr.rel (%p10) target = $region8
  $region5: #{faster_rcnn_forward.7} parent=0 // loop_body
    %s14 = ssub.s32 %s9, 1
    %s15 = ssub.s32 %s9, 2
    %s22 = sadd.s32 1, %s17
    %p23 = scmp.ge.s32.totalorder %s22, 1
    %s24 = scalar_select %p23, 0, %s22
    %s25 = sadd.s32 1, %s16
    %s26 = scalar_select %p23, %s25, %s16
    %p27 = scmp.ge.s32.totalorder %s26, 2
    %s28 = scalar_select %p27, 0, %s26
    %s29 = ssub.s32 %s16, %s28
    %p30 = scmp.eq.s32.totalorder %s29, 0
    %s32 = sadd.s32 %s31, 1
    %s33 = scalar_select %p30, %s31, %s32
    %p36 = pneg %p30
    %p37 = scmp.eq.s32.totalorder %s9, 1
    %p38 = por %p36, %p37
    %p39 = scmp.ne.s32.totalorder %s31, %s34
    %p40 = scmp.eq.s32.totalorder %s9, 0
    %p41 = por %p39, %p40
    %p42 = scmp.ne.s32.totalorder %s31, %s34
    %p43 = scmp.eq.s32.totalorder %s14, 1
    %p44 = por %p42, %p43
    %p45 = scmp.ne.s32.totalorder %s34, %s35
    %p46 = scmp.eq.s32.totalorder %s14, 0
    %p47 = por %p45, %p46
    %p48 = scmp.ne.s32.totalorder %s34, %s35
    %p49 = scmp.eq.s32.totalorder %s15, 1
    %p50 = por %p48, %p49
    %p52 = scmp.ne.s32.totalorder %s35, %s51
    %p53 = scmp.eq.s32.totalorder %s15, 0
    %p54 = por %p52, %p53
    %s55 = ssub.s32 %s17, %s24
    %p56 = scmp.eq.s32.totalorder %s55, 0
    %s58 = sadd.s32 %s57, 1
    %s59 = scalar_select %p56, %s57, %s58
    %p62 = pneg %p56
    %p63 = scmp.eq.s32.totalorder %s9, 1
    %p64 = por %p62, %p63
    %p65 = scmp.ne.s32.totalorder %s57, %s60
    %p66 = scmp.eq.s32.totalorder %s9, 0
    %p67 = por %p65, %p66
    %p68 = scmp.ne.s32.totalorder %s57, %s60
    %p69 = scmp.eq.s32.totalorder %s14, 1
    %p70 = por %p68, %p69
    %p71 = scmp.ne.s32.totalorder %s60, %s61
    %p72 = scmp.eq.s32.totalorder %s14, 0
    %p73 = por %p71, %p72
    %p74 = scmp.ne.s32.totalorder %s60, %s61
    %p75 = scmp.eq.s32.totalorder %s15, 1
    %p76 = por %p74, %p75
    %p78 = scmp.ne.s32.totalorder %s61, %s77
    %p79 = scmp.eq.s32.totalorder %s15, 0
    %p80 = por %p78, %p79
    %s81 = ssub.s32 %s17, %s24
    %p82 = scmp.eq.s32.totalorder %s81, 0
    %s84 = sadd.s32 %s83, 1
    %s85 = scalar_select %p82, %s83, %s84
    %p88 = pneg %p82
    %p89 = scmp.eq.s32.totalorder %s9, 1
    %p90 = por %p88, %p89
    %p91 = scmp.ne.s32.totalorder %s83, %s86
    %p92 = scmp.eq.s32.totalorder %s9, 0
    %p93 = por %p91, %p92
    %p94 = scmp.ne.s32.totalorder %s83, %s86
    %p95 = scmp.eq.s32.totalorder %s14, 1
    %p96 = por %p94, %p95
    %p97 = scmp.ne.s32.totalorder %s86, %s87
    %p98 = scmp.eq.s32.totalorder %s14, 0
    %p99 = por %p97, %p98
    %p100 = scmp.ne.s32.totalorder %s86, %s87
    %p101 = scmp.eq.s32.totalorder %s15, 1
    %p102 = por %p100, %p101
    %p104 = scmp.ne.s32.totalorder %s87, %s103
    %p105 = scmp.eq.s32.totalorder %s15, 0
    %p106 = por %p104, %p105
    %s107 = ssub.s32 %s16, %s28
    %s108 = ssub.s32 %s17, %s24
    %s109 = sor.u32 %s107, %s108
    %p110 = scmp.eq.s32.totalorder %s109, 0
    %s112 = sadd.s32 %s111, 1
    %s113 = scalar_select %p110, %s111, %s112
    %p116 = pneg %p110
    %p117 = scmp.eq.s32.totalorder %s9, 1
    %p118 = por %p116, %p117
    %p119 = scmp.ne.s32.totalorder %s111, %s114
    %p120 = scmp.eq.s32.totalorder %s9, 0
    %p121 = por %p119, %p120
    %p122 = scmp.ne.s32.totalorder %s111, %s114
    %p123 = scmp.eq.s32.totalorder %s14, 1
    %p124 = por %p122, %p123
    %p125 = scmp.ne.s32.totalorder %s114, %s115
    %p126 = scmp.eq.s32.totalorder %s14, 0
    %p127 = por %p125, %p126
    %p128 = scmp.ne.s32.totalorder %s114, %s115
    %p129 = scmp.eq.s32.totalorder %s15, 1
    %p130 = por %p128, %p129
    %p132 = scmp.ne.s32.totalorder %s115, %s131
    %p133 = scmp.eq.s32.totalorder %s15, 0
    %p134 = por %p132, %p133
    %p135 = scmp.le.s32.totalorder 1, %s9
    %p136 = scmp.lt.s32.totalorder %s9, 3
    %p137 = pnand %p135, %p136
    %p138 = pneg %p137
    // Predicated region
    $region9: #{faster_rcnn_forward.7} parent=5 // pred_check
      _
    $region10: #{faster_rcnn_forward.7} parent=5 // pred_check_branch
      %140 = sbr.rel (%p137) target = $region12
    $region11: #{faster_rcnn_forward.7} parent=5 // pred_region
      %s141 = ssub.s32 %s9, 1
      // Predicated region
      $region13: #{faster_rcnn_forward.7} parent=11 // pred_check
        %p142 = pneg %p73
      $region14: #{faster_rcnn_forward.7} parent=11 // pred_check_branch
        %144 = sbr.rel (%p142) target = $region16
      $region15: #{faster_rcnn_forward.7} parent=11 // pred_region
        %p145 = scmp.lt.s32.totalorder %s19, 0
        %s146 = scalar_select %p145, %s19, 0
        %s147 = smul.addr %s146, 4
        %s148 = scalar_lea.vmem %s1, %s147
      $region16: #{faster_rcnn_forward.7} parent=11 // pred_fallthru
        _
      // Predicated region
      $region17: #{faster_rcnn_forward.7} parent=11 // pred_check
        %p149 = pneg %p99
      $region18: #{faster_rcnn_forward.7} parent=11 // pred_check_branch
        %151 = sbr.rel (%p149) target = $region20
      $region19: #{faster_rcnn_forward.7} parent=11 // pred_region
        %p152 = scmp.lt.s32.totalorder %s19, 0
        %s153 = scalar_select %p152, %s19, 0
        %s154 = scalar_lea.vmem %s2, %s153
      $region20: #{faster_rcnn_forward.7} parent=11 // pred_fallthru
        _
    $region12: #{faster_rcnn_forward.7} parent=5 // pred_fallthru
      _
    %p155 = scmp.lt.s32.totalorder %s9, 2
    // Predicated region
    $region21: #{faster_rcnn_forward.7} parent=5 // pred_check
      %p156 = pneg %p155
    $region22: #{faster_rcnn_forward.7} parent=5 // pred_check_branch
      %158 = sbr.rel (%p156) target = $region24
    $region23: #{faster_rcnn_forward.7} parent=5 // pred_region
      // Predicated region
      $region25: #{faster_rcnn_forward.7} parent=23 // pred_check
        %p159 = pneg %p41
      $region26: #{faster_rcnn_forward.7} parent=23 // pred_check_branch
        %161 = sbr.rel (%p159) target = $region28
      $region27: #{faster_rcnn_forward.7} parent=23 // pred_region
        %s162 = smul.u32 128, %s16
        %p163 = scmp.lt.s32.totalorder %s162, 255
        %s164 = scalar_select %p163, %s162, 255
        %s165 = smul.addr %s164, 2
        %s166 = smul.addr %s165, 4
        %s167 = scalar_lea.vmem %s0, %s166
        %s168 = smul.u32 128, %s16
      $region28: #{faster_rcnn_forward.7} parent=23 // pred_fallthru
        _
    $region24: #{faster_rcnn_forward.7} parent=5 // pred_fallthru
      _
    %p169 = scmp.le.s32.totalorder 1, %s9
    %p170 = scmp.lt.s32.totalorder %s9, 3
    %p171 = pnand %p169, %p170
    %p172 = pneg %p171
    // Predicated region
    $region29: #{faster_rcnn_forward.7} parent=5 // pred_check
      _
    $region30: #{faster_rcnn_forward.7} parent=5 // pred_check_branch
      %174 = sbr.rel (%p171) target = $region32
    $region31: #{faster_rcnn_forward.7} parent=5 // pred_region
      %s175 = ssub.s32 %s9, 1
      %s176 = smul.u32 128, %s18
      %p177 = scmp.lt.s32.totalorder %s176, 255
      %s178 = scalar_select %p177, %s176, 255
      %s179 = smul.addr %s178, 2
      %s180 = smul.addr %s179, 4
      %s181 = scalar_lea.vmem %s0, %s180
      %p182 = pneg %p47
      %p183 = pneg %p44
      %p184 = scmp.lt.s32.totalorder %s19, 0
      %s185 = scalar_select %p184, %s19, 0
      %s186 = smul.addr %s185, 4
      %s187 = scalar_lea.vmem %s1, %s186
      %p188 = pneg %p73
      %p189 = pneg %p70
      %p190 = scmp.lt.s32.totalorder %s19, 0
      %s191 = scalar_select %p190, %s19, 0
      %s192 = scalar_lea.vmem %s2, %s191
      %p193 = pneg %p99
      %p194 = pneg %p96
      %p195 = pneg %p127
      %p196 = pneg %p124
      %s197 = smul.u32 128, %s18
      %p198 = scmp.lt.s32.totalorder %s197, 255
      %s199 = scalar_select %p198, %s197, 255
      %p200 = scmp.lt.s32.totalorder %s19, 0
      %s201 = scalar_select %p200, %s19, 0
      %s202 = sadd.s32 %s201, %s199
      %s203 = smul.addr %s202, 4
      %s204 = scalar_lea.vmem %s3, %s203
      %s205 = smul.u32 128, %s18
      %p206 = scmp.lt.s32.totalorder %s205, 255
      %s207 = scalar_select %p206, %s205, 255
      %s208 = smul.addr %s207, 2
      %s209 = smul.addr %s208, 4
      %s210 = scalar_lea.vmem %s0, %s209
      %s211 = smul.u32 128, %s18
      %p212 = scmp.lt.s32.totalorder %s19, 0
      %s213 = scalar_select %p212, %s19, 0
      %s214 = smul.addr %s213, 4
      %s215 = scalar_lea.vmem %s1, %s214
      %p216 = scmp.lt.s32.totalorder %s19, 0
      %s217 = scalar_select %p216, %s19, 0
      %s218 = scalar_lea.vmem %s2, %s217
      %s219 = smul.u32 128, %s18
      %p220 = scmp.lt.s32.totalorder %s219, 255
      %s221 = scalar_select %p220, %s219, 255
      %p222 = scmp.lt.s32.totalorder %s19, 0
      %s223 = scalar_select %p222, %s19, 0
      %s224 = sadd.s32 %s223, %s221
      %s225 = smul.addr %s224, 4
      %s226 = scalar_lea.vmem %s3, %s225
      %s227 = smul.u32 128, %s18
      %v229 = vld [vmem:[%s210] sm:$0xff]
      %v230 = vld [vmem:[%s210 + $0x8] sm:$0xff]
      %v231 = vld [vmem:[%s210 + $0x10] sm:$0xff]
      %v232 = vld [vmem:[%s210 + $0x18] sm:$0xff]
      %v233 = vld [vmem:[%s210 + $0x20] sm:$0xff]
      %v234 = vld [vmem:[%s210 + $0x28] sm:$0xff]
      %v235 = vld [vmem:[%s210 + $0x30] sm:$0xff]
      %v236 = vld [vmem:[%s210 + $0x38] sm:$0xff]
      %v237 = vld [vmem:[%s210 + $0x40] sm:$0xff]
      %v238 = vld [vmem:[%s210 + $0x48] sm:$0xff]
      %v239 = vld [vmem:[%s210 + $0x50] sm:$0xff]
      %v240 = vld [vmem:[%s210 + $0x58] sm:$0xff]
      %v241 = vld [vmem:[%s210 + $0x60] sm:$0xff]
      %v242 = vld [vmem:[%s210 + $0x68] sm:$0xff]
      %v243 = vld [vmem:[%s210 + $0x70] sm:$0xff]
      %v244 = vld [vmem:[%s210 + $0x78] sm:$0xff]
      %v245 = vld [vmem:[%s210 + $0x80] sm:$0xff]
      %v246 = vld [vmem:[%s210 + $0x88] sm:$0xff]
      %v247 = vld [vmem:[%s210 + $0x90] sm:$0xff]
      %v248 = vld [vmem:[%s210 + $0x98] sm:$0xff]
      %v249 = vld [vmem:[%s210 + $0xa0] sm:$0xff]
      %v250 = vld [vmem:[%s210 + $0xa8] sm:$0xff]
      %v251 = vld [vmem:[%s210 + $0xb0] sm:$0xff]
      %v252 = vld [vmem:[%s210 + $0xb8] sm:$0xff]
      %v253 = vld [vmem:[%s210 + $0xc0] sm:$0xff]
      %v254 = vld [vmem:[%s210 + $0xc8] sm:$0xff]
      %v255 = vld [vmem:[%s210 + $0xd0] sm:$0xff]
      %v256 = vld [vmem:[%s210 + $0xd8] sm:$0xff]
      %v257 = vld [vmem:[%s210 + $0xe0] sm:$0xff]
      %v258 = vld [vmem:[%s210 + $0xe8] sm:$0xff]
      %v259 = vld [vmem:[%s210 + $0xf0] sm:$0xff]
      %v260 = vld [vmem:[%s210 + $0xf8] sm:$0xff]
      %v261 = vld [vmem:[%s210 + $0x100] sm:$0xff]
      %v262 = vld [vmem:[%s210 + $0x108] sm:$0xff]
      %v263 = vld [vmem:[%s210 + $0x110] sm:$0xff]
      %v264 = vld [vmem:[%s210 + $0x118] sm:$0xff]
      %v265 = vld [vmem:[%s210 + $0x120] sm:$0xff]
      %v266 = vld [vmem:[%s210 + $0x128] sm:$0xff]
      %v267 = vld [vmem:[%s210 + $0x130] sm:$0xff]
      %v268 = vld [vmem:[%s210 + $0x138] sm:$0xff]
      %v269 = vld [vmem:[%s210 + $0x140] sm:$0xff]
      %v270 = vld [vmem:[%s210 + $0x148] sm:$0xff]
      %v271 = vld [vmem:[%s210 + $0x150] sm:$0xff]
      %v272 = vld [vmem:[%s210 + $0x158] sm:$0xff]
      %v273 = vld [vmem:[%s210 + $0x160] sm:$0xff]
      %v274 = vld [vmem:[%s210 + $0x168] sm:$0xff]
      %v275 = vld [vmem:[%s210 + $0x170] sm:$0xff]
      %v276 = vld [vmem:[%s210 + $0x178] sm:$0xff]
      %v277 = vld [vmem:[%s210 + $0x180] sm:$0xff]
      %v278 = vld [vmem:[%s210 + $0x188] sm:$0xff]
      %v279 = vld [vmem:[%s210 + $0x190] sm:$0xff]
      %v280 = vld [vmem:[%s210 + $0x198] sm:$0xff]
      %v281 = vld [vmem:[%s210 + $0x1a0] sm:$0xff]
      %v282 = vld [vmem:[%s210 + $0x1a8] sm:$0xff]
      %v283 = vld [vmem:[%s210 + $0x1b0] sm:$0xff]
      %v284 = vld [vmem:[%s210 + $0x1b8] sm:$0xff]
      %v285 = vld [vmem:[%s210 + $0x1c0] sm:$0xff]
      %v286 = vld [vmem:[%s210 + $0x1c8] sm:$0xff]
      %v287 = vld [vmem:[%s210 + $0x1d0] sm:$0xff]
      %v288 = vld [vmem:[%s210 + $0x1d8] sm:$0xff]
      %v289 = vld [vmem:[%s210 + $0x1e0] sm:$0xff]
      %v290 = vld [vmem:[%s210 + $0x1e8] sm:$0xff]
      %v291 = vld [vmem:[%s210 + $0x1f0] sm:$0xff]
      %v292 = vld [vmem:[%s210 + $0x1f8] sm:$0xff]
      %v293 = vld [vmem:[%s210 + $0x200] sm:$0xff]
      %v294 = vld [vmem:[%s210 + $0x208] sm:$0xff]
      %v295 = vld [vmem:[%s210 + $0x210] sm:$0xff]
      %v296 = vld [vmem:[%s210 + $0x218] sm:$0xff]
      %v297 = vld [vmem:[%s210 + $0x220] sm:$0xff]
      %v298 = vld [vmem:[%s210 + $0x228] sm:$0xff]
      %v299 = vld [vmem:[%s210 + $0x230] sm:$0xff]
      %v300 = vld [vmem:[%s210 + $0x238] sm:$0xff]
      %v301 = vld [vmem:[%s210 + $0x240] sm:$0xff]
      %v302 = vld [vmem:[%s210 + $0x248] sm:$0xff]
      %v303 = vld [vmem:[%s210 + $0x250] sm:$0xff]
      %v304 = vld [vmem:[%s210 + $0x258] sm:$0xff]
      %v305 = vld [vmem:[%s210 + $0x260] sm:$0xff]
      %v306 = vld [vmem:[%s210 + $0x268] sm:$0xff]
      %v307 = vld [vmem:[%s210 + $0x270] sm:$0xff]
      %v308 = vld [vmem:[%s210 + $0x278] sm:$0xff]
      %v309 = vld [vmem:[%s210 + $0x280] sm:$0xff]
      %v310 = vld [vmem:[%s210 + $0x288] sm:$0xff]
      %v311 = vld [vmem:[%s210 + $0x290] sm:$0xff]
      %v312 = vld [vmem:[%s210 + $0x298] sm:$0xff]
      %v313 = vld [vmem:[%s210 + $0x2a0] sm:$0xff]
      %v314 = vld [vmem:[%s210 + $0x2a8] sm:$0xff]
      %v315 = vld [vmem:[%s210 + $0x2b0] sm:$0xff]
      %v316 = vld [vmem:[%s210 + $0x2b8] sm:$0xff]
      %v317 = vld [vmem:[%s210 + $0x2c0] sm:$0xff]
      %v318 = vld [vmem:[%s210 + $0x2c8] sm:$0xff]
      %v319 = vld [vmem:[%s210 + $0x2d0] sm:$0xff]
      %v320 = vld [vmem:[%s210 + $0x2d8] sm:$0xff]
      %v321 = vld [vmem:[%s210 + $0x2e0] sm:$0xff]
      %v322 = vld [vmem:[%s210 + $0x2e8] sm:$0xff]
      %v323 = vld [vmem:[%s210 + $0x2f0] sm:$0xff]
      %v324 = vld [vmem:[%s210 + $0x2f8] sm:$0xff]
      %v325 = vld [vmem:[%s210 + $0x300] sm:$0xff]
      %v326 = vld [vmem:[%s210 + $0x308] sm:$0xff]
      %v327 = vld [vmem:[%s210 + $0x310] sm:$0xff]
      %v328 = vld [vmem:[%s210 + $0x318] sm:$0xff]
      %v329 = vld [vmem:[%s210 + $0x320] sm:$0xff]
      %v330 = vld [vmem:[%s210 + $0x328] sm:$0xff]
      %v331 = vld [vmem:[%s210 + $0x330] sm:$0xff]
      %v332 = vld [vmem:[%s210 + $0x338] sm:$0xff]
      %v333 = vld [vmem:[%s210 + $0x340] sm:$0xff]
      %v334 = vld [vmem:[%s210 + $0x348] sm:$0xff]
      %v335 = vld [vmem:[%s210 + $0x350] sm:$0xff]
      %v336 = vld [vmem:[%s210 + $0x358] sm:$0xff]
      %v337 = vld [vmem:[%s210 + $0x360] sm:$0xff]
      %v338 = vld [vmem:[%s210 + $0x368] sm:$0xff]
      %v339 = vld [vmem:[%s210 + $0x370] sm:$0xff]
      %v340 = vld [vmem:[%s210 + $0x378] sm:$0xff]
      %v341 = vld [vmem:[%s210 + $0x380] sm:$0xff]
      %v342 = vld [vmem:[%s210 + $0x388] sm:$0xff]
      %v343 = vld [vmem:[%s210 + $0x390] sm:$0xff]
      %v344 = vld [vmem:[%s210 + $0x398] sm:$0xff]
      %v345 = vld [vmem:[%s210 + $0x3a0] sm:$0xff]
      %v346 = vld [vmem:[%s210 + $0x3a8] sm:$0xff]
      %v347 = vld [vmem:[%s210 + $0x3b0] sm:$0xff]
      %v348 = vld [vmem:[%s210 + $0x3b8] sm:$0xff]
      %v349 = vld [vmem:[%s210 + $0x3c0] sm:$0xff]
      %v350 = vld [vmem:[%s210 + $0x3c8] sm:$0xff]
      %v351 = vld [vmem:[%s210 + $0x3d0] sm:$0xff]
      %v352 = vld [vmem:[%s210 + $0x3d8] sm:$0xff]
      %v353 = vld [vmem:[%s210 + $0x3e0] sm:$0xff]
      %v354 = vld [vmem:[%s210 + $0x3e8] sm:$0xff]
      %v355 = vld [vmem:[%s210 + $0x3f0] sm:$0xff]
      %v356 = vld [vmem:[%s210 + $0x3f8] sm:$0xff]
      %v357 = vld [vmem:[%s215] sm:$0xf]
      %v358 = vld [vmem:[%s215 + $0x4] sm:$0xf]
      %v359 = vld [vmem:[%s215 + $0x8] sm:$0xf]
      %v360 = vld [vmem:[%s215 + $0xc] sm:$0xf]
      %v361 = vld [vmem:[%s215 + $0x10] sm:$0xf]
      %v362 = vld [vmem:[%s215 + $0x14] sm:$0xf]
      %v363 = vld [vmem:[%s215 + $0x18] sm:$0xf]
      %v364 = vld [vmem:[%s215 + $0x1c] sm:$0xf]
      %v365 = vld [vmem:[%s215 + $0x20] sm:$0xf]
      %v366 = vld [vmem:[%s215 + $0x24] sm:$0xf]
      %v367 = vld [vmem:[%s215 + $0x28] sm:$0xf]
      %v368 = vld [vmem:[%s215 + $0x2c] sm:$0xf]
      %v369 = vld [vmem:[%s215 + $0x30] sm:$0xf]
      %v370 = vld [vmem:[%s215 + $0x34] sm:$0xf]
      %v371 = vld [vmem:[%s215 + $0x38] sm:$0xf]
      %v372 = vld [vmem:[%s215 + $0x3c] sm:$0xf]
      %v373 = vld [vmem:[%s215 + $0x40] sm:$0xf]
      %v374 = vld [vmem:[%s215 + $0x44] sm:$0xf]
      %v375 = vld [vmem:[%s215 + $0x48] sm:$0xf]
      %v376 = vld [vmem:[%s215 + $0x4c] sm:$0xf]
      %v377 = vld [vmem:[%s215 + $0x50] sm:$0xf]
      %v378 = vld [vmem:[%s215 + $0x54] sm:$0xf]
      %v379 = vld [vmem:[%s215 + $0x58] sm:$0xf]
      %v380 = vld [vmem:[%s215 + $0x5c] sm:$0xf]
      %v381 = vld [vmem:[%s215 + $0x60] sm:$0xf]
      %v382 = vld [vmem:[%s215 + $0x64] sm:$0xf]
      %v383 = vld [vmem:[%s215 + $0x68] sm:$0xf]
      %v384 = vld [vmem:[%s215 + $0x6c] sm:$0xf]
      %v385 = vld [vmem:[%s215 + $0x70] sm:$0xf]
      %v386 = vld [vmem:[%s215 + $0x74] sm:$0xf]
      %v387 = vld [vmem:[%s215 + $0x78] sm:$0xf]
      %v388 = vld [vmem:[%s215 + $0x7c] sm:$0xf]
      %v389 = vld [vmem:[%s218] sm:$0x1]
      %v391 = vlaneseq
      %v392 = vshrl.u32 %v391, 7
      %v393 = vsub.s32 0, %v392
      %v394 = vrot.slane %v389, %v393
      %v524 = vunpack.c.l.b16 %v229
      %v525 = vunpack.c.h.b16 %v229
      %v526 = vunpack.c.l.b16 %v230
      %v527 = vunpack.c.h.b16 %v230
      %v528 = vunpack.c.l.b16 %v231
      %v529 = vunpack.c.h.b16 %v231
      %v530 = vunpack.c.l.b16 %v232
      %v531 = vunpack.c.h.b16 %v232
      %v532 = vunpack.c.l.b16 %v233
      %v533 = vunpack.c.h.b16 %v233
      %v534 = vunpack.c.l.b16 %v234
      %v535 = vunpack.c.h.b16 %v234
      %v536 = vunpack.c.l.b16 %v235
      %v537 = vunpack.c.h.b16 %v235
      %v538 = vunpack.c.l.b16 %v236
      %v539 = vunpack.c.h.b16 %v236
      %v540 = vunpack.c.l.b16 %v237
      %v541 = vunpack.c.h.b16 %v237
      %v542 = vunpack.c.l.b16 %v238
      %v543 = vunpack.c.h.b16 %v238
      %v544 = vunpack.c.l.b16 %v239
      %v545 = vunpack.c.h.b16 %v239
      %v546 = vunpack.c.l.b16 %v240
      %v547 = vunpack.c.h.b16 %v240
      %v548 = vunpack.c.l.b16 %v241
      %v549 = vunpack.c.h.b16 %v241
      %v550 = vunpack.c.l.b16 %v242
      %v551 = vunpack.c.h.b16 %v242
      %v552 = vunpack.c.l.b16 %v243
      %v553 = vunpack.c.h.b16 %v243
      %v554 = vunpack.c.l.b16 %v244
      %v555 = vunpack.c.h.b16 %v244
      %v556 = vunpack.c.l.b16 %v245
      %v557 = vunpack.c.h.b16 %v245
      %v558 = vunpack.c.l.b16 %v246
      %v559 = vunpack.c.h.b16 %v246
      %v560 = vunpack.c.l.b16 %v247
      %v561 = vunpack.c.h.b16 %v247
      %v562 = vunpack.c.l.b16 %v248
      %v563 = vunpack.c.h.b16 %v248
      %v564 = vunpack.c.l.b16 %v249
      %v565 = vunpack.c.h.b16 %v249
      %v566 = vunpack.c.l.b16 %v250
      %v567 = vunpack.c.h.b16 %v250
      %v568 = vunpack.c.l.b16 %v251
      %v569 = vunpack.c.h.b16 %v251
      %v570 = vunpack.c.l.b16 %v252
      %v571 = vunpack.c.h.b16 %v252
      %v572 = vunpack.c.l.b16 %v253
      %v573 = vunpack.c.h.b16 %v253
      %v574 = vunpack.c.l.b16 %v254
      %v575 = vunpack.c.h.b16 %v254
      %v576 = vunpack.c.l.b16 %v255
      %v577 = vunpack.c.h.b16 %v255
      %v578 = vunpack.c.l.b16 %v256
      %v579 = vunpack.c.h.b16 %v256
      %v580 = vunpack.c.l.b16 %v257
      %v581 = vunpack.c.h.b16 %v257
      %v582 = vunpack.c.l.b16 %v258
      %v583 = vunpack.c.h.b16 %v258
      %v584 = vunpack.c.l.b16 %v259
      %v585 = vunpack.c.h.b16 %v259
      %v586 = vunpack.c.l.b16 %v260
      %v587 = vunpack.c.h.b16 %v260
      %v588 = vunpack.c.l.b16 %v261
      %v589 = vunpack.c.h.b16 %v261
      %v590 = vunpack.c.l.b16 %v262
      %v591 = vunpack.c.h.b16 %v262
      %v592 = vunpack.c.l.b16 %v263
      %v593 = vunpack.c.h.b16 %v263
      %v594 = vunpack.c.l.b16 %v264
      %v595 = vunpack.c.h.b16 %v264
      %v596 = vunpack.c.l.b16 %v265
      %v597 = vunpack.c.h.b16 %v265
      %v598 = vunpack.c.l.b16 %v266
      %v599 = vunpack.c.h.b16 %v266
      %v600 = vunpack.c.l.b16 %v267
      %v601 = vunpack.c.h.b16 %v267
      %v602 = vunpack.c.l.b16 %v268
      %v603 = vunpack.c.h.b16 %v268
      %v604 = vunpack.c.l.b16 %v269
      %v605 = vunpack.c.h.b16 %v269
      %v606 = vunpack.c.l.b16 %v270
      %v607 = vunpack.c.h.b16 %v270
      %v608 = vunpack.c.l.b16 %v271
      %v609 = vunpack.c.h.b16 %v271
      %v610 = vunpack.c.l.b16 %v272
      %v611 = vunpack.c.h.b16 %v272
      %v612 = vunpack.c.l.b16 %v273
      %v613 = vunpack.c.h.b16 %v273
      %v614 = vunpack.c.l.b16 %v274
      %v615 = vunpack.c.h.b16 %v274
      %v616 = vunpack.c.l.b16 %v275
      %v617 = vunpack.c.h.b16 %v275
      %v618 = vunpack.c.l.b16 %v276
      %v619 = vunpack.c.h.b16 %v276
      %v620 = vunpack.c.l.b16 %v277
      %v621 = vunpack.c.h.b16 %v277
      %v622 = vunpack.c.l.b16 %v278
      %v623 = vunpack.c.h.b16 %v278
      %v624 = vunpack.c.l.b16 %v279
      %v625 = vunpack.c.h.b16 %v279
      %v626 = vunpack.c.l.b16 %v280
      %v627 = vunpack.c.h.b16 %v280
      %v628 = vunpack.c.l.b16 %v281
      %v629 = vunpack.c.h.b16 %v281
      %v630 = vunpack.c.l.b16 %v282
      %v631 = vunpack.c.h.b16 %v282
      %v632 = vunpack.c.l.b16 %v283
      %v633 = vunpack.c.h.b16 %v283
      %v634 = vunpack.c.l.b16 %v284
      %v635 = vunpack.c.h.b16 %v284
      %v636 = vunpack.c.l.b16 %v285
      %v637 = vunpack.c.h.b16 %v285
      %v638 = vunpack.c.l.b16 %v286
      %v639 = vunpack.c.h.b16 %v286
      %v640 = vunpack.c.l.b16 %v287
      %v641 = vunpack.c.h.b16 %v287
      %v642 = vunpack.c.l.b16 %v288
      %v643 = vunpack.c.h.b16 %v288
      %v644 = vunpack.c.l.b16 %v289
      %v645 = vunpack.c.h.b16 %v289
      %v646 = vunpack.c.l.b16 %v290
      %v647 = vunpack.c.h.b16 %v290
      %v648 = vunpack.c.l.b16 %v291
      %v649 = vunpack.c.h.b16 %v291
      %v650 = vunpack.c.l.b16 %v292
      %v651 = vunpack.c.h.b16 %v292
      %v652 = vunpack.c.l.b16 %v293
      %v653 = vunpack.c.h.b16 %v293
      %v654 = vunpack.c.l.b16 %v294
      %v655 = vunpack.c.h.b16 %v294
      %v656 = vunpack.c.l.b16 %v295
      %v657 = vunpack.c.h.b16 %v295
      %v658 = vunpack.c.l.b16 %v296
      %v659 = vunpack.c.h.b16 %v296
      %v660 = vunpack.c.l.b16 %v297
      %v661 = vunpack.c.h.b16 %v297
      %v662 = vunpack.c.l.b16 %v298
      %v663 = vunpack.c.h.b16 %v298
      %v664 = vunpack.c.l.b16 %v299
      %v665 = vunpack.c.h.b16 %v299
      %v666 = vunpack.c.l.b16 %v300
      %v667 = vunpack.c.h.b16 %v300
      %v668 = vunpack.c.l.b16 %v301
      %v669 = vunpack.c.h.b16 %v301
      %v670 = vunpack.c.l.b16 %v302
      %v671 = vunpack.c.h.b16 %v302
      %v672 = vunpack.c.l.b16 %v303
      %v673 = vunpack.c.h.b16 %v303
      %v674 = vunpack.c.l.b16 %v304
      %v675 = vunpack.c.h.b16 %v304
      %v676 = vunpack.c.l.b16 %v305
      %v677 = vunpack.c.h.b16 %v305
      %v678 = vunpack.c.l.b16 %v306
      %v679 = vunpack.c.h.b16 %v306
      %v680 = vunpack.c.l.b16 %v307
      %v681 = vunpack.c.h.b16 %v307
      %v682 = vunpack.c.l.b16 %v308
      %v683 = vunpack.c.h.b16 %v308
      %v684 = vunpack.c.l.b16 %v309
      %v685 = vunpack.c.h.b16 %v309
      %v686 = vunpack.c.l.b16 %v310
      %v687 = vunpack.c.h.b16 %v310
      %v688 = vunpack.c.l.b16 %v311
      %v689 = vunpack.c.h.b16 %v311
      %v690 = vunpack.c.l.b16 %v312
      %v691 = vunpack.c.h.b16 %v312
      %v692 = vunpack.c.l.b16 %v313
      %v693 = vunpack.c.h.b16 %v313
      %v694 = vunpack.c.l.b16 %v314
      %v695 = vunpack.c.h.b16 %v314
      %v696 = vunpack.c.l.b16 %v315
      %v697 = vunpack.c.h.b16 %v315
      %v698 = vunpack.c.l.b16 %v316
      %v699 = vunpack.c.h.b16 %v316
      %v700 = vunpack.c.l.b16 %v317
      %v701 = vunpack.c.h.b16 %v317
      %v702 = vunpack.c.l.b16 %v318
      %v703 = vunpack.c.h.b16 %v318
      %v704 = vunpack.c.l.b16 %v319
      %v705 = vunpack.c.h.b16 %v319
      %v706 = vunpack.c.l.b16 %v320
      %v707 = vunpack.c.h.b16 %v320
      %v708 = vunpack.c.l.b16 %v321
      %v709 = vunpack.c.h.b16 %v321
      %v710 = vunpack.c.l.b16 %v322
      %v711 = vunpack.c.h.b16 %v322
      %v712 = vunpack.c.l.b16 %v323
      %v713 = vunpack.c.h.b16 %v323
      %v714 = vunpack.c.l.b16 %v324
      %v715 = vunpack.c.h.b16 %v324
      %v716 = vunpack.c.l.b16 %v325
      %v717 = vunpack.c.h.b16 %v325
      %v718 = vunpack.c.l.b16 %v326
      %v719 = vunpack.c.h.b16 %v326
      %v720 = vunpack.c.l.b16 %v327
      %v721 = vunpack.c.h.b16 %v327
      %v722 = vunpack.c.l.b16 %v328
      %v723 = vunpack.c.h.b16 %v328
      %v724 = vunpack.c.l.b16 %v329
      %v725 = vunpack.c.h.b16 %v329
      %v726 = vunpack.c.l.b16 %v330
      %v727 = vunpack.c.h.b16 %v330
      %v728 = vunpack.c.l.b16 %v331
      %v729 = vunpack.c.h.b16 %v331
      %v730 = vunpack.c.l.b16 %v332
      %v731 = vunpack.c.h.b16 %v332
      %v732 = vunpack.c.l.b16 %v333
      %v733 = vunpack.c.h.b16 %v333
      %v734 = vunpack.c.l.b16 %v334
      %v735 = vunpack.c.h.b16 %v334
      %v736 = vunpack.c.l.b16 %v335
      %v737 = vunpack.c.h.b16 %v335
      %v738 = vunpack.c.l.b16 %v336
      %v739 = vunpack.c.h.b16 %v336
      %v740 = vunpack.c.l.b16 %v337
      %v741 = vunpack.c.h.b16 %v337
      %v742 = vunpack.c.l.b16 %v338
      %v743 = vunpack.c.h.b16 %v338
      %v744 = vunpack.c.l.b16 %v339
      %v745 = vunpack.c.h.b16 %v339
      %v746 = vunpack.c.l.b16 %v340
      %v747 = vunpack.c.h.b16 %v340
      %v748 = vunpack.c.l.b16 %v341
      %v749 = vunpack.c.h.b16 %v341
      %v750 = vunpack.c.l.b16 %v342
      %v751 = vunpack.c.h.b16 %v342
      %v752 = vunpack.c.l.b16 %v343
      %v753 = vunpack.c.h.b16 %v343
      %v754 = vunpack.c.l.b16 %v344
      %v755 = vunpack.c.h.b16 %v344
      %v756 = vunpack.c.l.b16 %v345
      %v757 = vunpack.c.h.b16 %v345
      %v758 = vunpack.c.l.b16 %v346
      %v759 = vunpack.c.h.b16 %v346
      %v760 = vunpack.c.l.b16 %v347
      %v761 = vunpack.c.h.b16 %v347
      %v762 = vunpack.c.l.b16 %v348
      %v763 = vunpack.c.h.b16 %v348
      %v764 = vunpack.c.l.b16 %v349
      %v765 = vunpack.c.h.b16 %v349
      %v766 = vunpack.c.l.b16 %v350
      %v767 = vunpack.c.h.b16 %v350
      %v768 = vunpack.c.l.b16 %v351
      %v769 = vunpack.c.h.b16 %v351
      %v770 = vunpack.c.l.b16 %v352
      %v771 = vunpack.c.h.b16 %v352
      %v772 = vunpack.c.l.b16 %v353
      %v773 = vunpack.c.h.b16 %v353
      %v774 = vunpack.c.l.b16 %v354
      %v775 = vunpack.c.h.b16 %v354
      %v776 = vunpack.c.l.b16 %v355
      %v777 = vunpack.c.h.b16 %v355
      %v778 = vunpack.c.l.b16 %v356
      %v779 = vunpack.c.h.b16 %v356
      %v780 = vpack.c.b16 %v526, %v524
      %v781 = vpack.c.b16 %v527, %v525
      %v782 = vpack.c.b16 %v530, %v528
      %v783 = vpack.c.b16 %v531, %v529
      %v784 = vpack.c.b16 %v534, %v532
      %v785 = vpack.c.b16 %v535, %v533
      %v786 = vpack.c.b16 %v538, %v536
      %v787 = vpack.c.b16 %v539, %v537
      %v788 = vpack.c.b16 %v542, %v540
      %v789 = vpack.c.b16 %v543, %v541
      %v790 = vpack.c.b16 %v546, %v544
      %v791 = vpack.c.b16 %v547, %v545
      %v792 = vpack.c.b16 %v550, %v548
      %v793 = vpack.c.b16 %v551, %v549
      %v794 = vpack.c.b16 %v554, %v552
      %v795 = vpack.c.b16 %v555, %v553
      %v796 = vpack.c.b16 %v558, %v556
      %v797 = vpack.c.b16 %v559, %v557
      %v798 = vpack.c.b16 %v562, %v560
      %v799 = vpack.c.b16 %v563, %v561
      %v800 = vpack.c.b16 %v566, %v564
      %v801 = vpack.c.b16 %v567, %v565
      %v802 = vpack.c.b16 %v570, %v568
      %v803 = vpack.c.b16 %v571, %v569
      %v804 = vpack.c.b16 %v574, %v572
      %v805 = vpack.c.b16 %v575, %v573
      %v806 = vpack.c.b16 %v578, %v576
      %v807 = vpack.c.b16 %v579, %v577
      %v808 = vpack.c.b16 %v582, %v580
      %v809 = vpack.c.b16 %v583, %v581
      %v810 = vpack.c.b16 %v586, %v584
      %v811 = vpack.c.b16 %v587, %v585
      %v812 = vpack.c.b16 %v590, %v588
      %v813 = vpack.c.b16 %v591, %v589
      %v814 = vpack.c.b16 %v594, %v592
      %v815 = vpack.c.b16 %v595, %v593
      %v816 = vpack.c.b16 %v598, %v596
      %v817 = vpack.c.b16 %v599, %v597
      %v818 = vpack.c.b16 %v602, %v600
      %v819 = vpack.c.b16 %v603, %v601
      %v820 = vpack.c.b16 %v606, %v604
      %v821 = vpack.c.b16 %v607, %v605
      %v822 = vpack.c.b16 %v610, %v608
      %v823 = vpack.c.b16 %v611, %v609
      %v824 = vpack.c.b16 %v614, %v612
      %v825 = vpack.c.b16 %v615, %v613
      %v826 = vpack.c.b16 %v618, %v616
      %v827 = vpack.c.b16 %v619, %v617
      %v828 = vpack.c.b16 %v622, %v620
      %v829 = vpack.c.b16 %v623, %v621
      %v830 = vpack.c.b16 %v626, %v624
      %v831 = vpack.c.b16 %v627, %v625
      %v832 = vpack.c.b16 %v630, %v628
      %v833 = vpack.c.b16 %v631, %v629
      %v834 = vpack.c.b16 %v634, %v632
      %v835 = vpack.c.b16 %v635, %v633
      %v836 = vpack.c.b16 %v638, %v636
      %v837 = vpack.c.b16 %v639, %v637
      %v838 = vpack.c.b16 %v642, %v640
      %v839 = vpack.c.b16 %v643, %v641
      %v840 = vpack.c.b16 %v646, %v644
      %v841 = vpack.c.b16 %v647, %v645
      %v842 = vpack.c.b16 %v650, %v648
      %v843 = vpack.c.b16 %v651, %v649
      %v844 = vpack.c.b16 %v654, %v652
      %v845 = vpack.c.b16 %v655, %v653
      %v846 = vpack.c.b16 %v658, %v656
      %v847 = vpack.c.b16 %v659, %v657
      %v848 = vpack.c.b16 %v662, %v660
      %v849 = vpack.c.b16 %v663, %v661
      %v850 = vpack.c.b16 %v666, %v664
      %v851 = vpack.c.b16 %v667, %v665
      %v852 = vpack.c.b16 %v670, %v668
      %v853 = vpack.c.b16 %v671, %v669
      %v854 = vpack.c.b16 %v674, %v672
      %v855 = vpack.c.b16 %v675, %v673
      %v856 = vpack.c.b16 %v678, %v676
      %v857 = vpack.c.b16 %v679, %v677
      %v858 = vpack.c.b16 %v682, %v680
      %v859 = vpack.c.b16 %v683, %v681
      %v860 = vpack.c.b16 %v686, %v684
      %v861 = vpack.c.b16 %v687, %v685
      %v862 = vpack.c.b16 %v690, %v688
      %v863 = vpack.c.b16 %v691, %v689
      %v864 = vpack.c.b16 %v694, %v692
      %v865 = vpack.c.b16 %v695, %v693
      %v866 = vpack.c.b16 %v698, %v696
      %v867 = vpack.c.b16 %v699, %v697
      %v868 = vpack.c.b16 %v702, %v700
      %v869 = vpack.c.b16 %v703, %v701
      %v870 = vpack.c.b16 %v706, %v704
      %v871 = vpack.c.b16 %v707, %v705
      %v872 = vpack.c.b16 %v710, %v708
      %v873 = vpack.c.b16 %v711, %v709
      %v874 = vpack.c.b16 %v714, %v712
      %v875 = vpack.c.b16 %v715, %v713
      %v876 = vpack.c.b16 %v718, %v716
      %v877 = vpack.c.b16 %v719, %v717
      %v878 = vpack.c.b16 %v722, %v720
      %v879 = vpack.c.b16 %v723, %v721
      %v880 = vpack.c.b16 %v726, %v724
      %v881 = vpack.c.b16 %v727, %v725
      %v882 = vpack.c.b16 %v730, %v728
      %v883 = vpack.c.b16 %v731, %v729
      %v884 = vpack.c.b16 %v734, %v732
      %v885 = vpack.c.b16 %v735, %v733
      %v886 = vpack.c.b16 %v738, %v736
      %v887 = vpack.c.b16 %v739, %v737
      %v888 = vpack.c.b16 %v742, %v740
      %v889 = vpack.c.b16 %v743, %v741
      %v890 = vpack.c.b16 %v746, %v744
      %v891 = vpack.c.b16 %v747, %v745
      %v892 = vpack.c.b16 %v750, %v748
      %v893 = vpack.c.b16 %v751, %v749
      %v894 = vpack.c.b16 %v754, %v752
      %v895 = vpack.c.b16 %v755, %v753
      %v896 = vpack.c.b16 %v758, %v756
      %v897 = vpack.c.b16 %v759, %v757
      %v898 = vpack.c.b16 %v762, %v760
      %v899 = vpack.c.b16 %v763, %v761
      %v900 = vpack.c.b16 %v766, %v764
      %v901 = vpack.c.b16 %v767, %v765
      %v902 = vpack.c.b16 %v770, %v768
      %v903 = vpack.c.b16 %v771, %v769
      %v904 = vpack.c.b16 %v774, %v772
      %v905 = vpack.c.b16 %v775, %v773
      %v906 = vpack.c.b16 %v778, %v776
      %v907 = vpack.c.b16 %v779, %v777
      %v1068 = vunpack.c.l.b16 %v357
      %v1069 = vunpack.c.l.b16 %v358
      %v1070 = vunpack.c.l.b16 %v359
      %v1071 = vunpack.c.l.b16 %v360
      %v1072 = vunpack.c.l.b16 %v361
      %v1073 = vunpack.c.l.b16 %v362
      %v1074 = vunpack.c.l.b16 %v363
      %v1075 = vunpack.c.l.b16 %v364
      %v1076 = vunpack.c.l.b16 %v365
      %v1077 = vunpack.c.l.b16 %v366
      %v1078 = vunpack.c.l.b16 %v367
      %v1079 = vunpack.c.l.b16 %v368
      %v1080 = vunpack.c.l.b16 %v369
      %v1081 = vunpack.c.l.b16 %v370
      %v1082 = vunpack.c.l.b16 %v371
      %v1083 = vunpack.c.l.b16 %v372
      %v1084 = vunpack.c.l.b16 %v373
      %v1085 = vunpack.c.l.b16 %v374
      %v1086 = vunpack.c.l.b16 %v375
      %v1087 = vunpack.c.l.b16 %v376
      %v1088 = vunpack.c.l.b16 %v377
      %v1089 = vunpack.c.l.b16 %v378
      %v1090 = vunpack.c.l.b16 %v379
      %v1091 = vunpack.c.l.b16 %v380
      %v1092 = vunpack.c.l.b16 %v381
      %v1093 = vunpack.c.l.b16 %v382
      %v1094 = vunpack.c.l.b16 %v383
      %v1095 = vunpack.c.l.b16 %v384
      %v1096 = vunpack.c.l.b16 %v385
      %v1097 = vunpack.c.l.b16 %v386
      %v1098 = vunpack.c.l.b16 %v387
      %v1099 = vunpack.c.l.b16 %v388
      %v1100 = vpack.c.b16 %v1069, %v1068
      %v1101 = vpack.c.b16 %v1071, %v1070
      %v1102 = vpack.c.b16 %v1073, %v1072
      %v1103 = vpack.c.b16 %v1075, %v1074
      %v1104 = vpack.c.b16 %v1077, %v1076
      %v1105 = vpack.c.b16 %v1079, %v1078
      %v1106 = vpack.c.b16 %v1081, %v1080
      %v1107 = vpack.c.b16 %v1083, %v1082
      %v1108 = vpack.c.b16 %v1085, %v1084
      %v1109 = vpack.c.b16 %v1087, %v1086
      %v1110 = vpack.c.b16 %v1089, %v1088
      %v1111 = vpack.c.b16 %v1091, %v1090
      %v1112 = vpack.c.b16 %v1093, %v1092
      %v1113 = vpack.c.b16 %v1095, %v1094
      %v1114 = vpack.c.b16 %v1097, %v1096
      %v1115 = vpack.c.b16 %v1099, %v1098
      %1132 = vmatprep.subr.bf16.mxu0 0
      %1133 = vmatpush1.bf16.msra.mxu0 %v1100
      %1134 = vmatprep.subr.bf16.mxu0 0
      %1135 = vmatpush1.bf16.msra.mxu0 %v1101
      %1136 = vmatprep.subr.bf16.mxu0 0
      %1137 = vmatpush1.bf16.msra.mxu0 %v1102
      %1138 = vmatprep.subr.bf16.mxu0 0
      %1139 = vmatpush1.bf16.msra.mxu0 %v1103
      %1140 = vmatprep.subr.bf16.mxu0 0
      %1141 = vmatpush1.bf16.msra.mxu0 %v1104
      %1142 = vmatprep.subr.bf16.mxu0 0
      %1143 = vmatpush1.bf16.msra.mxu0 %v1105
      %1144 = vmatprep.subr.bf16.mxu0 0
      %1145 = vmatpush1.bf16.msra.mxu0 %v1106
      %1146 = vmatprep.subr.bf16.mxu0 0
      %1147 = vmatpush1.bf16.msra.mxu0 %v1107
      %1148 = vmatprep.subr.bf16.mxu0 0
      %1149 = vmatpush1.bf16.msra.mxu0 %v1108
      %1150 = vmatprep.subr.bf16.mxu0 0
      %1151 = vmatpush1.bf16.msra.mxu0 %v1109
      %1152 = vmatprep.subr.bf16.mxu0 0
      %1153 = vmatpush1.bf16.msra.mxu0 %v1110
      %1154 = vmatprep.subr.bf16.mxu0 0
      %1155 = vmatpush1.bf16.msra.mxu0 %v1111
      %1156 = vmatprep.subr.bf16.mxu0 0
      %1157 = vmatpush1.bf16.msra.mxu0 %v1112
      %1158 = vmatprep.subr.bf16.mxu0 0
      %1159 = vmatpush1.bf16.msra.mxu0 %v1113
      %1160 = vmatprep.subr.bf16.mxu0 0
      %1161 = vmatpush1.bf16.msra.mxu0 %v1114
      %1162 = vmatprep.subr.bf16.mxu0 0
      %1163 = vmatpush1.bf16.msra.mxu0 %v1115
      %1164 = vmatprep.mubr.bf16.mxu0 %v781
      %1165 = vmatmul.mubr.bf16.gmra.mrb[0].mxu0 %v780
      %v1166 = vpop.f32.mrb[0].mxu0
      %v1167 = vadd.f32 %v394, %v1166
      %v1168 = vpop.f32.mrb[0].mxu0
      %v1169 = vpop.f32.mrb[0].mxu0
      %v1170 = vadd.f32 %v394, %v1169
      %v1171 = vpop.f32.mrb[0].mxu0
      %1172 = vmatprep.mubr.bf16.mxu0 %v783
      %1173 = vmatmul.mubr.bf16.gmra.mrb[0].mxu0 %v782
      %v1174 = vpop.f32.mrb[0].mxu0
      %v1175 = vadd.f32 %v394, %v1174
      %v1176 = vpop.f32.mrb[0].mxu0
      %v1177 = vpop.f32.mrb[0].mxu0
      %v1178 = vadd.f32 %v394, %v1177
      %v1179 = vpop.f32.mrb[0].mxu0
      %1180 = vmatprep.mubr.bf16.mxu0 %v785
      %1181 = vmatmul.mubr.bf16.gmra.mrb[0].mxu0 %v784
      %v1182 = vpop.f32.mrb[0].mxu0
      %v1183 = vadd.f32 %v394, %v1182
      %v1184 = vpop.f32.mrb[0].mxu0
      %v1185 = vpop.f32.mrb[0].mxu0
      %v1186 = vadd.f32 %v394, %v1185
      %v1187 = vpop.f32.mrb[0].mxu0
      %1188 = vmatprep.mubr.bf16.mxu0 %v787
      %1189 = vmatmul.mubr.bf16.gmra.mrb[0].mxu0 %v786
      %v1190 = vpop.f32.mrb[0].mxu0
      %v1191 = vadd.f32 %v394, %v1190
      %v1192 = vpop.f32.mrb[0].mxu0
      %v1193 = vpop.f32.mrb[0].mxu0
      %v1194 = vadd.f32 %v394, %v1193
      %v1195 = vpop.f32.mrb[0].mxu0
      %1196 = vmatprep.mubr.bf16.mxu0 %v789
      %1197 = vmatmul.mubr.bf16.gmra.mrb[0].mxu0 %v788
      %v1198 = vpop.f32.mrb[0].mxu0
      %v1199 = vadd.f32 %v394, %v1198
      %v1200 = vpop.f32.mrb[0].mxu0
      %v1201 = vpop.f32.mrb[0].mxu0
      %v1202 = vadd.f32 %v394, %v1201
      %v1203 = vpop.f32.mrb[0].mxu0
      %1204 = vmatprep.mubr.bf16.mxu0 %v791
      %1205 = vmatmul.mubr.bf16.gmra.mrb[0].mxu0 %v790
      %v1206 = vpop.f32.mrb[0].mxu0
      %v1207 = vadd.f32 %v394, %v1206
      %v1208 = vpop.f32.mrb[0].mxu0
      %v1209 = vpop.f32.mrb[0].mxu0
      %v1210 = vadd.f32 %v394, %v1209
      %v1211 = vpop.f32.mrb[0].mxu0
      %1212 = vmatprep.mubr.bf16.mxu0 %v793
      %1213 = vmatmul.mubr.bf16.gmra.mrb[0].mxu0 %v792
      %v1214 = vpop.f32.mrb[0].mxu0
      %v1215 = vadd.f32 %v394, %v1214
      %v1216 = vpop.f32.mrb[0].mxu0
      %v1217 = vpop.f32.mrb[0].mxu0
      %v1218 = vadd.f32 %v394, %v1217
      %v1219 = vpop.f32.mrb[0].mxu0
      %1220 = vmatprep.mubr.bf16.mxu0 %v795
      %1221 = vmatmul.mubr.bf16.gmra.mrb[0].mxu0 %v794
      %v1222 = vpop.f32.mrb[0].mxu0
      %v1223 = vadd.f32 %v394, %v1222
      %v1224 = vpop.f32.mrb[0].mxu0
      %v1225 = vpop.f32.mrb[0].mxu0
      %v1226 = vadd.f32 %v394, %v1225
      %v1227 = vpop.f32.mrb[0].mxu0
      %1228 = vmatprep.mubr.bf16.mxu0 %v797
      %1229 = vmatmul.mubr.bf16.gmra.mrb[0].mxu0 %v796
      %v1230 = vpop.f32.mrb[0].mxu0
      %v1231 = vadd.f32 %v394, %v1230
      %v1232 = vpop.f32.mrb[0].mxu0
      %v1233 = vpop.f32.mrb[0].mxu0
      %v1234 = vadd.f32 %v394, %v1233
      %v1235 = vpop.f32.mrb[0].mxu0
      %1236 = vmatprep.mubr.bf16.mxu0 %v799
      %1237 = vmatmul.mubr.bf16.gmra.mrb[0].mxu0 %v798
      %v1238 = vpop.f32.mrb[0].mxu0
      %v1239 = vadd.f32 %v394, %v1238
      %v1240 = vpop.f32.mrb[0].mxu0
      %v1241 = vpop.f32.mrb[0].mxu0
      %v1242 = vadd.f32 %v394, %v1241
      %v1243 = vpop.f32.mrb[0].mxu0
      %1244 = vmatprep.mubr.bf16.mxu0 %v801
      %1245 = vmatmul.mubr.bf16.gmra.mrb[0].mxu0 %v800
      %v1246 = vpop.f32.mrb[0].mxu0
      %v1247 = vadd.f32 %v394, %v1246
      %v1248 = vpop.f32.mrb[0].mxu0
      %v1249 = vpop.f32.mrb[0].mxu0
      %v1250 = vadd.f32 %v394, %v1249
      %v1251 = vpop.f32.mrb[0].mxu0
      %1252 = vmatprep.mubr.bf16.mxu0 %v803
      %1253 = vmatmul.mubr.bf16.gmra.mrb[0].mxu0 %v802
      %v1254 = vpop.f32.mrb[0].mxu0
      %v1255 = vadd.f32 %v394, %v1254
      %v1256 = vpop.f32.mrb[0].mxu0
      %v1257 = vpop.f32.mrb[0].mxu0
      %v1258 = vadd.f32 %v394, %v1257
      %v1259 = vpop.f32.mrb[0].mxu0
      %1260 = vmatprep.mubr.bf16.mxu0 %v805
      %1261 = vmatmul.mubr.bf16.gmra.mrb[0].mxu0 %v804
      %v1262 = vpop.f32.mrb[0].mxu0
      %v1263 = vadd.f32 %v394, %v1262
      %v1264 = vpop.f32.mrb[0].mxu0
      %v1265 = vpop.f32.mrb[0].mxu0
      %v1266 = vadd.f32 %v394, %v1265
      %v1267 = vpop.f32.mrb[0].mxu0
      %1268 = vmatprep.mubr.bf16.mxu0 %v807
      %1269 = vmatmul.mubr.bf16.gmra.mrb[0].mxu0 %v806
      %v1270 = vpop.f32.mrb[0].mxu0
      %v1271 = vadd.f32 %v394, %v1270
      %v1272 = vpop.f32.mrb[0].mxu0
      %v1273 = vpop.f32.mrb[0].mxu0
      %v1274 = vadd.f32 %v394, %v1273
      %v1275 = vpop.f32.mrb[0].mxu0
      %1276 = vmatprep.mubr.bf16.mxu0 %v809
      %1277 = vmatmul.mubr.bf16.gmra.mrb[0].mxu0 %v808
      %v1278 = vpop.f32.mrb[0].mxu0
      %v1279 = vadd.f32 %v394, %v1278
      %v1280 = vpop.f32.mrb[0].mxu0
      %v1281 = vpop.f32.mrb[0].mxu0
      %v1282 = vadd.f32 %v394, %v1281
      %v1283 = vpop.f32.mrb[0].mxu0
      %1284 = vmatprep.mubr.bf16.mxu0 %v811
      %1285 = vmatmul.mubr.bf16.gmra.mrb[0].mxu0 %v810
      %v1286 = vpop.f32.mrb[0].mxu0
      %v1287 = vadd.f32 %v394, %v1286
      %v1288 = vpop.f32.mrb[0].mxu0
      %v1289 = vpop.f32.mrb[0].mxu0
      %v1290 = vadd.f32 %v394, %v1289
      %v1291 = vpop.f32.mrb[0].mxu0
      %1292 = vmatprep.mubr.bf16.mxu0 %v813
      %1293 = vmatmul.mubr.bf16.gmra.mrb[0].mxu0 %v812
      %v1294 = vpop.f32.mrb[0].mxu0
      %v1295 = vadd.f32 %v394, %v1294
      %v1296 = vpop.f32.mrb[0].mxu0
      %v1297 = vpop.f32.mrb[0].mxu0
      %v1298 = vadd.f32 %v394, %v1297
      %v1299 = vpop.f32.mrb[0].mxu0
      %1300 = vmatprep.mubr.bf16.mxu0 %v815
      %1301 = vmatmul.mubr.bf16.gmra.mrb[0].mxu0 %v814
      %v1302 = vpop.f32.mrb[0].mxu0
      %v1303 = vadd.f32 %v394, %v1302
      %v1304 = vpop.f32.mrb[0].mxu0
      %v1305 = vpop.f32.mrb[0].mxu0
      %v1306 = vadd.f32 %v394, %v1305
      %v1307 = vpop.f32.mrb[0].mxu0
      %1308 = vmatprep.mubr.bf16.mxu0 %v817
      %1309 = vmatmul.mubr.bf16.gmra.mrb[0].mxu0 %v816
      %v1310 = vpop.f32.mrb[0].mxu0
      %v1311 = vadd.f32 %v394, %v1310
      %v1312 = vpop.f32.mrb[0].mxu0
      %v1313 = vpop.f32.mrb[0].mxu0
      %v1314 = vadd.f32 %v394, %v1313
      %v1315 = vpop.f32.mrb[0].mxu0
      %1316 = vmatprep.mubr.bf16.mxu0 %v819
      %1317 = vmatmul.mubr.bf16.gmra.mrb[0].mxu0 %v818
      %v1318 = vpop.f32.mrb[0].mxu0
      %v1319 = vadd.f32 %v394, %v1318
      %v1320 = vpop.f32.mrb[0].mxu0
      %v1321 = vpop.f32.mrb[0].mxu0
      %v1322 = vadd.f32 %v394, %v1321
      %v1323 = vpop.f32.mrb[0].mxu0
      %1324 = vmatprep.mubr.bf16.mxu0 %v821
      %1325 = vmatmul.mubr.bf16.gmra.mrb[0].mxu0 %v820
      %v1326 = vpop.f32.mrb[0].mxu0
      %v1327 = vadd.f32 %v394, %v1326
      %v1328 = vpop.f32.mrb[0].mxu0
      %v1329 = vpop.f32.mrb[0].mxu0
      %v1330 = vadd.f32 %v394, %v1329
      %v1331 = vpop.f32.mrb[0].mxu0
      %1332 = vmatprep.mubr.bf16.mxu0 %v823
      %1333 = vmatmul.mubr.bf16.gmra.mrb[0].mxu0 %v822
      %v1334 = vpop.f32.mrb[0].mxu0
      %v1335 = vadd.f32 %v394, %v1334
      %v1336 = vpop.f32.mrb[0].mxu0
      %v1337 = vpop.f32.mrb[0].mxu0
      %v1338 = vadd.f32 %v394, %v1337
      %v1339 = vpop.f32.mrb[0].mxu0
      %1340 = vmatprep.mubr.bf16.mxu0 %v825
      %1341 = vmatmul.mubr.bf16.gmra.mrb[0].mxu0 %v824
      %v1342 = vpop.f32.mrb[0].mxu0
      %v1343 = vadd.f32 %v394, %v1342
      %v1344 = vpop.f32.mrb[0].mxu0
      %v1345 = vpop.f32.mrb[0].mxu0
      %v1346 = vadd.f32 %v394, %v1345
      %v1347 = vpop.f32.mrb[0].mxu0
      %1348 = vmatprep.mubr.bf16.mxu0 %v827
      %1349 = vmatmul.mubr.bf16.gmra.mrb[0].mxu0 %v826
      %v1350 = vpop.f32.mrb[0].mxu0
      %v1351 = vadd.f32 %v394, %v1350
      %v1352 = vpop.f32.mrb[0].mxu0
      %v1353 = vpop.f32.mrb[0].mxu0
      %v1354 = vadd.f32 %v394, %v1353
      %v1355 = vpop.f32.mrb[0].mxu0
      %1356 = vmatprep.mubr.bf16.mxu0 %v829
      %1357 = vmatmul.mubr.bf16.gmra.mrb[0].mxu0 %v828
      %v1358 = vpop.f32.mrb[0].mxu0
      %v1359 = vadd.f32 %v394, %v1358
      %v1360 = vpop.f32.mrb[0].mxu0
      %v1361 = vpop.f32.mrb[0].mxu0
      %v1362 = vadd.f32 %v394, %v1361
      %v1363 = vpop.f32.mrb[0].mxu0
      %1364 = vmatprep.mubr.bf16.mxu0 %v831
      %1365 = vmatmul.mubr.bf16.gmra.mrb[0].mxu0 %v830
      %v1366 = vpop.f32.mrb[0].mxu0
      %v1367 = vadd.f32 %v394, %v1366
      %v1368 = vpop.f32.mrb[0].mxu0
      %v1369 = vpop.f32.mrb[0].mxu0
      %v1370 = vadd.f32 %v394, %v1369
      %v1371 = vpop.f32.mrb[0].mxu0
      %1372 = vmatprep.mubr.bf16.mxu0 %v833
      %1373 = vmatmul.mubr.bf16.gmra.mrb[0].mxu0 %v832
      %v1374 = vpop.f32.mrb[0].mxu0
      %v1375 = vadd.f32 %v394, %v1374
      %v1376 = vpop.f32.mrb[0].mxu0
      %v1377 = vpop.f32.mrb[0].mxu0
      %v1378 = vadd.f32 %v394, %v1377
      %v1379 = vpop.f32.mrb[0].mxu0
      %1380 = vmatprep.mubr.bf16.mxu0 %v835
      %1381 = vmatmul.mubr.bf16.gmra.mrb[0].mxu0 %v834
      %v1382 = vpop.f32.mrb[0].mxu0
      %v1383 = vadd.f32 %v394, %v1382
      %v1384 = vpop.f32.mrb[0].mxu0
      %v1385 = vpop.f32.mrb[0].mxu0
      %v1386 = vadd.f32 %v394, %v1385
      %v1387 = vpop.f32.mrb[0].mxu0
      %1388 = vmatprep.mubr.bf16.mxu0 %v837
      %1389 = vmatmul.mubr.bf16.gmra.mrb[0].mxu0 %v836
      %v1390 = vpop.f32.mrb[0].mxu0
      %v1391 = vadd.f32 %v394, %v1390
      %v1392 = vpop.f32.mrb[0].mxu0
      %v1393 = vpop.f32.mrb[0].mxu0
      %v1394 = vadd.f32 %v394, %v1393
      %v1395 = vpop.f32.mrb[0].mxu0
      %1396 = vmatprep.mubr.bf16.mxu0 %v839
      %1397 = vmatmul.mubr.bf16.gmra.mrb[0].mxu0 %v838
      %v1398 = vpop.f32.mrb[0].mxu0
      %v1399 = vadd.f32 %v394, %v1398
      %v1400 = vpop.f32.mrb[0].mxu0
      %v1401 = vpop.f32.mrb[0].mxu0
      %v1402 = vadd.f32 %v394, %v1401
      %v1403 = vpop.f32.mrb[0].mxu0
      %1404 = vmatprep.mubr.bf16.mxu0 %v841
      %1405 = vmatmul.mubr.bf16.gmra.mrb[0].mxu0 %v840
      %v1406 = vpop.f32.mrb[0].mxu0
      %v1407 = vadd.f32 %v394, %v1406
      %v1408 = vpop.f32.mrb[0].mxu0
      %v1409 = vpop.f32.mrb[0].mxu0
      %v1410 = vadd.f32 %v394, %v1409
      %v1411 = vpop.f32.mrb[0].mxu0
      %1412 = vmatprep.mubr.bf16.mxu0 %v843
      %1413 = vmatmul.mubr.bf16.gmra.mrb[0].mxu0 %v842
      %v1414 = vpop.f32.mrb[0].mxu0
      %v1415 = vadd.f32 %v394, %v1414
      %v1416 = vpop.f32.mrb[0].mxu0
      %v1417 = vpop.f32.mrb[0].mxu0
      %v1418 = vadd.f32 %v394, %v1417
      %v1419 = vpop.f32.mrb[0].mxu0
      %1420 = vmatprep.mubr.bf16.mxu0 %v845
      %1421 = vmatmul.mubr.bf16.gmra.mrb[0].mxu0 %v844
      %v1422 = vpop.f32.mrb[0].mxu0
      %v1423 = vadd.f32 %v394, %v1422
      %v1424 = vpop.f32.mrb[0].mxu0
      %v1425 = vpop.f32.mrb[0].mxu0
      %v1426 = vadd.f32 %v394, %v1425
      %v1427 = vpop.f32.mrb[0].mxu0
      %1428 = vmatprep.mubr.bf16.mxu0 %v847
      %1429 = vmatmul.mubr.bf16.gmra.mrb[0].mxu0 %v846
      %v1430 = vpop.f32.mrb[0].mxu0
      %v1431 = vadd.f32 %v394, %v1430
      %v1432 = vpop.f32.mrb[0].mxu0
      %v1433 = vpop.f32.mrb[0].mxu0
      %v1434 = vadd.f32 %v394, %v1433
      %v1435 = vpop.f32.mrb[0].mxu0
      %1436 = vmatprep.mubr.bf16.mxu0 %v849
      %1437 = vmatmul.mubr.bf16.gmra.mrb[0].mxu0 %v848
      %v1438 = vpop.f32.mrb[0].mxu0
      %v1439 = vadd.f32 %v394, %v1438
      %v1440 = vpop.f32.mrb[0].mxu0
      %v1441 = vpop.f32.mrb[0].mxu0
      %v1442 = vadd.f32 %v394, %v1441
      %v1443 = vpop.f32.mrb[0].mxu0
      %1444 = vmatprep.mubr.bf16.mxu0 %v851
      %1445 = vmatmul.mubr.bf16.gmra.mrb[0].mxu0 %v850
      %v1446 = vpop.f32.mrb[0].mxu0
      %v1447 = vadd.f32 %v394, %v1446
      %v1448 = vpop.f32.mrb[0].mxu0
      %v1449 = vpop.f32.mrb[0].mxu0
      %v1450 = vadd.f32 %v394, %v1449
      %v1451 = vpop.f32.mrb[0].mxu0
      %1452 = vmatprep.mubr.bf16.mxu0 %v853
      %1453 = vmatmul.mubr.bf16.gmra.mrb[0].mxu0 %v852
      %v1454 = vpop.f32.mrb[0].mxu0
      %v1455 = vadd.f32 %v394, %v1454
      %v1456 = vpop.f32.mrb[0].mxu0
      %v1457 = vpop.f32.mrb[0].mxu0
      %v1458 = vadd.f32 %v394, %v1457
      %v1459 = vpop.f32.mrb[0].mxu0
      %1460 = vmatprep.mubr.bf16.mxu0 %v855
      %1461 = vmatmul.mubr.bf16.gmra.mrb[0].mxu0 %v854
      %v1462 = vpop.f32.mrb[0].mxu0
      %v1463 = vadd.f32 %v394, %v1462
      %v1464 = vpop.f32.mrb[0].mxu0
      %v1465 = vpop.f32.mrb[0].mxu0
      %v1466 = vadd.f32 %v394, %v1465
      %v1467 = vpop.f32.mrb[0].mxu0
      %1468 = vmatprep.mubr.bf16.mxu0 %v857
      %1469 = vmatmul.mubr.bf16.gmra.mrb[0].mxu0 %v856
      %v1470 = vpop.f32.mrb[0].mxu0
      %v1471 = vadd.f32 %v394, %v1470
      %v1472 = vpop.f32.mrb[0].mxu0
      %v1473 = vpop.f32.mrb[0].mxu0
      %v1474 = vadd.f32 %v394, %v1473
      %v1475 = vpop.f32.mrb[0].mxu0
      %1476 = vmatprep.mubr.bf16.mxu0 %v859
      %1477 = vmatmul.mubr.bf16.gmra.mrb[0].mxu0 %v858
      %v1478 = vpop.f32.mrb[0].mxu0
      %v1479 = vadd.f32 %v394, %v1478
      %v1480 = vpop.f32.mrb[0].mxu0
      %v1481 = vpop.f32.mrb[0].mxu0
      %v1482 = vadd.f32 %v394, %v1481
      %v1483 = vpop.f32.mrb[0].mxu0
      %1484 = vmatprep.mubr.bf16.mxu0 %v861
      %1485 = vmatmul.mubr.bf16.gmra.mrb[0].mxu0 %v860
      %v1486 = vpop.f32.mrb[0].mxu0
      %v1487 = vadd.f32 %v394, %v1486
      %v1488 = vpop.f32.mrb[0].mxu0
      %v1489 = vpop.f32.mrb[0].mxu0
      %v1490 = vadd.f32 %v394, %v1489
      %v1491 = vpop.f32.mrb[0].mxu0
      %1492 = vmatprep.mubr.bf16.mxu0 %v863
      %1493 = vmatmul.mubr.bf16.gmra.mrb[0].mxu0 %v862
      %v1494 = vpop.f32.mrb[0].mxu0
      %v1495 = vadd.f32 %v394, %v1494
      %v1496 = vpop.f32.mrb[0].mxu0
      %v1497 = vpop.f32.mrb[0].mxu0
      %v1498 = vadd.f32 %v394, %v1497
      %v1499 = vpop.f32.mrb[0].mxu0
      %1500 = vmatprep.mubr.bf16.mxu0 %v865
      %1501 = vmatmul.mubr.bf16.gmra.mrb[0].mxu0 %v864
      %v1502 = vpop.f32.mrb[0].mxu0
      %v1503 = vadd.f32 %v394, %v1502
      %v1504 = vpop.f32.mrb[0].mxu0
      %v1505 = vpop.f32.mrb[0].mxu0
      %v1506 = vadd.f32 %v394, %v1505
      %v1507 = vpop.f32.mrb[0].mxu0
      %1508 = vmatprep.mubr.bf16.mxu0 %v867
      %1509 = vmatmul.mubr.bf16.gmra.mrb[0].mxu0 %v866
      %v1510 = vpop.f32.mrb[0].mxu0
      %v1511 = vadd.f32 %v394, %v1510
      %v1512 = vpop.f32.mrb[0].mxu0
      %v1513 = vpop.f32.mrb[0].mxu0
      %v1514 = vadd.f32 %v394, %v1513
      %v1515 = vpop.f32.mrb[0].mxu0
      %1516 = vmatprep.mubr.bf16.mxu0 %v869
      %1517 = vmatmul.mubr.bf16.gmra.mrb[0].mxu0 %v868
      %v1518 = vpop.f32.mrb[0].mxu0
      %v1519 = vadd.f32 %v394, %v1518
      %v1520 = vpop.f32.mrb[0].mxu0
      %v1521 = vpop.f32.mrb[0].mxu0
      %v1522 = vadd.f32 %v394, %v1521
      %v1523 = vpop.f32.mrb[0].mxu0
      %1524 = vmatprep.mubr.bf16.mxu0 %v871
      %1525 = vmatmul.mubr.bf16.gmra.mrb[0].mxu0 %v870
      %v1526 = vpop.f32.mrb[0].mxu0
      %v1527 = vadd.f32 %v394, %v1526
      %v1528 = vpop.f32.mrb[0].mxu0
      %v1529 = vpop.f32.mrb[0].mxu0
      %v1530 = vadd.f32 %v394, %v1529
      %v1531 = vpop.f32.mrb[0].mxu0
      %1532 = vmatprep.mubr.bf16.mxu0 %v873
      %1533 = vmatmul.mubr.bf16.gmra.mrb[0].mxu0 %v872
      %v1534 = vpop.f32.mrb[0].mxu0
      %v1535 = vadd.f32 %v394, %v1534
      %v1536 = vpop.f32.mrb[0].mxu0
      %v1537 = vpop.f32.mrb[0].mxu0
      %v1538 = vadd.f32 %v394, %v1537
      %v1539 = vpop.f32.mrb[0].mxu0
      %1540 = vmatprep.mubr.bf16.mxu0 %v875
      %1541 = vmatmul.mubr.bf16.gmra.mrb[0].mxu0 %v874
      %v1542 = vpop.f32.mrb[0].mxu0
      %v1543 = vadd.f32 %v394, %v1542
      %v1544 = vpop.f32.mrb[0].mxu0
      %v1545 = vpop.f32.mrb[0].mxu0
      %v1546 = vadd.f32 %v394, %v1545
      %v1547 = vpop.f32.mrb[0].mxu0
      %1548 = vmatprep.mubr.bf16.mxu0 %v877
      %1549 = vmatmul.mubr.bf16.gmra.mrb[0].mxu0 %v876
      %v1550 = vpop.f32.mrb[0].mxu0
      %v1551 = vadd.f32 %v394, %v1550
      %v1552 = vpop.f32.mrb[0].mxu0
      %v1553 = vpop.f32.mrb[0].mxu0
      %v1554 = vadd.f32 %v394, %v1553
      %v1555 = vpop.f32.mrb[0].mxu0
      %1556 = vmatprep.mubr.bf16.mxu0 %v879
      %1557 = vmatmul.mubr.bf16.gmra.mrb[0].mxu0 %v878
      %v1558 = vpop.f32.mrb[0].mxu0
      %v1559 = vadd.f32 %v394, %v1558
      %v1560 = vpop.f32.mrb[0].mxu0
      %v1561 = vpop.f32.mrb[0].mxu0
      %v1562 = vadd.f32 %v394, %v1561
      %v1563 = vpop.f32.mrb[0].mxu0
      %1564 = vmatprep.mubr.bf16.mxu0 %v881
      %1565 = vmatmul.mubr.bf16.gmra.mrb[0].mxu0 %v880
      %v1566 = vpop.f32.mrb[0].mxu0
      %v1567 = vadd.f32 %v394, %v1566
      %v1568 = vpop.f32.mrb[0].mxu0
      %v1569 = vpop.f32.mrb[0].mxu0
      %v1570 = vadd.f32 %v394, %v1569
      %v1571 = vpop.f32.mrb[0].mxu0
      %1572 = vmatprep.mubr.bf16.mxu0 %v883
      %1573 = vmatmul.mubr.bf16.gmra.mrb[0].mxu0 %v882
      %v1574 = vpop.f32.mrb[0].mxu0
      %v1575 = vadd.f32 %v394, %v1574
      %v1576 = vpop.f32.mrb[0].mxu0
      %v1577 = vpop.f32.mrb[0].mxu0
      %v1578 = vadd.f32 %v394, %v1577
      %v1579 = vpop.f32.mrb[0].mxu0
      %1580 = vmatprep.mubr.bf16.mxu0 %v885
      %1581 = vmatmul.mubr.bf16.gmra.mrb[0].mxu0 %v884
      %v1582 = vpop.f32.mrb[0].mxu0
      %v1583 = vadd.f32 %v394, %v1582
      %v1584 = vpop.f32.mrb[0].mxu0
      %v1585 = vpop.f32.mrb[0].mxu0
      %v1586 = vadd.f32 %v394, %v1585
      %v1587 = vpop.f32.mrb[0].mxu0
      %1588 = vmatprep.mubr.bf16.mxu0 %v887
      %1589 = vmatmul.mubr.bf16.gmra.mrb[0].mxu0 %v886
      %v1590 = vpop.f32.mrb[0].mxu0
      %v1591 = vadd.f32 %v394, %v1590
      %v1592 = vpop.f32.mrb[0].mxu0
      %v1593 = vpop.f32.mrb[0].mxu0
      %v1594 = vadd.f32 %v394, %v1593
      %v1595 = vpop.f32.mrb[0].mxu0
      %1596 = vmatprep.mubr.bf16.mxu0 %v889
      %1597 = vmatmul.mubr.bf16.gmra.mrb[0].mxu0 %v888
      %v1598 = vpop.f32.mrb[0].mxu0
      %v1599 = vadd.f32 %v394, %v1598
      %v1600 = vpop.f32.mrb[0].mxu0
      %v1601 = vpop.f32.mrb[0].mxu0
      %v1602 = vadd.f32 %v394, %v1601
      %v1603 = vpop.f32.mrb[0].mxu0
      %1604 = vmatprep.mubr.bf16.mxu0 %v891
      %1605 = vmatmul.mubr.bf16.gmra.mrb[0].mxu0 %v890
      %v1606 = vpop.f32.mrb[0].mxu0
      %v1607 = vadd.f32 %v394, %v1606
      %v1608 = vpop.f32.mrb[0].mxu0
      %v1609 = vpop.f32.mrb[0].mxu0
      %v1610 = vadd.f32 %v394, %v1609
      %v1611 = vpop.f32.mrb[0].mxu0
      %1612 = vmatprep.mubr.bf16.mxu0 %v893
      %1613 = vmatmul.mubr.bf16.gmra.mrb[0].mxu0 %v892
      %v1614 = vpop.f32.mrb[0].mxu0
      %v1615 = vadd.f32 %v394, %v1614
      %v1616 = vpop.f32.mrb[0].mxu0
      %v1617 = vpop.f32.mrb[0].mxu0
      %v1618 = vadd.f32 %v394, %v1617
      %v1619 = vpop.f32.mrb[0].mxu0
      %1620 = vmatprep.mubr.bf16.mxu0 %v895
      %1621 = vmatmul.mubr.bf16.gmra.mrb[0].mxu0 %v894
      %v1622 = vpop.f32.mrb[0].mxu0
      %v1623 = vadd.f32 %v394, %v1622
      %v1624 = vpop.f32.mrb[0].mxu0
      %v1625 = vpop.f32.mrb[0].mxu0
      %v1626 = vadd.f32 %v394, %v1625
      %v1627 = vpop.f32.mrb[0].mxu0
      %1628 = vmatprep.mubr.bf16.mxu0 %v897
      %1629 = vmatmul.mubr.bf16.gmra.mrb[0].mxu0 %v896
      %v1630 = vpop.f32.mrb[0].mxu0
      %v1631 = vadd.f32 %v394, %v1630
      %v1632 = vpop.f32.mrb[0].mxu0
      %v1633 = vpop.f32.mrb[0].mxu0
      %v1634 = vadd.f32 %v394, %v1633
      %v1635 = vpop.f32.mrb[0].mxu0
      %1636 = vmatprep.mubr.bf16.mxu0 %v899
      %1637 = vmatmul.mubr.bf16.gmra.mrb[0].mxu0 %v898
      %v1638 = vpop.f32.mrb[0].mxu0
      %v1639 = vadd.f32 %v394, %v1638
      %v1640 = vpop.f32.mrb[0].mxu0
      %v1641 = vpop.f32.mrb[0].mxu0
      %v1642 = vadd.f32 %v394, %v1641
      %v1643 = vpop.f32.mrb[0].mxu0
      %1644 = vmatprep.mubr.bf16.mxu0 %v901
      %1645 = vmatmul.mubr.bf16.gmra.mrb[0].mxu0 %v900
      %v1646 = vpop.f32.mrb[0].mxu0
      %v1647 = vadd.f32 %v394, %v1646
      %v1648 = vpop.f32.mrb[0].mxu0
      %v1649 = vpop.f32.mrb[0].mxu0
      %v1650 = vadd.f32 %v394, %v1649
      %v1651 = vpop.f32.mrb[0].mxu0
      %1652 = vmatprep.mubr.bf16.mxu0 %v903
      %1653 = vmatmul.mubr.bf16.gmra.mrb[0].mxu0 %v902
      %v1654 = vpop.f32.mrb[0].mxu0
      %v1655 = vadd.f32 %v394, %v1654
      %v1656 = vpop.f32.mrb[0].mxu0
      %v1657 = vpop.f32.mrb[0].mxu0
      %v1658 = vadd.f32 %v394, %v1657
      %v1659 = vpop.f32.mrb[0].mxu0
      %1660 = vmatprep.mubr.bf16.mxu0 %v905
      %1661 = vmatmul.mubr.bf16.gmra.mrb[0].mxu0 %v904
      %v1662 = vpop.f32.mrb[0].mxu0
      %v1663 = vadd.f32 %v394, %v1662
      %v1664 = vpop.f32.mrb[0].mxu0
      %v1665 = vpop.f32.mrb[0].mxu0
      %v1666 = vadd.f32 %v394, %v1665
      %v1667 = vpop.f32.mrb[0].mxu0
      %1668 = vmatprep.mubr.bf16.mxu0 %v907
      %1669 = vmatmul.mubr.bf16.gmra.mrb[0].mxu0 %v906
      %v1670 = vpop.f32.mrb[0].mxu0
      %v1671 = vadd.f32 %v394, %v1670
      %v1672 = vpop.f32.mrb[0].mxu0
      %v1673 = vpop.f32.mrb[0].mxu0
      %v1674 = vadd.f32 %v394, %v1673
      %v1675 = vpop.f32.mrb[0].mxu0
      %1676 = vdwg.mxu0
      %v1677 = vmax.f32 %v1167, 0.0
      %v1678 = vmax.f32 %v1170, 0.0
      %v1679 = vmax.f32 %v1175, 0.0
      %v1680 = vmax.f32 %v1178, 0.0
      %v1681 = vmax.f32 %v1183, 0.0
      %v1682 = vmax.f32 %v1186, 0.0
      %v1683 = vmax.f32 %v1191, 0.0
      %v1684 = vmax.f32 %v1194, 0.0
      %v1685 = vmax.f32 %v1199, 0.0
      %v1686 = vmax.f32 %v1202, 0.0
      %v1687 = vmax.f32 %v1207, 0.0
      %v1688 = vmax.f32 %v1210, 0.0
      %v1689 = vmax.f32 %v1215, 0.0
      %v1690 = vmax.f32 %v1218, 0.0
      %v1691 = vmax.f32 %v1223, 0.0
      %v1692 = vmax.f32 %v1226, 0.0
      %v1693 = vmax.f32 %v1231, 0.0
      %v1694 = vmax.f32 %v1234, 0.0
      %v1695 = vmax.f32 %v1239, 0.0
      %v1696 = vmax.f32 %v1242, 0.0
      %v1697 = vmax.f32 %v1247, 0.0
      %v1698 = vmax.f32 %v1250, 0.0
      %v1699 = vmax.f32 %v1255, 0.0
      %v1700 = vmax.f32 %v1258, 0.0
      %v1701 = vmax.f32 %v1263, 0.0
      %v1702 = vmax.f32 %v1266, 0.0
      %v1703 = vmax.f32 %v1271, 0.0
      %v1704 = vmax.f32 %v1274, 0.0
      %v1705 = vmax.f32 %v1279, 0.0
      %v1706 = vmax.f32 %v1282, 0.0
      %v1707 = vmax.f32 %v1287, 0.0
      %v1708 = vmax.f32 %v1290, 0.0
      %v1709 = vmax.f32 %v1295, 0.0
      %v1710 = vmax.f32 %v1298, 0.0
      %v1711 = vmax.f32 %v1303, 0.0
      %v1712 = vmax.f32 %v1306, 0.0
      %v1713 = vmax.f32 %v1311, 0.0
      %v1714 = vmax.f32 %v1314, 0.0
      %v1715 = vmax.f32 %v1319, 0.0
      %v1716 = vmax.f32 %v1322, 0.0
      %v1717 = vmax.f32 %v1327, 0.0
      %v1718 = vmax.f32 %v1330, 0.0
      %v1719 = vmax.f32 %v1335, 0.0
      %v1720 = vmax.f32 %v1338, 0.0
      %v1721 = vmax.f32 %v1343, 0.0
      %v1722 = vmax.f32 %v1346, 0.0
      %v1723 = vmax.f32 %v1351, 0.0
      %v1724 = vmax.f32 %v1354, 0.0
      %v1725 = vmax.f32 %v1359, 0.0
      %v1726 = vmax.f32 %v1362, 0.0
      %v1727 = vmax.f32 %v1367, 0.0
      %v1728 = vmax.f32 %v1370, 0.0
      %v1729 = vmax.f32 %v1375, 0.0
      %v1730 = vmax.f32 %v1378, 0.0
      %v1731 = vmax.f32 %v1383, 0.0
      %v1732 = vmax.f32 %v1386, 0.0
      %v1733 = vmax.f32 %v1391, 0.0
      %v1734 = vmax.f32 %v1394, 0.0
      %v1735 = vmax.f32 %v1399, 0.0
      %v1736 = vmax.f32 %v1402, 0.0
      %v1737 = vmax.f32 %v1407, 0.0
      %v1738 = vmax.f32 %v1410, 0.0
      %v1739 = vmax.f32 %v1415, 0.0
      %v1740 = vmax.f32 %v1418, 0.0
      %v1741 = vmax.f32 %v1423, 0.0
      %v1742 = vmax.f32 %v1426, 0.0
      %v1743 = vmax.f32 %v1431, 0.0
      %v1744 = vmax.f32 %v1434, 0.0
      %v1745 = vmax.f32 %v1439, 0.0
      %v1746 = vmax.f32 %v1442, 0.0
      %v1747 = vmax.f32 %v1447, 0.0
      %v1748 = vmax.f32 %v1450, 0.0
      %v1749 = vmax.f32 %v1455, 0.0
      %v1750 = vmax.f32 %v1458, 0.0
      %v1751 = vmax.f32 %v1463, 0.0
      %v1752 = vmax.f32 %v1466, 0.0
      %v1753 = vmax.f32 %v1471, 0.0
      %v1754 = vmax.f32 %v1474, 0.0
      %v1755 = vmax.f32 %v1479, 0.0
      %v1756 = vmax.f32 %v1482, 0.0
      %v1757 = vmax.f32 %v1487, 0.0
      %v1758 = vmax.f32 %v1490, 0.0
      %v1759 = vmax.f32 %v1495, 0.0
      %v1760 = vmax.f32 %v1498, 0.0
      %v1761 = vmax.f32 %v1503, 0.0
      %v1762 = vmax.f32 %v1506, 0.0
      %v1763 = vmax.f32 %v1511, 0.0
      %v1764 = vmax.f32 %v1514, 0.0
      %v1765 = vmax.f32 %v1519, 0.0
      %v1766 = vmax.f32 %v1522, 0.0
      %v1767 = vmax.f32 %v1527, 0.0
      %v1768 = vmax.f32 %v1530, 0.0
      %v1769 = vmax.f32 %v1535, 0.0
      %v1770 = vmax.f32 %v1538, 0.0
      %v1771 = vmax.f32 %v1543, 0.0
      %v1772 = vmax.f32 %v1546, 0.0
      %v1773 = vmax.f32 %v1551, 0.0
      %v1774 = vmax.f32 %v1554, 0.0
      %v1775 = vmax.f32 %v1559, 0.0
      %v1776 = vmax.f32 %v1562, 0.0
      %v1777 = vmax.f32 %v1567, 0.0
      %v1778 = vmax.f32 %v1570, 0.0
      %v1779 = vmax.f32 %v1575, 0.0
      %v1780 = vmax.f32 %v1578, 0.0
      %v1781 = vmax.f32 %v1583, 0.0
      %v1782 = vmax.f32 %v1586, 0.0
      %v1783 = vmax.f32 %v1591, 0.0
      %v1784 = vmax.f32 %v1594, 0.0
      %v1785 = vmax.f32 %v1599, 0.0
      %v1786 = vmax.f32 %v1602, 0.0
      %v1787 = vmax.f32 %v1607, 0.0
      %v1788 = vmax.f32 %v1610, 0.0
      %v1789 = vmax.f32 %v1615, 0.0
      %v1790 = vmax.f32 %v1618, 0.0
      %v1791 = vmax.f32 %v1623, 0.0
      %v1792 = vmax.f32 %v1626, 0.0
      %v1793 = vmax.f32 %v1631, 0.0
      %v1794 = vmax.f32 %v1634, 0.0
      %v1795 = vmax.f32 %v1639, 0.0
      %v1796 = vmax.f32 %v1642, 0.0
      %v1797 = vmax.f32 %v1647, 0.0
      %v1798 = vmax.f32 %v1650, 0.0
      %v1799 = vmax.f32 %v1655, 0.0
      %v1800 = vmax.f32 %v1658, 0.0
      %v1801 = vmax.f32 %v1663, 0.0
      %v1802 = vmax.f32 %v1666, 0.0
      %v1803 = vmax.f32 %v1671, 0.0
      %v1804 = vmax.f32 %v1674, 0.0
      %v1805 = vpack.c.bf16 %v1678, %v1677
      %v1806 = vpack.c.bf16 %v1680, %v1679
      %v1807 = vpack.c.bf16 %v1682, %v1681
      %v1808 = vpack.c.bf16 %v1684, %v1683
      %v1809 = vpack.c.bf16 %v1686, %v1685
      %v1810 = vpack.c.bf16 %v1688, %v1687
      %v1811 = vpack.c.bf16 %v1690, %v1689
      %v1812 = vpack.c.bf16 %v1692, %v1691
      %v1813 = vpack.c.bf16 %v1694, %v1693
      %v1814 = vpack.c.bf16 %v1696, %v1695
      %v1815 = vpack.c.bf16 %v1698, %v1697
      %v1816 = vpack.c.bf16 %v1700, %v1699
      %v1817 = vpack.c.bf16 %v1702, %v1701
      %v1818 = vpack.c.bf16 %v1704, %v1703
      %v1819 = vpack.c.bf16 %v1706, %v1705
      %v1820 = vpack.c.bf16 %v1708, %v1707
      %v1821 = vpack.c.bf16 %v1710, %v1709
      %v1822 = vpack.c.bf16 %v1712, %v1711
      %v1823 = vpack.c.bf16 %v1714, %v1713
      %v1824 = vpack.c.bf16 %v1716, %v1715
      %v1825 = vpack.c.bf16 %v1718, %v1717
      %v1826 = vpack.c.bf16 %v1720, %v1719
      %v1827 = vpack.c.bf16 %v1722, %v1721
      %v1828 = vpack.c.bf16 %v1724, %v1723
      %v1829 = vpack.c.bf16 %v1726, %v1725
      %v1830 = vpack.c.bf16 %v1728, %v1727
      %v1831 = vpack.c.bf16 %v1730, %v1729
      %v1832 = vpack.c.bf16 %v1732, %v1731
      %v1833 = vpack.c.bf16 %v1734, %v1733
      %v1834 = vpack.c.bf16 %v1736, %v1735
      %v1835 = vpack.c.bf16 %v1738, %v1737
      %v1836 = vpack.c.bf16 %v1740, %v1739
      %v1837 = vpack.c.bf16 %v1742, %v1741
      %v1838 = vpack.c.bf16 %v1744, %v1743
      %v1839 = vpack.c.bf16 %v1746, %v1745
      %v1840 = vpack.c.bf16 %v1748, %v1747
      %v1841 = vpack.c.bf16 %v1750, %v1749
      %v1842 = vpack.c.bf16 %v1752, %v1751
      %v1843 = vpack.c.bf16 %v1754, %v1753
      %v1844 = vpack.c.bf16 %v1756, %v1755
      %v1845 = vpack.c.bf16 %v1758, %v1757
      %v1846 = vpack.c.bf16 %v1760, %v1759
      %v1847 = vpack.c.bf16 %v1762, %v1761
      %v1848 = vpack.c.bf16 %v1764, %v1763
      %v1849 = vpack.c.bf16 %v1766, %v1765
      %v1850 = vpack.c.bf16 %v1768, %v1767
      %v1851 = vpack.c.bf16 %v1770, %v1769
      %v1852 = vpack.c.bf16 %v1772, %v1771
      %v1853 = vpack.c.bf16 %v1774, %v1773
      %v1854 = vpack.c.bf16 %v1776, %v1775
      %v1855 = vpack.c.bf16 %v1778, %v1777
      %v1856 = vpack.c.bf16 %v1780, %v1779
      %v1857 = vpack.c.bf16 %v1782, %v1781
      %v1858 = vpack.c.bf16 %v1784, %v1783
      %v1859 = vpack.c.bf16 %v1786, %v1785
      %v1860 = vpack.c.bf16 %v1788, %v1787
      %v1861 = vpack.c.bf16 %v1790, %v1789
      %v1862 = vpack.c.bf16 %v1792, %v1791
      %v1863 = vpack.c.bf16 %v1794, %v1793
      %v1864 = vpack.c.bf16 %v1796, %v1795
      %v1865 = vpack.c.bf16 %v1798, %v1797
      %v1866 = vpack.c.bf16 %v1800, %v1799
      %v1867 = vpack.c.bf16 %v1802, %v1801
      %v1868 = vpack.c.bf16 %v1804, %v1803
      %v1933 = vunpack.c.l.b16 %v1805
      %v1934 = vunpack.c.h.b16 %v1805
      %v1935 = vunpack.c.l.b16 %v1806
      %v1936 = vunpack.c.h.b16 %v1806
      %v1937 = vunpack.c.l.b16 %v1807
      %v1938 = vunpack.c.h.b16 %v1807
      %v1939 = vunpack.c.l.b16 %v1808
      %v1940 = vunpack.c.h.b16 %v1808
      %v1941 = vunpack.c.l.b16 %v1809
      %v1942 = vunpack.c.h.b16 %v1809
      %v1943 = vunpack.c.l.b16 %v1810
      %v1944 = vunpack.c.h.b16 %v1810
      %v1945 = vunpack.c.l.b16 %v1811
      %v1946 = vunpack.c.h.b16 %v1811
      %v1947 = vunpack.c.l.b16 %v1812
      %v1948 = vunpack.c.h.b16 %v1812
      %v1949 = vunpack.c.l.b16 %v1813
      %v1950 = vunpack.c.h.b16 %v1813
      %v1951 = vunpack.c.l.b16 %v1814
      %v1952 = vunpack.c.h.b16 %v1814
      %v1953 = vunpack.c.l.b16 %v1815
      %v1954 = vunpack.c.h.b16 %v1815
      %v1955 = vunpack.c.l.b16 %v1816
      %v1956 = vunpack.c.h.b16 %v1816
      %v1957 = vunpack.c.l.b16 %v1817
      %v1958 = vunpack.c.h.b16 %v1817
      %v1959 = vunpack.c.l.b16 %v1818
      %v1960 = vunpack.c.h.b16 %v1818
      %v1961 = vunpack.c.l.b16 %v1819
      %v1962 = vunpack.c.h.b16 %v1819
      %v1963 = vunpack.c.l.b16 %v1820
      %v1964 = vunpack.c.h.b16 %v1820
      %v1965 = vunpack.c.l.b16 %v1821
      %v1966 = vunpack.c.h.b16 %v1821
      %v1967 = vunpack.c.l.b16 %v1822
      %v1968 = vunpack.c.h.b16 %v1822
      %v1969 = vunpack.c.l.b16 %v1823
      %v1970 = vunpack.c.h.b16 %v1823
      %v1971 = vunpack.c.l.b16 %v1824
      %v1972 = vunpack.c.h.b16 %v1824
      %v1973 = vunpack.c.l.b16 %v1825
      %v1974 = vunpack.c.h.b16 %v1825
      %v1975 = vunpack.c.l.b16 %v1826
      %v1976 = vunpack.c.h.b16 %v1826
      %v1977 = vunpack.c.l.b16 %v1827
      %v1978 = vunpack.c.h.b16 %v1827
      %v1979 = vunpack.c.l.b16 %v1828
      %v1980 = vunpack.c.h.b16 %v1828
      %v1981 = vunpack.c.l.b16 %v1829
      %v1982 = vunpack.c.h.b16 %v1829
      %v1983 = vunpack.c.l.b16 %v1830
      %v1984 = vunpack.c.h.b16 %v1830
      %v1985 = vunpack.c.l.b16 %v1831
      %v1986 = vunpack.c.h.b16 %v1831
      %v1987 = vunpack.c.l.b16 %v1832
      %v1988 = vunpack.c.h.b16 %v1832
      %v1989 = vunpack.c.l.b16 %v1833
      %v1990 = vunpack.c.h.b16 %v1833
      %v1991 = vunpack.c.l.b16 %v1834
      %v1992 = vunpack.c.h.b16 %v1834
      %v1993 = vunpack.c.l.b16 %v1835
      %v1994 = vunpack.c.h.b16 %v1835
      %v1995 = vunpack.c.l.b16 %v1836
      %v1996 = vunpack.c.h.b16 %v1836
      %v1997 = vunpack.c.l.b16 %v1837
      %v1998 = vunpack.c.h.b16 %v1837
      %v1999 = vunpack.c.l.b16 %v1838
      %v2000 = vunpack.c.h.b16 %v1838
      %v2001 = vunpack.c.l.b16 %v1839
      %v2002 = vunpack.c.h.b16 %v1839
      %v2003 = vunpack.c.l.b16 %v1840
      %v2004 = vunpack.c.h.b16 %v1840
      %v2005 = vunpack.c.l.b16 %v1841
      %v2006 = vunpack.c.h.b16 %v1841
      %v2007 = vunpack.c.l.b16 %v1842
      %v2008 = vunpack.c.h.b16 %v1842
      %v2009 = vunpack.c.l.b16 %v1843
      %v2010 = vunpack.c.h.b16 %v1843
      %v2011 = vunpack.c.l.b16 %v1844
      %v2012 = vunpack.c.h.b16 %v1844
      %v2013 = vunpack.c.l.b16 %v1845
      %v2014 = vunpack.c.h.b16 %v1845
      %v2015 = vunpack.c.l.b16 %v1846
      %v2016 = vunpack.c.h.b16 %v1846
      %v2017 = vunpack.c.l.b16 %v1847
      %v2018 = vunpack.c.h.b16 %v1847
      %v2019 = vunpack.c.l.b16 %v1848
      %v2020 = vunpack.c.h.b16 %v1848
      %v2021 = vunpack.c.l.b16 %v1849
      %v2022 = vunpack.c.h.b16 %v1849
      %v2023 = vunpack.c.l.b16 %v1850
      %v2024 = vunpack.c.h.b16 %v1850
      %v2025 = vunpack.c.l.b16 %v1851
      %v2026 = vunpack.c.h.b16 %v1851
      %v2027 = vunpack.c.l.b16 %v1852
      %v2028 = vunpack.c.h.b16 %v1852
      %v2029 = vunpack.c.l.b16 %v1853
      %v2030 = vunpack.c.h.b16 %v1853
      %v2031 = vunpack.c.l.b16 %v1854
      %v2032 = vunpack.c.h.b16 %v1854
      %v2033 = vunpack.c.l.b16 %v1855
      %v2034 = vunpack.c.h.b16 %v1855
      %v2035 = vunpack.c.l.b16 %v1856
      %v2036 = vunpack.c.h.b16 %v1856
      %v2037 = vunpack.c.l.b16 %v1857
      %v2038 = vunpack.c.h.b16 %v1857
      %v2039 = vunpack.c.l.b16 %v1858
      %v2040 = vunpack.c.h.b16 %v1858
      %v2041 = vunpack.c.l.b16 %v1859
      %v2042 = vunpack.c.h.b16 %v1859
      %v2043 = vunpack.c.l.b16 %v1860
      %v2044 = vunpack.c.h.b16 %v1860
      %v2045 = vunpack.c.l.b16 %v1861
      %v2046 = vunpack.c.h.b16 %v1861
      %v2047 = vunpack.c.l.b16 %v1862
      %v2048 = vunpack.c.h.b16 %v1862
      %v2049 = vunpack.c.l.b16 %v1863
      %v2050 = vunpack.c.h.b16 %v1863
      %v2051 = vunpack.c.l.b16 %v1864
      %v2052 = vunpack.c.h.b16 %v1864
      %v2053 = vunpack.c.l.b16 %v1865
      %v2054 = vunpack.c.h.b16 %v1865
      %v2055 = vunpack.c.l.b16 %v1866
      %v2056 = vunpack.c.h.b16 %v1866
      %v2057 = vunpack.c.l.b16 %v1867
      %v2058 = vunpack.c.h.b16 %v1867
      %v2059 = vunpack.c.l.b16 %v1868
      %v2060 = vunpack.c.h.b16 %v1868
      %v2061 = vpack.c.b16 %v1933, %v1933
      %v2062 = vpack.c.b16 %v1934, %v1934
      %v2063 = vpack.c.b16 %v1935, %v1935
      %v2064 = vpack.c.b16 %v1936, %v1936
      %v2065 = vpack.c.b16 %v1937, %v1937
      %v2066 = vpack.c.b16 %v1938, %v1938
      %v2067 = vpack.c.b16 %v1939, %v1939
      %v2068 = vpack.c.b16 %v1940, %v1940
      %v2069 = vpack.c.b16 %v1941, %v1941
      %v2070 = vpack.c.b16 %v1942, %v1942
      %v2071 = vpack.c.b16 %v1943, %v1943
      %v2072 = vpack.c.b16 %v1944, %v1944
      %v2073 = vpack.c.b16 %v1945, %v1945
      %v2074 = vpack.c.b16 %v1946, %v1946
      %v2075 = vpack.c.b16 %v1947, %v1947
      %v2076 = vpack.c.b16 %v1948, %v1948
      %v2077 = vpack.c.b16 %v1949, %v1949
      %v2078 = vpack.c.b16 %v1950, %v1950
      %v2079 = vpack.c.b16 %v1951, %v1951
      %v2080 = vpack.c.b16 %v1952, %v1952
      %v2081 = vpack.c.b16 %v1953, %v1953
      %v2082 = vpack.c.b16 %v1954, %v1954
      %v2083 = vpack.c.b16 %v1955, %v1955
      %v2084 = vpack.c.b16 %v1956, %v1956
      %v2085 = vpack.c.b16 %v1957, %v1957
      %v2086 = vpack.c.b16 %v1958, %v1958
      %v2087 = vpack.c.b16 %v1959, %v1959
      %v2088 = vpack.c.b16 %v1960, %v1960
      %v2089 = vpack.c.b16 %v1961, %v1961
      %v2090 = vpack.c.b16 %v1962, %v1962
      %v2091 = vpack.c.b16 %v1963, %v1963
      %v2092 = vpack.c.b16 %v1964, %v1964
      %v2093 = vpack.c.b16 %v1965, %v1965
      %v2094 = vpack.c.b16 %v1966, %v1966
      %v2095 = vpack.c.b16 %v1967, %v1967
      %v2096 = vpack.c.b16 %v1968, %v1968
      %v2097 = vpack.c.b16 %v1969, %v1969
      %v2098 = vpack.c.b16 %v1970, %v1970
      %v2099 = vpack.c.b16 %v1971, %v1971
      %v2100 = vpack.c.b16 %v1972, %v1972
      %v2101 = vpack.c.b16 %v1973, %v1973
      %v2102 = vpack.c.b16 %v1974, %v1974
      %v2103 = vpack.c.b16 %v1975, %v1975
      %v2104 = vpack.c.b16 %v1976, %v1976
      %v2105 = vpack.c.b16 %v1977, %v1977
      %v2106 = vpack.c.b16 %v1978, %v1978
      %v2107 = vpack.c.b16 %v1979, %v1979
      %v2108 = vpack.c.b16 %v1980, %v1980
      %v2109 = vpack.c.b16 %v1981, %v1981
      %v2110 = vpack.c.b16 %v1982, %v1982
      %v2111 = vpack.c.b16 %v1983, %v1983
      %v2112 = vpack.c.b16 %v1984, %v1984
      %v2113 = vpack.c.b16 %v1985, %v1985
      %v2114 = vpack.c.b16 %v1986, %v1986
      %v2115 = vpack.c.b16 %v1987, %v1987
      %v2116 = vpack.c.b16 %v1988, %v1988
      %v2117 = vpack.c.b16 %v1989, %v1989
      %v2118 = vpack.c.b16 %v1990, %v1990
      %v2119 = vpack.c.b16 %v1991, %v1991
      %v2120 = vpack.c.b16 %v1992, %v1992
      %v2121 = vpack.c.b16 %v1993, %v1993
      %v2122 = vpack.c.b16 %v1994, %v1994
      %v2123 = vpack.c.b16 %v1995, %v1995
      %v2124 = vpack.c.b16 %v1996, %v1996
      %v2125 = vpack.c.b16 %v1997, %v1997
      %v2126 = vpack.c.b16 %v1998, %v1998
      %v2127 = vpack.c.b16 %v1999, %v1999
      %v2128 = vpack.c.b16 %v2000, %v2000
      %v2129 = vpack.c.b16 %v2001, %v2001
      %v2130 = vpack.c.b16 %v2002, %v2002
      %v2131 = vpack.c.b16 %v2003, %v2003
      %v2132 = vpack.c.b16 %v2004, %v2004
      %v2133 = vpack.c.b16 %v2005, %v2005
      %v2134 = vpack.c.b16 %v2006, %v2006
      %v2135 = vpack.c.b16 %v2007, %v2007
      %v2136 = vpack.c.b16 %v2008, %v2008
      %v2137 = vpack.c.b16 %v2009, %v2009
      %v2138 = vpack.c.b16 %v2010, %v2010
      %v2139 = vpack.c.b16 %v2011, %v2011
      %v2140 = vpack.c.b16 %v2012, %v2012
      %v2141 = vpack.c.b16 %v2013, %v2013
      %v2142 = vpack.c.b16 %v2014, %v2014
      %v2143 = vpack.c.b16 %v2015, %v2015
      %v2144 = vpack.c.b16 %v2016, %v2016
      %v2145 = vpack.c.b16 %v2017, %v2017
      %v2146 = vpack.c.b16 %v2018, %v2018
      %v2147 = vpack.c.b16 %v2019, %v2019
      %v2148 = vpack.c.b16 %v2020, %v2020
      %v2149 = vpack.c.b16 %v2021, %v2021
      %v2150 = vpack.c.b16 %v2022, %v2022
      %v2151 = vpack.c.b16 %v2023, %v2023
      %v2152 = vpack.c.b16 %v2024, %v2024
      %v2153 = vpack.c.b16 %v2025, %v2025
      %v2154 = vpack.c.b16 %v2026, %v2026
      %v2155 = vpack.c.b16 %v2027, %v2027
      %v2156 = vpack.c.b16 %v2028, %v2028
      %v2157 = vpack.c.b16 %v2029, %v2029
      %v2158 = vpack.c.b16 %v2030, %v2030
      %v2159 = vpack.c.b16 %v2031, %v2031
      %v2160 = vpack.c.b16 %v2032, %v2032
      %v2161 = vpack.c.b16 %v2033, %v2033
      %v2162 = vpack.c.b16 %v2034, %v2034
      %v2163 = vpack.c.b16 %v2035, %v2035
      %v2164 = vpack.c.b16 %v2036, %v2036
      %v2165 = vpack.c.b16 %v2037, %v2037
      %v2166 = vpack.c.b16 %v2038, %v2038
      %v2167 = vpack.c.b16 %v2039, %v2039
      %v2168 = vpack.c.b16 %v2040, %v2040
      %v2169 = vpack.c.b16 %v2041, %v2041
      %v2170 = vpack.c.b16 %v2042, %v2042
      %v2171 = vpack.c.b16 %v2043, %v2043
      %v2172 = vpack.c.b16 %v2044, %v2044
      %v2173 = vpack.c.b16 %v2045, %v2045
      %v2174 = vpack.c.b16 %v2046, %v2046
      %v2175 = vpack.c.b16 %v2047, %v2047
      %v2176 = vpack.c.b16 %v2048, %v2048
      %v2177 = vpack.c.b16 %v2049, %v2049
      %v2178 = vpack.c.b16 %v2050, %v2050
      %v2179 = vpack.c.b16 %v2051, %v2051
      %v2180 = vpack.c.b16 %v2052, %v2052
      %v2181 = vpack.c.b16 %v2053, %v2053
      %v2182 = vpack.c.b16 %v2054, %v2054
      %v2183 = vpack.c.b16 %v2055, %v2055
      %v2184 = vpack.c.b16 %v2056, %v2056
      %v2185 = vpack.c.b16 %v2057, %v2057
      %v2186 = vpack.c.b16 %v2058, %v2058
      %v2187 = vpack.c.b16 %v2059, %v2059
      %v2188 = vpack.c.b16 %v2060, %v2060
      %2317 = vst [vmem:[%s226] sm:$0xf] %v2061
      %2318 = vst [vmem:[%s226 + $0x4] sm:$0xf] %v2062
      %2319 = vst [vmem:[%s226 + $0x8] sm:$0xf] %v2063
      %2320 = vst [vmem:[%s226 + $0xc] sm:$0xf] %v2064
      %2321 = vst [vmem:[%s226 + $0x10] sm:$0xf] %v2065
      %2322 = vst [vmem:[%s226 + $0x14] sm:$0xf] %v2066
      %2323 = vst [vmem:[%s226 + $0x18] sm:$0xf] %v2067
      %2324 = vst [vmem:[%s226 + $0x1c] sm:$0xf] %v2068
      %2325 = vst [vmem:[%s226 + $0x20] sm:$0xf] %v2069
      %2326 = vst [vmem:[%s226 + $0x24] sm:$0xf] %v2070
      %2327 = vst [vmem:[%s226 + $0x28] sm:$0xf] %v2071
      %2328 = vst [vmem:[%s226 + $0x2c] sm:$0xf] %v2072
      %2329 = vst [vmem:[%s226 + $0x30] sm:$0xf] %v2073
      %2330 = vst [vmem:[%s226 + $0x34] sm:$0xf] %v2074
      %2331 = vst [vmem:[%s226 + $0x38] sm:$0xf] %v2075
      %2332 = vst [vmem:[%s226 + $0x3c] sm:$0xf] %v2076
      %2333 = vst [vmem:[%s226 + $0x40] sm:$0xf] %v2077
      %2334 = vst [vmem:[%s226 + $0x44] sm:$0xf] %v2078
      %2335 = vst [vmem:[%s226 + $0x48] sm:$0xf] %v2079
      %2336 = vst [vmem:[%s226 + $0x4c] sm:$0xf] %v2080
      %2337 = vst [vmem:[%s226 + $0x50] sm:$0xf] %v2081
      %2338 = vst [vmem:[%s226 + $0x54] sm:$0xf] %v2082
      %2339 = vst [vmem:[%s226 + $0x58] sm:$0xf] %v2083
      %2340 = vst [vmem:[%s226 + $0x5c] sm:$0xf] %v2084
      %2341 = vst [vmem:[%s226 + $0x60] sm:$0xf] %v2085
      %2342 = vst [vmem:[%s226 + $0x64] sm:$0xf] %v2086
      %2343 = vst [vmem:[%s226 + $0x68] sm:$0xf] %v2087
      %2344 = vst [vmem:[%s226 + $0x6c] sm:$0xf] %v2088
      %2345 = vst [vmem:[%s226 + $0x70] sm:$0xf] %v2089
      %2346 = vst [vmem:[%s226 + $0x74] sm:$0xf] %v2090
      %2347 = vst [vmem:[%s226 + $0x78] sm:$0xf] %v2091
      %2348 = vst [vmem:[%s226 + $0x7c] sm:$0xf] %v2092
      %2349 = vst [vmem:[%s226 + $0x80] sm:$0xf] %v2093
      %2350 = vst [vmem:[%s226 + $0x84] sm:$0xf] %v2094
      %2351 = vst [vmem:[%s226 + $0x88] sm:$0xf] %v2095
      %2352 = vst [vmem:[%s226 + $0x8c] sm:$0xf] %v2096
      %2353 = vst [vmem:[%s226 + $0x90] sm:$0xf] %v2097
      %2354 = vst [vmem:[%s226 + $0x94] sm:$0xf] %v2098
      %2355 = vst [vmem:[%s226 + $0x98] sm:$0xf] %v2099
      %2356 = vst [vmem:[%s226 + $0x9c] sm:$0xf] %v2100
      %2357 = vst [vmem:[%s226 + $0xa0] sm:$0xf] %v2101
      %2358 = vst [vmem:[%s226 + $0xa4] sm:$0xf] %v2102
      %2359 = vst [vmem:[%s226 + $0xa8] sm:$0xf] %v2103
      %2360 = vst [vmem:[%s226 + $0xac] sm:$0xf] %v2104
      %2361 = vst [vmem:[%s226 + $0xb0] sm:$0xf] %v2105
      %2362 = vst [vmem:[%s226 + $0xb4] sm:$0xf] %v2106
      %2363 = vst [vmem:[%s226 + $0xb8] sm:$0xf] %v2107
      %2364 = vst [vmem:[%s226 + $0xbc] sm:$0xf] %v2108
      %2365 = vst [vmem:[%s226 + $0xc0] sm:$0xf] %v2109
      %2366 = vst [vmem:[%s226 + $0xc4] sm:$0xf] %v2110
      %2367 = vst [vmem:[%s226 + $0xc8] sm:$0xf] %v2111
      %2368 = vst [vmem:[%s226 + $0xcc] sm:$0xf] %v2112
      %2369 = vst [vmem:[%s226 + $0xd0] sm:$0xf] %v2113
      %2370 = vst [vmem:[%s226 + $0xd4] sm:$0xf] %v2114
      %2371 = vst [vmem:[%s226 + $0xd8] sm:$0xf] %v2115
      %2372 = vst [vmem:[%s226 + $0xdc] sm:$0xf] %v2116
      %2373 = vst [vmem:[%s226 + $0xe0] sm:$0xf] %v2117
      %2374 = vst [vmem:[%s226 + $0xe4] sm:$0xf] %v2118
      %2375 = vst [vmem:[%s226 + $0xe8] sm:$0xf] %v2119
      %2376 = vst [vmem:[%s226 + $0xec] sm:$0xf] %v2120
      %2377 = vst [vmem:[%s226 + $0xf0] sm:$0xf] %v2121
      %2378 = vst [vmem:[%s226 + $0xf4] sm:$0xf] %v2122
      %2379 = vst [vmem:[%s226 + $0xf8] sm:$0xf] %v2123
      %2380 = vst [vmem:[%s226 + $0xfc] sm:$0xf] %v2124
      %2381 = vst [vmem:[%s226 + $0x100] sm:$0xf] %v2125
      %2382 = vst [vmem:[%s226 + $0x104] sm:$0xf] %v2126
      %2383 = vst [vmem:[%s226 + $0x108] sm:$0xf] %v2127
      %2384 = vst [vmem:[%s226 + $0x10c] sm:$0xf] %v2128
      %2385 = vst [vmem:[%s226 + $0x110] sm:$0xf] %v2129
      %2386 = vst [vmem:[%s226 + $0x114] sm:$0xf] %v2130
      %2387 = vst [vmem:[%s226 + $0x118] sm:$0xf] %v2131
      %2388 = vst [vmem:[%s226 + $0x11c] sm:$0xf] %v2132
      %2389 = vst [vmem:[%s226 + $0x120] sm:$0xf] %v2133
      %2390 = vst [vmem:[%s226 + $0x124] sm:$0xf] %v2134
      %2391 = vst [vmem:[%s226 + $0x128] sm:$0xf] %v2135
      %2392 = vst [vmem:[%s226 + $0x12c] sm:$0xf] %v2136
      %2393 = vst [vmem:[%s226 + $0x130] sm:$0xf] %v2137
      %2394 = vst [vmem:[%s226 + $0x134] sm:$0xf] %v2138
      %2395 = vst [vmem:[%s226 + $0x138] sm:$0xf] %v2139
      %2396 = vst [vmem:[%s226 + $0x13c] sm:$0xf] %v2140
      %2397 = vst [vmem:[%s226 + $0x140] sm:$0xf] %v2141
      %2398 = vst [vmem:[%s226 + $0x144] sm:$0xf] %v2142
      %2399 = vst [vmem:[%s226 + $0x148] sm:$0xf] %v2143
      %2400 = vst [vmem:[%s226 + $0x14c] sm:$0xf] %v2144
      %2401 = vst [vmem:[%s226 + $0x150] sm:$0xf] %v2145
      %2402 = vst [vmem:[%s226 + $0x154] sm:$0xf] %v2146
      %2403 = vst [vmem:[%s226 + $0x158] sm:$0xf] %v2147
      %2404 = vst [vmem:[%s226 + $0x15c] sm:$0xf] %v2148
      %2405 = vst [vmem:[%s226 + $0x160] sm:$0xf] %v2149
      %2406 = vst [vmem:[%s226 + $0x164] sm:$0xf] %v2150
      %2407 = vst [vmem:[%s226 + $0x168] sm:$0xf] %v2151
      %2408 = vst [vmem:[%s226 + $0x16c] sm:$0xf] %v2152
      %2409 = vst [vmem:[%s226 + $0x170] sm:$0xf] %v2153
      %2410 = vst [vmem:[%s226 + $0x174] sm:$0xf] %v2154
      %2411 = vst [vmem:[%s226 + $0x178] sm:$0xf] %v2155
      %2412 = vst [vmem:[%s226 + $0x17c] sm:$0xf] %v2156
      %2413 = vst [vmem:[%s226 + $0x180] sm:$0xf] %v2157
      %2414 = vst [vmem:[%s226 + $0x184] sm:$0xf] %v2158
      %2415 = vst [vmem:[%s226 + $0x188] sm:$0xf] %v2159
      %2416 = vst [vmem:[%s226 + $0x18c] sm:$0xf] %v2160
      %2417 = vst [vmem:[%s226 + $0x190] sm:$0xf] %v2161
      %2418 = vst [vmem:[%s226 + $0x194] sm:$0xf] %v2162
      %2419 = vst [vmem:[%s226 + $0x198] sm:$0xf] %v2163
      %2420 = vst [vmem:[%s226 + $0x19c] sm:$0xf] %v2164
      %2421 = vst [vmem:[%s226 + $0x1a0] sm:$0xf] %v2165
      %2422 = vst [vmem:[%s226 + $0x1a4] sm:$0xf] %v2166
      %2423 = vst [vmem:[%s226 + $0x1a8] sm:$0xf] %v2167
      %2424 = vst [vmem:[%s226 + $0x1ac] sm:$0xf] %v2168
      %2425 = vst [vmem:[%s226 + $0x1b0] sm:$0xf] %v2169
      %2426 = vst [vmem:[%s226 + $0x1b4] sm:$0xf] %v2170
      %2427 = vst [vmem:[%s226 + $0x1b8] sm:$0xf] %v2171
      %2428 = vst [vmem:[%s226 + $0x1bc] sm:$0xf] %v2172
      %2429 = vst [vmem:[%s226 + $0x1c0] sm:$0xf] %v2173
      %2430 = vst [vmem:[%s226 + $0x1c4] sm:$0xf] %v2174
      %2431 = vst [vmem:[%s226 + $0x1c8] sm:$0xf] %v2175
      %2432 = vst [vmem:[%s226 + $0x1cc] sm:$0xf] %v2176
      %2433 = vst [vmem:[%s226 + $0x1d0] sm:$0xf] %v2177
      %2434 = vst [vmem:[%s226 + $0x1d4] sm:$0xf] %v2178
      %2435 = vst [vmem:[%s226 + $0x1d8] sm:$0xf] %v2179
      %2436 = vst [vmem:[%s226 + $0x1dc] sm:$0xf] %v2180
      %2437 = vst [vmem:[%s226 + $0x1e0] sm:$0xf] %v2181
      %2438 = vst [vmem:[%s226 + $0x1e4] sm:$0xf] %v2182
      %2439 = vst [vmem:[%s226 + $0x1e8] sm:$0xf] %v2183
      %2440 = vst [vmem:[%s226 + $0x1ec] sm:$0xf] %v2184
      %2441 = vst [vmem:[%s226 + $0x1f0] sm:$0xf] %v2185
      %2442 = vst [vmem:[%s226 + $0x1f4] sm:$0xf] %v2186
      %2443 = vst [vmem:[%s226 + $0x1f8] sm:$0xf] %v2187
      %2444 = vst [vmem:[%s226 + $0x1fc] sm:$0xf] %v2188
      %s2445 = smul.u32 128, %s18
      %p2446 = scmp.lt.s32.totalorder %s2445, 255
      %s2447 = scalar_select %p2446, %s2445, 255
      %p2448 = scmp.lt.s32.totalorder %s19, 0
      %s2449 = scalar_select %p2448, %s19, 0
      %s2450 = sadd.s32 %s2449, %s2447
      %s2451 = smul.addr %s2450, 4
      %s2452 = scalar_lea.vmem %s3, %s2451
      // Predicated region
      $region33: #{faster_rcnn_forward.7} parent=31 // pred_check
        %p2453 = pneg %p124
      $region34: #{faster_rcnn_forward.7} parent=31 // pred_check_branch
        %2455 = sbr.rel (%p2453) target = $region36
      $region35: #{faster_rcnn_forward.7} parent=31 // pred_region
        %s2456 = smul.u32 128, %s18
      $region36: #{faster_rcnn_forward.7} parent=31 // pred_fallthru
        _
    $region32: #{faster_rcnn_forward.7} parent=5 // pred_fallthru
      _
    %p2457 = scmp.le.s32.totalorder 2, %s9
    // Predicated region
    $region37: #{faster_rcnn_forward.7} parent=5 // pred_check
      %p2458 = pneg %p2457
    $region38: #{faster_rcnn_forward.7} parent=5 // pred_check_branch
      %2460 = sbr.rel (%p2458) target = $region40
    $region39: #{faster_rcnn_forward.7} parent=5 // pred_region
      %s2461 = ssub.s32 %s9, 2
      // Predicated region
      $region41: #{faster_rcnn_forward.7} parent=39 // pred_check
        %p2462 = pneg %p130
      $region42: #{faster_rcnn_forward.7} parent=39 // pred_check_branch
        %2464 = sbr.rel (%p2462) target = $region44
      $region43: #{faster_rcnn_forward.7} parent=39 // pred_region
        %s2465 = smul.u32 128, %s20
        %p2466 = scmp.lt.s32.totalorder %s2465, 255
        %s2467 = scalar_select %p2466, %s2465, 255
        %p2468 = scmp.lt.s32.totalorder %s21, 0
        %s2469 = scalar_select %p2468, %s21, 0
        %s2470 = sadd.s32 %s2469, %s2467
        %s2471 = smul.addr %s2470, 4
        %s2472 = scalar_lea.vmem %s3, %s2471
      $region44: #{faster_rcnn_forward.7} parent=39 // pred_fallthru
        _
    $region40: #{faster_rcnn_forward.7} parent=5 // pred_fallthru
      _
  $region6: #{faster_rcnn_forward.7} parent=0 // loop_footer
    %s13 = sadd.s32 1, %s9
  $region7: #{faster_rcnn_forward.7} parent=0 // loop_footer_branch
    %8 = sbr.rel target = $region3
  $region8: #{faster_rcnn_forward.7} parent=0 // loop_exit
    _

// kernel: faster_rcnn_forward.8
$region0: #{faster_rcnn_forward.8}
  #allocation0 [shape = 'u32[]', space=smem, size = 0x4, offset = 0x4, fixed_abs, tag = 'smem constant byte address 0x4 - core index']
  #allocation1 [shape = 'u32[144,128]{1,0:T(1,128)}', space=vmem, size = 0x12000, scoped, tag = 'internal scratch']
  %s0 = inlined_call_operand.vmem [shape: bf16[512,128], index: 0, kind: input, shape index: {}]
  %s1 = inlined_call_operand.vmem [shape: bf16[128,128], index: 1, kind: input, shape index: {}]
  %s2 = inlined_call_operand.vmem [shape: f32[1,128], index: 2, kind: input, shape index: {}]
  %s3 = inlined_call_operand.vmem [shape: bf16[512,128], index: 3, kind: output, shape index: {}]
  %s4 = sld [smem:[#allocation0]]
  $region45: #{faster_rcnn_forward.8} parent=0
    _
  %s6 = ssub.s32 1, %s4
  %s7 = scalar_select 0, %s6, %s4
  loop: start=0, step=1, limit=4
  $region2: #{faster_rcnn_forward.8} parent=0 // loop_pre_header
    _
  $region3: #{faster_rcnn_forward.8} parent=0 // loop_header
    %s9 = sphi 0, %s13
    %p10 = scmp.ge.s32.totalorder %s9, 4
    %s16 = sphi 0, %s28
    %s17 = sphi 0, %s24
    %s18 = sphi 0, %s16
    %s19 = sphi 0, %s17
    %s20 = sphi 0, %s18
    %s21 = sphi 0, %s19
    %s31 = sphi 0, %s33
    %s34 = sphi 0, %s31
    %s35 = sphi 0, %s34
    %s51 = sphi 0, %s35
    %s57 = sphi 0, %s59
    %s60 = sphi 0, %s57
    %s61 = sphi 0, %s60
    %s77 = sphi 0, %s61
    %s83 = sphi 0, %s85
    %s86 = sphi 0, %s83
    %s87 = sphi 0, %s86
    %s103 = sphi 0, %s87
    %s111 = sphi 0, %s113
    %s114 = sphi 0, %s111
    %s115 = sphi 0, %s114
    %s131 = sphi 0, %s115
  $region4: #{faster_rcnn_forward.8} parent=0 // loop_header_branch
    %12 = sbr.rel (%p10) target = $region8
  $region5: #{faster_rcnn_forward.8} parent=0 // loop_body
    %s14 = ssub.s32 %s9, 1
    %s15 = ssub.s32 %s9, 2
    %s22 = sadd.s32 1, %s17
    %p23 = scmp.ge.s32.totalorder %s22, 1
    %s24 = scalar_select %p23, 0, %s22
    %s25 = sadd.s32 1, %s16
    %s26 = scalar_select %p23, %s25, %s16
    %p27 = scmp.ge.s32.totalorder %s26, 2
    %s28 = scalar_select %p27, 0, %s26
    %s29 = ssub.s32 %s16, %s28
    %p30 = scmp.eq.s32.totalorder %s29, 0
    %s32 = sadd.s32 %s31, 1
    %s33 = scalar_select %p30, %s31, %s32
    %p36 = pneg %p30
    %p37 = scmp.eq.s32.totalorder %s9, 1
    %p38 = por %p36, %p37
    %p39 = scmp.ne.s32.totalorder %s31, %s34
    %p40 = scmp.eq.s32.totalorder %s9, 0
    %p41 = por %p39, %p40
    %p42 = scmp.ne.s32.totalorder %s31, %s34
    %p43 = scmp.eq.s32.totalorder %s14, 1
    %p44 = por %p42, %p43
    %p45 = scmp.ne.s32.totalorder %s34, %s35
    %p46 = scmp.eq.s32.totalorder %s14, 0
    %p47 = por %p45, %p46
    %p48 = scmp.ne.s32.totalorder %s34, %s35
    %p49 = scmp.eq.s32.totalorder %s15, 1
    %p50 = por %p48, %p49
    %p52 = scmp.ne.s32.totalorder %s35, %s51
    %p53 = scmp.eq.s32.totalorder %s15, 0
    %p54 = por %p52, %p53
    %s55 = ssub.s32 %s17, %s24
    %p56 = scmp.eq.s32.totalorder %s55, 0
    %s58 = sadd.s32 %s57, 1
    %s59 = scalar_select %p56, %s57, %s58
    %p62 = pneg %p56
    %p63 = scmp.eq.s32.totalorder %s9, 1
    %p64 = por %p62, %p63
    %p65 = scmp.ne.s32.totalorder %s57, %s60
    %p66 = scmp.eq.s32.totalorder %s9, 0
    %p67 = por %p65, %p66
    %p68 = scmp.ne.s32.totalorder %s57, %s60
    %p69 = scmp.eq.s32.totalorder %s14, 1
    %p70 = por %p68, %p69
    %p71 = scmp.ne.s32.totalorder %s60, %s61
    %p72 = scmp.eq.s32.totalorder %s14, 0
    %p73 = por %p71, %p72
    %p74 = scmp.ne.s32.totalorder %s60, %s61
    %p75 = scmp.eq.s32.totalorder %s15, 1
    %p76 = por %p74, %p75
    %p78 = scmp.ne.s32.totalorder %s61, %s77
    %p79 = scmp.eq.s32.totalorder %s15, 0
    %p80 = por %p78, %p79
    %s81 = ssub.s32 %s17, %s24
    %p82 = scmp.eq.s32.totalorder %s81, 0
    %s84 = sadd.s32 %s83, 1
    %s85 = scalar_select %p82, %s83, %s84
    %p88 = pneg %p82
    %p89 = scmp.eq.s32.totalorder %s9, 1
    %p90 = por %p88, %p89
    %p91 = scmp.ne.s32.totalorder %s83, %s86
    %p92 = scmp.eq.s32.totalorder %s9, 0
    %p93 = por %p91, %p92
    %p94 = scmp.ne.s32.totalorder %s83, %s86
    %p95 = scmp.eq.s32.totalorder %s14, 1
    %p96 = por %p94, %p95
    %p97 = scmp.ne.s32.totalorder %s86, %s87
    %p98 = scmp.eq.s32.totalorder %s14, 0
    %p99 = por %p97, %p98
    %p100 = scmp.ne.s32.totalorder %s86, %s87
    %p101 = scmp.eq.s32.totalorder %s15, 1
    %p102 = por %p100, %p101
    %p104 = scmp.ne.s32.totalorder %s87, %s103
    %p105 = scmp.eq.s32.totalorder %s15, 0
    %p106 = por %p104, %p105
    %s107 = ssub.s32 %s16, %s28
    %s108 = ssub.s32 %s17, %s24
    %s109 = sor.u32 %s107, %s108
    %p110 = scmp.eq.s32.totalorder %s109, 0
    %s112 = sadd.s32 %s111, 1
    %s113 = scalar_select %p110, %s111, %s112
    %p116 = pneg %p110
    %p117 = scmp.eq.s32.totalorder %s9, 1
    %p118 = por %p116, %p117
    %p119 = scmp.ne.s32.totalorder %s111, %s114
    %p120 = scmp.eq.s32.totalorder %s9, 0
    %p121 = por %p119, %p120
    %p122 = scmp.ne.s32.totalorder %s111, %s114
    %p123 = scmp.eq.s32.totalorder %s14, 1
    %p124 = por %p122, %p123
    %p125 = scmp.ne.s32.totalorder %s114, %s115
    %p126 = scmp.eq.s32.totalorder %s14, 0
    %p127 = por %p125, %p126
    %p128 = scmp.ne.s32.totalorder %s114, %s115
    %p129 = scmp.eq.s32.totalorder %s15, 1
    %p130 = por %p128, %p129
    %p132 = scmp.ne.s32.totalorder %s115, %s131
    %p133 = scmp.eq.s32.totalorder %s15, 0
    %p134 = por %p132, %p133
    %p135 = scmp.le.s32.totalorder 1, %s9
    %p136 = scmp.lt.s32.totalorder %s9, 3
    %p137 = pnand %p135, %p136
    %p138 = pneg %p137
    // Predicated region
    $region9: #{faster_rcnn_forward.8} parent=5 // pred_check
      _
    $region10: #{faster_rcnn_forward.8} parent=5 // pred_check_branch
      %140 = sbr.rel (%p137) target = $region12
    $region11: #{faster_rcnn_forward.8} parent=5 // pred_region
      %s141 = ssub.s32 %s9, 1
      // Predicated region
      $region13: #{faster_rcnn_forward.8} parent=11 // pred_check
        %p142 = pneg %p73
      $region14: #{faster_rcnn_forward.8} parent=11 // pred_check_branch
        %144 = sbr.rel (%p142) target = $region16
      $region15: #{faster_rcnn_forward.8} parent=11 // pred_region
        %p145 = scmp.lt.s32.totalorder %s19, 0
        %s146 = scalar_select %p145, %s19, 0
        %s147 = smul.addr %s146, 4
        %s148 = scalar_lea.vmem %s1, %s147
      $region16: #{faster_rcnn_forward.8} parent=11 // pred_fallthru
        _
      // Predicated region
      $region17: #{faster_rcnn_forward.8} parent=11 // pred_check
        %p149 = pneg %p99
      $region18: #{faster_rcnn_forward.8} parent=11 // pred_check_branch
        %151 = sbr.rel (%p149) target = $region20
      $region19: #{faster_rcnn_forward.8} parent=11 // pred_region
        %p152 = scmp.lt.s32.totalorder %s19, 0
        %s153 = scalar_select %p152, %s19, 0
        %s154 = scalar_lea.vmem %s2, %s153
      $region20: #{faster_rcnn_forward.8} parent=11 // pred_fallthru
        _
    $region12: #{faster_rcnn_forward.8} parent=5 // pred_fallthru
      _
    %p155 = scmp.lt.s32.totalorder %s9, 2
    // Predicated region
    $region21: #{faster_rcnn_forward.8} parent=5 // pred_check
      %p156 = pneg %p155
    $region22: #{faster_rcnn_forward.8} parent=5 // pred_check_branch
      %158 = sbr.rel (%p156) target = $region24
    $region23: #{faster_rcnn_forward.8} parent=5 // pred_region
      // Predicated region
      $region25: #{faster_rcnn_forward.8} parent=23 // pred_check
        %p159 = pneg %p41
      $region26: #{faster_rcnn_forward.8} parent=23 // pred_check_branch
        %161 = sbr.rel (%p159) target = $region28
      $region27: #{faster_rcnn_forward.8} parent=23 // pred_region
        %s162 = smul.u32 32, %s16
        %p163 = scmp.lt.s32.totalorder %s162, 63
        %s164 = scalar_select %p163, %s162, 63
        %s165 = smul.addr %s164, 4
        %s166 = scalar_lea.vmem %s0, %s165
        %s167 = smul.u32 32, %s16
      $region28: #{faster_rcnn_forward.8} parent=23 // pred_fallthru
        _
    $region24: #{faster_rcnn_forward.8} parent=5 // pred_fallthru
      _
    %p168 = scmp.le.s32.totalorder 1, %s9
    %p169 = scmp.lt.s32.totalorder %s9, 3
    %p170 = pnand %p168, %p169
    %p171 = pneg %p170
    // Predicated region
    $region29: #{faster_rcnn_forward.8} parent=5 // pred_check
      _
    $region30: #{faster_rcnn_forward.8} parent=5 // pred_check_branch
      %173 = sbr.rel (%p170) target = $region32
    $region31: #{faster_rcnn_forward.8} parent=5 // pred_region
      %s174 = ssub.s32 %s9, 1
      %s175 = smul.u32 32, %s18
      %p176 = scmp.lt.s32.totalorder %s175, 63
      %s177 = scalar_select %p176, %s175, 63
      %s178 = smul.addr %s177, 4
      %s179 = scalar_lea.vmem %s0, %s178
      %p180 = pneg %p47
      %p181 = pneg %p44
      %p182 = scmp.lt.s32.totalorder %s19, 0
      %s183 = scalar_select %p182, %s19, 0
      %s184 = smul.addr %s183, 4
      %s185 = scalar_lea.vmem %s1, %s184
      %p186 = pneg %p73
      %p187 = pneg %p70
      %p188 = scmp.lt.s32.totalorder %s19, 0
      %s189 = scalar_select %p188, %s19, 0
      %s190 = scalar_lea.vmem %s2, %s189
      %p191 = pneg %p99
      %p192 = pneg %p96
      %p193 = pneg %p127
      %p194 = pneg %p124
      %s195 = smul.u32 32, %s18
      %p196 = scmp.lt.s32.totalorder %s195, 63
      %s197 = scalar_select %p196, %s195, 63
      %p198 = scmp.lt.s32.totalorder %s19, 0
      %s199 = scalar_select %p198, %s19, 0
      %s200 = sadd.s32 %s199, %s197
      %s201 = smul.addr %s200, 4
      %s202 = scalar_lea.vmem %s3, %s201
      %s203 = smul.u32 32, %s18
      %p204 = scmp.lt.s32.totalorder %s203, 63
      %s205 = scalar_select %p204, %s203, 63
      %s206 = smul.addr %s205, 4
      %s207 = scalar_lea.vmem %s0, %s206
      %s208 = smul.u32 32, %s18
      %p209 = scmp.lt.s32.totalorder %s19, 0
      %s210 = scalar_select %p209, %s19, 0
      %s211 = smul.addr %s210, 4
      %s212 = scalar_lea.vmem %s1, %s211
      %p213 = scmp.lt.s32.totalorder %s19, 0
      %s214 = scalar_select %p213, %s19, 0
      %s215 = scalar_lea.vmem %s2, %s214
      %s216 = smul.u32 32, %s18
      %p217 = scmp.lt.s32.totalorder %s216, 63
      %s218 = scalar_select %p217, %s216, 63
      %p219 = scmp.lt.s32.totalorder %s19, 0
      %s220 = scalar_select %p219, %s19, 0
      %s221 = sadd.s32 %s220, %s218
      %s222 = smul.addr %s221, 4
      %s223 = scalar_lea.vmem %s3, %s222
      %s224 = smul.u32 32, %s18
      %v226 = vld [vmem:[%s207] sm:$0xf]
      %v227 = vld [vmem:[%s207 + $0x4] sm:$0xf]
      %v228 = vld [vmem:[%s207 + $0x8] sm:$0xf]
      %v229 = vld [vmem:[%s207 + $0xc] sm:$0xf]
      %v230 = vld [vmem:[%s207 + $0x10] sm:$0xf]
      %v231 = vld [vmem:[%s207 + $0x14] sm:$0xf]
      %v232 = vld [vmem:[%s207 + $0x18] sm:$0xf]
      %v233 = vld [vmem:[%s207 + $0x1c] sm:$0xf]
      %v234 = vld [vmem:[%s207 + $0x20] sm:$0xf]
      %v235 = vld [vmem:[%s207 + $0x24] sm:$0xf]
      %v236 = vld [vmem:[%s207 + $0x28] sm:$0xf]
      %v237 = vld [vmem:[%s207 + $0x2c] sm:$0xf]
      %v238 = vld [vmem:[%s207 + $0x30] sm:$0xf]
      %v239 = vld [vmem:[%s207 + $0x34] sm:$0xf]
      %v240 = vld [vmem:[%s207 + $0x38] sm:$0xf]
      %v241 = vld [vmem:[%s207 + $0x3c] sm:$0xf]
      %v242 = vld [vmem:[%s207 + $0x40] sm:$0xf]
      %v243 = vld [vmem:[%s207 + $0x44] sm:$0xf]
      %v244 = vld [vmem:[%s207 + $0x48] sm:$0xf]
      %v245 = vld [vmem:[%s207 + $0x4c] sm:$0xf]
      %v246 = vld [vmem:[%s207 + $0x50] sm:$0xf]
      %v247 = vld [vmem:[%s207 + $0x54] sm:$0xf]
      %v248 = vld [vmem:[%s207 + $0x58] sm:$0xf]
      %v249 = vld [vmem:[%s207 + $0x5c] sm:$0xf]
      %v250 = vld [vmem:[%s207 + $0x60] sm:$0xf]
      %v251 = vld [vmem:[%s207 + $0x64] sm:$0xf]
      %v252 = vld [vmem:[%s207 + $0x68] sm:$0xf]
      %v253 = vld [vmem:[%s207 + $0x6c] sm:$0xf]
      %v254 = vld [vmem:[%s207 + $0x70] sm:$0xf]
      %v255 = vld [vmem:[%s207 + $0x74] sm:$0xf]
      %v256 = vld [vmem:[%s207 + $0x78] sm:$0xf]
      %v257 = vld [vmem:[%s207 + $0x7c] sm:$0xf]
      %v258 = vld [vmem:[%s212] sm:$0xf]
      %v259 = vld [vmem:[%s212 + $0x4] sm:$0xf]
      %v260 = vld [vmem:[%s212 + $0x8] sm:$0xf]
      %v261 = vld [vmem:[%s212 + $0xc] sm:$0xf]
      %v262 = vld [vmem:[%s212 + $0x10] sm:$0xf]
      %v263 = vld [vmem:[%s212 + $0x14] sm:$0xf]
      %v264 = vld [vmem:[%s212 + $0x18] sm:$0xf]
      %v265 = vld [vmem:[%s212 + $0x1c] sm:$0xf]
      %v266 = vld [vmem:[%s212 + $0x20] sm:$0xf]
      %v267 = vld [vmem:[%s212 + $0x24] sm:$0xf]
      %v268 = vld [vmem:[%s212 + $0x28] sm:$0xf]
      %v269 = vld [vmem:[%s212 + $0x2c] sm:$0xf]
      %v270 = vld [vmem:[%s212 + $0x30] sm:$0xf]
      %v271 = vld [vmem:[%s212 + $0x34] sm:$0xf]
      %v272 = vld [vmem:[%s212 + $0x38] sm:$0xf]
      %v273 = vld [vmem:[%s212 + $0x3c] sm:$0xf]
      %v274 = vld [vmem:[%s215] sm:$0x1]
      %v276 = vlaneseq
      %v277 = vshrl.u32 %v276, 7
      %v278 = vsub.s32 0, %v277
      %v279 = vrot.slane %v274, %v278
      %v313 = vunpack.c.l.b16 %v226
      %v314 = vunpack.c.l.b16 %v227
      %v315 = vunpack.c.l.b16 %v228
      %v316 = vunpack.c.l.b16 %v229
      %v317 = vunpack.c.l.b16 %v230
      %v318 = vunpack.c.l.b16 %v231
      %v319 = vunpack.c.l.b16 %v232
      %v320 = vunpack.c.l.b16 %v233
      %v321 = vunpack.c.l.b16 %v234
      %v322 = vunpack.c.l.b16 %v235
      %v323 = vunpack.c.l.b16 %v236
      %v324 = vunpack.c.l.b16 %v237
      %v325 = vunpack.c.l.b16 %v238
      %v326 = vunpack.c.l.b16 %v239
      %v327 = vunpack.c.l.b16 %v240
      %v328 = vunpack.c.l.b16 %v241
      %v329 = vunpack.c.l.b16 %v242
      %v330 = vunpack.c.l.b16 %v243
      %v331 = vunpack.c.l.b16 %v244
      %v332 = vunpack.c.l.b16 %v245
      %v333 = vunpack.c.l.b16 %v246
      %v334 = vunpack.c.l.b16 %v247
      %v335 = vunpack.c.l.b16 %v248
      %v336 = vunpack.c.l.b16 %v249
      %v337 = vunpack.c.l.b16 %v250
      %v338 = vunpack.c.l.b16 %v251
      %v339 = vunpack.c.l.b16 %v252
      %v340 = vunpack.c.l.b16 %v253
      %v341 = vunpack.c.l.b16 %v254
      %v342 = vunpack.c.l.b16 %v255
      %v343 = vunpack.c.l.b16 %v256
      %v344 = vunpack.c.l.b16 %v257
      %v345 = vpack.c.b16 %v314, %v313
      %v346 = vpack.c.b16 %v316, %v315
      %v347 = vpack.c.b16 %v318, %v317
      %v348 = vpack.c.b16 %v320, %v319
      %v349 = vpack.c.b16 %v322, %v321
      %v350 = vpack.c.b16 %v324, %v323
      %v351 = vpack.c.b16 %v326, %v325
      %v352 = vpack.c.b16 %v328, %v327
      %v353 = vpack.c.b16 %v330, %v329
      %v354 = vpack.c.b16 %v332, %v331
      %v355 = vpack.c.b16 %v334, %v333
      %v356 = vpack.c.b16 %v336, %v335
      %v357 = vpack.c.b16 %v338, %v337
      %v358 = vpack.c.b16 %v340, %v339
      %v359 = vpack.c.b16 %v342, %v341
      %v360 = vpack.c.b16 %v344, %v343
      %v393 = vunpack.c.l.b16 %v258
      %v394 = vunpack.c.l.b16 %v259
      %v395 = vunpack.c.l.b16 %v260
      %v396 = vunpack.c.l.b16 %v261
      %v397 = vunpack.c.l.b16 %v262
      %v398 = vunpack.c.l.b16 %v263
      %v399 = vunpack.c.l.b16 %v264
      %v400 = vunpack.c.l.b16 %v265
      %v401 = vunpack.c.l.b16 %v266
      %v402 = vunpack.c.l.b16 %v267
      %v403 = vunpack.c.l.b16 %v268
      %v404 = vunpack.c.l.b16 %v269
      %v405 = vunpack.c.l.b16 %v270
      %v406 = vunpack.c.l.b16 %v271
      %v407 = vunpack.c.l.b16 %v272
      %v408 = vunpack.c.l.b16 %v273
      %v409 = vpack.c.b16 %v394, %v393
      %v410 = vpack.c.b16 %v396, %v395
      %v411 = vpack.c.b16 %v398, %v397
      %v412 = vpack.c.b16 %v400, %v399
      %v413 = vpack.c.b16 %v402, %v401
      %v414 = vpack.c.b16 %v404, %v403
      %v415 = vpack.c.b16 %v406, %v405
      %v416 = vpack.c.b16 %v408, %v407
      %425 = vmatprep.subr.bf16.mxu0 0
      %426 = vmatpush1.bf16.msra.mxu0 %v409
      %427 = vmatprep.subr.bf16.mxu0 0
      %428 = vmatpush1.bf16.msra.mxu0 %v410
      %429 = vmatprep.subr.bf16.mxu0 0
      %430 = vmatpush1.bf16.msra.mxu0 %v411
      %431 = vmatprep.subr.bf16.mxu0 0
      %432 = vmatpush1.bf16.msra.mxu0 %v412
      %433 = vmatprep.subr.bf16.mxu0 0
      %434 = vmatpush1.bf16.msra.mxu0 %v413
      %435 = vmatprep.subr.bf16.mxu0 0
      %436 = vmatpush1.bf16.msra.mxu0 %v414
      %437 = vmatprep.subr.bf16.mxu0 0
      %438 = vmatpush1.bf16.msra.mxu0 %v415
      %439 = vmatprep.subr.bf16.mxu0 0
      %440 = vmatpush1.bf16.msra.mxu0 %v416
      %441 = vmatprep.subr.bf16.mxu0 0
      %442 = vmatpush1.bf16.msra.mxu0 0
      %443 = vmatprep.subr.bf16.mxu0 0
      %444 = vmatpush1.bf16.msra.mxu0 0
      %445 = vmatprep.subr.bf16.mxu0 0
      %446 = vmatpush1.bf16.msra.mxu0 0
      %447 = vmatprep.subr.bf16.mxu0 0
      %448 = vmatpush1.bf16.msra.mxu0 0
      %449 = vmatprep.subr.bf16.mxu0 0
      %450 = vmatpush1.bf16.msra.mxu0 0
      %451 = vmatprep.subr.bf16.mxu0 0
      %452 = vmatpush1.bf16.msra.mxu0 0
      %453 = vmatprep.subr.bf16.mxu0 0
      %454 = vmatpush1.bf16.msra.mxu0 0
      %455 = vmatprep.subr.bf16.mxu0 0
      %456 = vmatpush1.bf16.msra.mxu0 0
      %457 = vmatprep.mubr.bf16.mxu0 0
      %458 = vmatmul.mubr.bf16.gmra.mrb[0].mxu0 %v345
      %v459 = vpop.f32.mrb[0].mxu0
      %v460 = vadd.f32 %v279, %v459
      %v461 = vpop.f32.mrb[0].mxu0
      %v462 = vpop.f32.mrb[0].mxu0
      %v463 = vadd.f32 %v279, %v462
      %v464 = vpop.f32.mrb[0].mxu0
      %465 = vmatprep.mubr.bf16.mxu0 0
      %466 = vmatmul.mubr.bf16.gmra.mrb[0].mxu0 %v346
      %v467 = vpop.f32.mrb[0].mxu0
      %v468 = vadd.f32 %v279, %v467
      %v469 = vpop.f32.mrb[0].mxu0
      %v470 = vpop.f32.mrb[0].mxu0
      %v471 = vadd.f32 %v279, %v470
      %v472 = vpop.f32.mrb[0].mxu0
      %473 = vmatprep.mubr.bf16.mxu0 0
      %474 = vmatmul.mubr.bf16.gmra.mrb[0].mxu0 %v347
      %v475 = vpop.f32.mrb[0].mxu0
      %v476 = vadd.f32 %v279, %v475
      %v477 = vpop.f32.mrb[0].mxu0
      %v478 = vpop.f32.mrb[0].mxu0
      %v479 = vadd.f32 %v279, %v478
      %v480 = vpop.f32.mrb[0].mxu0
      %481 = vmatprep.mubr.bf16.mxu0 0
      %482 = vmatmul.mubr.bf16.gmra.mrb[0].mxu0 %v348
      %v483 = vpop.f32.mrb[0].mxu0
      %v484 = vadd.f32 %v279, %v483
      %v485 = vpop.f32.mrb[0].mxu0
      %v486 = vpop.f32.mrb[0].mxu0
      %v487 = vadd.f32 %v279, %v486
      %v488 = vpop.f32.mrb[0].mxu0
      %489 = vmatprep.mubr.bf16.mxu0 0
      %490 = vmatmul.mubr.bf16.gmra.mrb[0].mxu0 %v349
      %v491 = vpop.f32.mrb[0].mxu0
      %v492 = vadd.f32 %v279, %v491
      %v493 = vpop.f32.mrb[0].mxu0
      %v494 = vpop.f32.mrb[0].mxu0
      %v495 = vadd.f32 %v279, %v494
      %v496 = vpop.f32.mrb[0].mxu0
      %497 = vmatprep.mubr.bf16.mxu0 0
      %498 = vmatmul.mubr.bf16.gmra.mrb[0].mxu0 %v350
      %v499 = vpop.f32.mrb[0].mxu0
      %v500 = vadd.f32 %v279, %v499
      %v501 = vpop.f32.mrb[0].mxu0
      %v502 = vpop.f32.mrb[0].mxu0
      %v503 = vadd.f32 %v279, %v502
      %v504 = vpop.f32.mrb[0].mxu0
      %505 = vmatprep.mubr.bf16.mxu0 0
      %506 = vmatmul.mubr.bf16.gmra.mrb[0].mxu0 %v351
      %v507 = vpop.f32.mrb[0].mxu0
      %v508 = vadd.f32 %v279, %v507
      %v509 = vpop.f32.mrb[0].mxu0
      %v510 = vpop.f32.mrb[0].mxu0
      %v511 = vadd.f32 %v279, %v510
      %v512 = vpop.f32.mrb[0].mxu0
      %513 = vmatprep.mubr.bf16.mxu0 0
      %514 = vmatmul.mubr.bf16.gmra.mrb[0].mxu0 %v352
      %v515 = vpop.f32.mrb[0].mxu0
      %v516 = vadd.f32 %v279, %v515
      %v517 = vpop.f32.mrb[0].mxu0
      %v518 = vpop.f32.mrb[0].mxu0
      %v519 = vadd.f32 %v279, %v518
      %v520 = vpop.f32.mrb[0].mxu0
      %521 = vmatprep.mubr.bf16.mxu0 0
      %522 = vmatmul.mubr.bf16.gmra.mrb[0].mxu0 %v353
      %v523 = vpop.f32.mrb[0].mxu0
      %v524 = vadd.f32 %v279, %v523
      %v525 = vpop.f32.mrb[0].mxu0
      %v526 = vpop.f32.mrb[0].mxu0
      %v527 = vadd.f32 %v279, %v526
      %v528 = vpop.f32.mrb[0].mxu0
      %529 = vmatprep.mubr.bf16.mxu0 0
      %530 = vmatmul.mubr.bf16.gmra.mrb[0].mxu0 %v354
      %v531 = vpop.f32.mrb[0].mxu0
      %v532 = vadd.f32 %v279, %v531
      %v533 = vpop.f32.mrb[0].mxu0
      %v534 = vpop.f32.mrb[0].mxu0
      %v535 = vadd.f32 %v279, %v534
      %v536 = vpop.f32.mrb[0].mxu0
      %537 = vmatprep.mubr.bf16.mxu0 0
      %538 = vmatmul.mubr.bf16.gmra.mrb[0].mxu0 %v355
      %v539 = vpop.f32.mrb[0].mxu0
      %v540 = vadd.f32 %v279, %v539
      %v541 = vpop.f32.mrb[0].mxu0
      %v542 = vpop.f32.mrb[0].mxu0
      %v543 = vadd.f32 %v279, %v542
      %v544 = vpop.f32.mrb[0].mxu0
      %545 = vmatprep.mubr.bf16.mxu0 0
      %546 = vmatmul.mubr.bf16.gmra.mrb[0].mxu0 %v356
      %v547 = vpop.f32.mrb[0].mxu0
      %v548 = vadd.f32 %v279, %v547
      %v549 = vpop.f32.mrb[0].mxu0
      %v550 = vpop.f32.mrb[0].mxu0
      %v551 = vadd.f32 %v279, %v550
      %v552 = vpop.f32.mrb[0].mxu0
      %553 = vmatprep.mubr.bf16.mxu0 0
      %554 = vmatmul.mubr.bf16.gmra.mrb[0].mxu0 %v357
      %v555 = vpop.f32.mrb[0].mxu0
      %v556 = vadd.f32 %v279, %v555
      %v557 = vpop.f32.mrb[0].mxu0
      %v558 = vpop.f32.mrb[0].mxu0
      %v559 = vadd.f32 %v279, %v558
      %v560 = vpop.f32.mrb[0].mxu0
      %561 = vmatprep.mubr.bf16.mxu0 0
      %562 = vmatmul.mubr.bf16.gmra.mrb[0].mxu0 %v358
      %v563 = vpop.f32.mrb[0].mxu0
      %v564 = vadd.f32 %v279, %v563
      %v565 = vpop.f32.mrb[0].mxu0
      %v566 = vpop.f32.mrb[0].mxu0
      %v567 = vadd.f32 %v279, %v566
      %v568 = vpop.f32.mrb[0].mxu0
      %569 = vmatprep.mubr.bf16.mxu0 0
      %570 = vmatmul.mubr.bf16.gmra.mrb[0].mxu0 %v359
      %v571 = vpop.f32.mrb[0].mxu0
      %v572 = vadd.f32 %v279, %v571
      %v573 = vpop.f32.mrb[0].mxu0
      %v574 = vpop.f32.mrb[0].mxu0
      %v575 = vadd.f32 %v279, %v574
      %v576 = vpop.f32.mrb[0].mxu0
      %577 = vmatprep.mubr.bf16.mxu0 0
      %578 = vmatmul.mubr.bf16.gmra.mrb[0].mxu0 %v360
      %v579 = vpop.f32.mrb[0].mxu0
      %v580 = vadd.f32 %v279, %v579
      %v581 = vpop.f32.mrb[0].mxu0
      %v582 = vpop.f32.mrb[0].mxu0
      %v583 = vadd.f32 %v279, %v582
      %v584 = vpop.f32.mrb[0].mxu0
      %585 = vdwg.mxu0
      %v586 = vmax.f32 %v460, 0.0
      %v587 = vmax.f32 %v463, 0.0
      %v588 = vmax.f32 %v468, 0.0
      %v589 = vmax.f32 %v471, 0.0
      %v590 = vmax.f32 %v476, 0.0
      %v591 = vmax.f32 %v479, 0.0
      %v592 = vmax.f32 %v484, 0.0
      %v593 = vmax.f32 %v487, 0.0
      %v594 = vmax.f32 %v492, 0.0
      %v595 = vmax.f32 %v495, 0.0
      %v596 = vmax.f32 %v500, 0.0
      %v597 = vmax.f32 %v503, 0.0
      %v598 = vmax.f32 %v508, 0.0
      %v599 = vmax.f32 %v511, 0.0
      %v600 = vmax.f32 %v516, 0.0
      %v601 = vmax.f32 %v519, 0.0
      %v602 = vmax.f32 %v524, 0.0
      %v603 = vmax.f32 %v527, 0.0
      %v604 = vmax.f32 %v532, 0.0
      %v605 = vmax.f32 %v535, 0.0
      %v606 = vmax.f32 %v540, 0.0
      %v607 = vmax.f32 %v543, 0.0
      %v608 = vmax.f32 %v548, 0.0
      %v609 = vmax.f32 %v551, 0.0
      %v610 = vmax.f32 %v556, 0.0
      %v611 = vmax.f32 %v559, 0.0
      %v612 = vmax.f32 %v564, 0.0
      %v613 = vmax.f32 %v567, 0.0
      %v614 = vmax.f32 %v572, 0.0
      %v615 = vmax.f32 %v575, 0.0
      %v616 = vmax.f32 %v580, 0.0
      %v617 = vmax.f32 %v583, 0.0
      %v618 = vpack.c.bf16 %v587, %v586
      %v619 = vpack.c.bf16 %v589, %v588
      %v620 = vpack.c.bf16 %v591, %v590
      %v621 = vpack.c.bf16 %v593, %v592
      %v622 = vpack.c.bf16 %v595, %v594
      %v623 = vpack.c.bf16 %v597, %v596
      %v624 = vpack.c.bf16 %v599, %v598
      %v625 = vpack.c.bf16 %v601, %v600
      %v626 = vpack.c.bf16 %v603, %v602
      %v627 = vpack.c.bf16 %v605, %v604
      %v628 = vpack.c.bf16 %v607, %v606
      %v629 = vpack.c.bf16 %v609, %v608
      %v630 = vpack.c.bf16 %v611, %v610
      %v631 = vpack.c.bf16 %v613, %v612
      %v632 = vpack.c.bf16 %v615, %v614
      %v633 = vpack.c.bf16 %v617, %v616
      %v650 = vunpack.c.l.b16 %v618
      %v651 = vunpack.c.h.b16 %v618
      %v652 = vunpack.c.l.b16 %v619
      %v653 = vunpack.c.h.b16 %v619
      %v654 = vunpack.c.l.b16 %v620
      %v655 = vunpack.c.h.b16 %v620
      %v656 = vunpack.c.l.b16 %v621
      %v657 = vunpack.c.h.b16 %v621
      %v658 = vunpack.c.l.b16 %v622
      %v659 = vunpack.c.h.b16 %v622
      %v660 = vunpack.c.l.b16 %v623
      %v661 = vunpack.c.h.b16 %v623
      %v662 = vunpack.c.l.b16 %v624
      %v663 = vunpack.c.h.b16 %v624
      %v664 = vunpack.c.l.b16 %v625
      %v665 = vunpack.c.h.b16 %v625
      %v666 = vunpack.c.l.b16 %v626
      %v667 = vunpack.c.h.b16 %v626
      %v668 = vunpack.c.l.b16 %v627
      %v669 = vunpack.c.h.b16 %v627
      %v670 = vunpack.c.l.b16 %v628
      %v671 = vunpack.c.h.b16 %v628
      %v672 = vunpack.c.l.b16 %v629
      %v673 = vunpack.c.h.b16 %v629
      %v674 = vunpack.c.l.b16 %v630
      %v675 = vunpack.c.h.b16 %v630
      %v676 = vunpack.c.l.b16 %v631
      %v677 = vunpack.c.h.b16 %v631
      %v678 = vunpack.c.l.b16 %v632
      %v679 = vunpack.c.h.b16 %v632
      %v680 = vunpack.c.l.b16 %v633
      %v681 = vunpack.c.h.b16 %v633
      %v682 = vpack.c.b16 %v650, %v650
      %v683 = vpack.c.b16 %v651, %v651
      %v684 = vpack.c.b16 %v652, %v652
      %v685 = vpack.c.b16 %v653, %v653
      %v686 = vpack.c.b16 %v654, %v654
      %v687 = vpack.c.b16 %v655, %v655
      %v688 = vpack.c.b16 %v656, %v656
      %v689 = vpack.c.b16 %v657, %v657
      %v690 = vpack.c.b16 %v658, %v658
      %v691 = vpack.c.b16 %v659, %v659
      %v692 = vpack.c.b16 %v660, %v660
      %v693 = vpack.c.b16 %v661, %v661
      %v694 = vpack.c.b16 %v662, %v662
      %v695 = vpack.c.b16 %v663, %v663
      %v696 = vpack.c.b16 %v664, %v664
      %v697 = vpack.c.b16 %v665, %v665
      %v698 = vpack.c.b16 %v666, %v666
      %v699 = vpack.c.b16 %v667, %v667
      %v700 = vpack.c.b16 %v668, %v668
      %v701 = vpack.c.b16 %v669, %v669
      %v702 = vpack.c.b16 %v670, %v670
      %v703 = vpack.c.b16 %v671, %v671
      %v704 = vpack.c.b16 %v672, %v672
      %v705 = vpack.c.b16 %v673, %v673
      %v706 = vpack.c.b16 %v674, %v674
      %v707 = vpack.c.b16 %v675, %v675
      %v708 = vpack.c.b16 %v676, %v676
      %v709 = vpack.c.b16 %v677, %v677
      %v710 = vpack.c.b16 %v678, %v678
      %v711 = vpack.c.b16 %v679, %v679
      %v712 = vpack.c.b16 %v680, %v680
      %v713 = vpack.c.b16 %v681, %v681
      %746 = vst [vmem:[%s223] sm:$0xf] %v682
      %747 = vst [vmem:[%s223 + $0x4] sm:$0xf] %v683
      %748 = vst [vmem:[%s223 + $0x8] sm:$0xf] %v684
      %749 = vst [vmem:[%s223 + $0xc] sm:$0xf] %v685
      %750 = vst [vmem:[%s223 + $0x10] sm:$0xf] %v686
      %751 = vst [vmem:[%s223 + $0x14] sm:$0xf] %v687
      %752 = vst [vmem:[%s223 + $0x18] sm:$0xf] %v688
      %753 = vst [vmem:[%s223 + $0x1c] sm:$0xf] %v689
      %754 = vst [vmem:[%s223 + $0x20] sm:$0xf] %v690
      %755 = vst [vmem:[%s223 + $0x24] sm:$0xf] %v691
      %756 = vst [vmem:[%s223 + $0x28] sm:$0xf] %v692
      %757 = vst [vmem:[%s223 + $0x2c] sm:$0xf] %v693
      %758 = vst [vmem:[%s223 + $0x30] sm:$0xf] %v694
      %759 = vst [vmem:[%s223 + $0x34] sm:$0xf] %v695
      %760 = vst [vmem:[%s223 + $0x38] sm:$0xf] %v696
      %761 = vst [vmem:[%s223 + $0x3c] sm:$0xf] %v697
      %762 = vst [vmem:[%s223 + $0x40] sm:$0xf] %v698
      %763 = vst [vmem:[%s223 + $0x44] sm:$0xf] %v699
      %764 = vst [vmem:[%s223 + $0x48] sm:$0xf] %v700
      %765 = vst [vmem:[%s223 + $0x4c] sm:$0xf] %v701
      %766 = vst [vmem:[%s223 + $0x50] sm:$0xf] %v702
      %767 = vst [vmem:[%s223 + $0x54] sm:$0xf] %v703
      %768 = vst [vmem:[%s223 + $0x58] sm:$0xf] %v704
      %769 = vst [vmem:[%s223 + $0x5c] sm:$0xf] %v705
      %770 = vst [vmem:[%s223 + $0x60] sm:$0xf] %v706
      %771 = vst [vmem:[%s223 + $0x64] sm:$0xf] %v707
      %772 = vst [vmem:[%s223 + $0x68] sm:$0xf] %v708
      %773 = vst [vmem:[%s223 + $0x6c] sm:$0xf] %v709
      %774 = vst [vmem:[%s223 + $0x70] sm:$0xf] %v710
      %775 = vst [vmem:[%s223 + $0x74] sm:$0xf] %v711
      %776 = vst [vmem:[%s223 + $0x78] sm:$0xf] %v712
      %777 = vst [vmem:[%s223 + $0x7c] sm:$0xf] %v713
      %s778 = smul.u32 32, %s18
      %p779 = scmp.lt.s32.totalorder %s778, 63
      %s780 = scalar_select %p779, %s778, 63
      %p781 = scmp.lt.s32.totalorder %s19, 0
      %s782 = scalar_select %p781, %s19, 0
      %s783 = sadd.s32 %s782, %s780
      %s784 = smul.addr %s783, 4
      %s785 = scalar_lea.vmem %s3, %s784
      // Predicated region
      $region33: #{faster_rcnn_forward.8} parent=31 // pred_check
        %p786 = pneg %p124
      $region34: #{faster_rcnn_forward.8} parent=31 // pred_check_branch
        %788 = sbr.rel (%p786) target = $region36
      $region35: #{faster_rcnn_forward.8} parent=31 // pred_region
        %s789 = smul.u32 32, %s18
      $region36: #{faster_rcnn_forward.8} parent=31 // pred_fallthru
        _
    $region32: #{faster_rcnn_forward.8} parent=5 // pred_fallthru
      _
    %p790 = scmp.le.s32.totalorder 2, %s9
    // Predicated region
    $region37: #{faster_rcnn_forward.8} parent=5 // pred_check
      %p791 = pneg %p790
    $region38: #{faster_rcnn_forward.8} parent=5 // pred_check_branch
      %793 = sbr.rel (%p791) target = $region40
    $region39: #{faster_rcnn_forward.8} parent=5 // pred_region
      %s794 = ssub.s32 %s9, 2
      // Predicated region
      $region41: #{faster_rcnn_forward.8} parent=39 // pred_check
        %p795 = pneg %p130
      $region42: #{faster_rcnn_forward.8} parent=39 // pred_check_branch
        %797 = sbr.rel (%p795) target = $region44
      $region43: #{faster_rcnn_forward.8} parent=39 // pred_region
        %s798 = smul.u32 32, %s20
        %p799 = scmp.lt.s32.totalorder %s798, 63
        %s800 = scalar_select %p799, %s798, 63
        %p801 = scmp.lt.s32.totalorder %s21, 0
        %s802 = scalar_select %p801, %s21, 0
        %s803 = sadd.s32 %s802, %s800
        %s804 = smul.addr %s803, 4
        %s805 = scalar_lea.vmem %s3, %s804
      $region44: #{faster_rcnn_forward.8} parent=39 // pred_fallthru
        _
    $region40: #{faster_rcnn_forward.8} parent=5 // pred_fallthru
      _
  $region6: #{faster_rcnn_forward.8} parent=0 // loop_footer
    %s13 = sadd.s32 1, %s9
  $region7: #{faster_rcnn_forward.8} parent=0 // loop_footer_branch
    %8 = sbr.rel target = $region3
  $region8: #{faster_rcnn_forward.8} parent=0 // loop_exit
    _

// kernel: faster_rcnn_forward.9
$region0: #{faster_rcnn_forward.9}
  #allocation0 [shape = 'u32[]', space=smem, size = 0x4, offset = 0x4, fixed_abs, tag = 'smem constant byte address 0x4 - core index']
  #allocation1 [shape = 'u32[144,128]{1,0:T(1,128)}', space=vmem, size = 0x12000, scoped, tag = 'internal scratch']
  %s0 = inlined_call_operand.vmem [shape: bf16[128,256], index: 0, kind: input, shape index: {}]
  %s1 = inlined_call_operand.vmem [shape: bf16[256,128], index: 1, kind: input, shape index: {}]
  %s2 = inlined_call_operand.vmem [shape: f32[1,128], index: 2, kind: input, shape index: {}]
  %s3 = inlined_call_operand.vmem [shape: bf16[128,128], index: 3, kind: output, shape index: {}]
  %s4 = sld [smem:[#allocation0]]
  $region45: #{faster_rcnn_forward.9} parent=0
    _
  %s6 = ssub.s32 1, %s4
  %s7 = scalar_select 0, %s6, %s4
  loop: start=0, step=1, limit=4
  $region2: #{faster_rcnn_forward.9} parent=0 // loop_pre_header
    _
  $region3: #{faster_rcnn_forward.9} parent=0 // loop_header
    %s9 = sphi 0, %s13
    %p10 = scmp.ge.s32.totalorder %s9, 4
    %s16 = sphi 0, %s28
    %s17 = sphi 0, %s24
    %s18 = sphi 0, %s16
    %s19 = sphi 0, %s17
    %s20 = sphi 0, %s18
    %s21 = sphi 0, %s19
    %s31 = sphi 0, %s33
    %s34 = sphi 0, %s31
    %s35 = sphi 0, %s34
    %s51 = sphi 0, %s35
    %s57 = sphi 0, %s59
    %s60 = sphi 0, %s57
    %s61 = sphi 0, %s60
    %s77 = sphi 0, %s61
    %s83 = sphi 0, %s85
    %s86 = sphi 0, %s83
    %s87 = sphi 0, %s86
    %s103 = sphi 0, %s87
    %s111 = sphi 0, %s113
    %s114 = sphi 0, %s111
    %s115 = sphi 0, %s114
    %s131 = sphi 0, %s115
  $region4: #{faster_rcnn_forward.9} parent=0 // loop_header_branch
    %12 = sbr.rel (%p10) target = $region8
  $region5: #{faster_rcnn_forward.9} parent=0 // loop_body
    %s14 = ssub.s32 %s9, 1
    %s15 = ssub.s32 %s9, 2
    %s22 = sadd.s32 1, %s17
    %p23 = scmp.ge.s32.totalorder %s22, 1
    %s24 = scalar_select %p23, 0, %s22
    %s25 = sadd.s32 1, %s16
    %s26 = scalar_select %p23, %s25, %s16
    %p27 = scmp.ge.s32.totalorder %s26, 2
    %s28 = scalar_select %p27, 0, %s26
    %s29 = ssub.s32 %s16, %s28
    %p30 = scmp.eq.s32.totalorder %s29, 0
    %s32 = sadd.s32 %s31, 1
    %s33 = scalar_select %p30, %s31, %s32
    %p36 = pneg %p30
    %p37 = scmp.eq.s32.totalorder %s9, 1
    %p38 = por %p36, %p37
    %p39 = scmp.ne.s32.totalorder %s31, %s34
    %p40 = scmp.eq.s32.totalorder %s9, 0
    %p41 = por %p39, %p40
    %p42 = scmp.ne.s32.totalorder %s31, %s34
    %p43 = scmp.eq.s32.totalorder %s14, 1
    %p44 = por %p42, %p43
    %p45 = scmp.ne.s32.totalorder %s34, %s35
    %p46 = scmp.eq.s32.totalorder %s14, 0
    %p47 = por %p45, %p46
    %p48 = scmp.ne.s32.totalorder %s34, %s35
    %p49 = scmp.eq.s32.totalorder %s15, 1
    %p50 = por %p48, %p49
    %p52 = scmp.ne.s32.totalorder %s35, %s51
    %p53 = scmp.eq.s32.totalorder %s15, 0
    %p54 = por %p52, %p53
    %s55 = ssub.s32 %s17, %s24
    %p56 = scmp.eq.s32.totalorder %s55, 0
    %s58 = sadd.s32 %s57, 1
    %s59 = scalar_select %p56, %s57, %s58
    %p62 = pneg %p56
    %p63 = scmp.eq.s32.totalorder %s9, 1
    %p64 = por %p62, %p63
    %p65 = scmp.ne.s32.totalorder %s57, %s60
    %p66 = scmp.eq.s32.totalorder %s9, 0
    %p67 = por %p65, %p66
    %p68 = scmp.ne.s32.totalorder %s57, %s60
    %p69 = scmp.eq.s32.totalorder %s14, 1
    %p70 = por %p68, %p69
    %p71 = scmp.ne.s32.totalorder %s60, %s61
    %p72 = scmp.eq.s32.totalorder %s14, 0
    %p73 = por %p71, %p72
    %p74 = scmp.ne.s32.totalorder %s60, %s61
    %p75 = scmp.eq.s32.totalorder %s15, 1
    %p76 = por %p74, %p75
    %p78 = scmp.ne.s32.totalorder %s61, %s77
    %p79 = scmp.eq.s32.totalorder %s15, 0
    %p80 = por %p78, %p79
    %s81 = ssub.s32 %s17, %s24
    %p82 = scmp.eq.s32.totalorder %s81, 0
    %s84 = sadd.s32 %s83, 1
    %s85 = scalar_select %p82, %s83, %s84
    %p88 = pneg %p82
    %p89 = scmp.eq.s32.totalorder %s9, 1
    %p90 = por %p88, %p89
    %p91 = scmp.ne.s32.totalorder %s83, %s86
    %p92 = scmp.eq.s32.totalorder %s9, 0
    %p93 = por %p91, %p92
    %p94 = scmp.ne.s32.totalorder %s83, %s86
    %p95 = scmp.eq.s32.totalorder %s14, 1
    %p96 = por %p94, %p95
    %p97 = scmp.ne.s32.totalorder %s86, %s87
    %p98 = scmp.eq.s32.totalorder %s14, 0
    %p99 = por %p97, %p98
    %p100 = scmp.ne.s32.totalorder %s86, %s87
    %p101 = scmp.eq.s32.totalorder %s15, 1
    %p102 = por %p100, %p101
    %p104 = scmp.ne.s32.totalorder %s87, %s103
    %p105 = scmp.eq.s32.totalorder %s15, 0
    %p106 = por %p104, %p105
    %s107 = ssub.s32 %s16, %s28
    %s108 = ssub.s32 %s17, %s24
    %s109 = sor.u32 %s107, %s108
    %p110 = scmp.eq.s32.totalorder %s109, 0
    %s112 = sadd.s32 %s111, 1
    %s113 = scalar_select %p110, %s111, %s112
    %p116 = pneg %p110
    %p117 = scmp.eq.s32.totalorder %s9, 1
    %p118 = por %p116, %p117
    %p119 = scmp.ne.s32.totalorder %s111, %s114
    %p120 = scmp.eq.s32.totalorder %s9, 0
    %p121 = por %p119, %p120
    %p122 = scmp.ne.s32.totalorder %s111, %s114
    %p123 = scmp.eq.s32.totalorder %s14, 1
    %p124 = por %p122, %p123
    %p125 = scmp.ne.s32.totalorder %s114, %s115
    %p126 = scmp.eq.s32.totalorder %s14, 0
    %p127 = por %p125, %p126
    %p128 = scmp.ne.s32.totalorder %s114, %s115
    %p129 = scmp.eq.s32.totalorder %s15, 1
    %p130 = por %p128, %p129
    %p132 = scmp.ne.s32.totalorder %s115, %s131
    %p133 = scmp.eq.s32.totalorder %s15, 0
    %p134 = por %p132, %p133
    %p135 = scmp.le.s32.totalorder 1, %s9
    %p136 = scmp.lt.s32.totalorder %s9, 3
    %p137 = pnand %p135, %p136
    %p138 = pneg %p137
    // Predicated region
    $region9: #{faster_rcnn_forward.9} parent=5 // pred_check
      _
    $region10: #{faster_rcnn_forward.9} parent=5 // pred_check_branch
      %140 = sbr.rel (%p137) target = $region12
    $region11: #{faster_rcnn_forward.9} parent=5 // pred_region
      %s141 = ssub.s32 %s9, 1
      // Predicated region
      $region13: #{faster_rcnn_forward.9} parent=11 // pred_check
        %p142 = pneg %p73
      $region14: #{faster_rcnn_forward.9} parent=11 // pred_check_branch
        %144 = sbr.rel (%p142) target = $region16
      $region15: #{faster_rcnn_forward.9} parent=11 // pred_region
        %p145 = scmp.lt.s32.totalorder %s19, 0
        %s146 = scalar_select %p145, %s19, 0
        %s147 = smul.addr %s146, 4
        %s148 = scalar_lea.vmem %s1, %s147
      $region16: #{faster_rcnn_forward.9} parent=11 // pred_fallthru
        _
      // Predicated region
      $region17: #{faster_rcnn_forward.9} parent=11 // pred_check
        %p149 = pneg %p99
      $region18: #{faster_rcnn_forward.9} parent=11 // pred_check_branch
        %151 = sbr.rel (%p149) target = $region20
      $region19: #{faster_rcnn_forward.9} parent=11 // pred_region
        %p152 = scmp.lt.s32.totalorder %s19, 0
        %s153 = scalar_select %p152, %s19, 0
        %s154 = scalar_lea.vmem %s2, %s153
      $region20: #{faster_rcnn_forward.9} parent=11 // pred_fallthru
        _
    $region12: #{faster_rcnn_forward.9} parent=5 // pred_fallthru
      _
    %p155 = scmp.lt.s32.totalorder %s9, 2
    // Predicated region
    $region21: #{faster_rcnn_forward.9} parent=5 // pred_check
      %p156 = pneg %p155
    $region22: #{faster_rcnn_forward.9} parent=5 // pred_check_branch
      %158 = sbr.rel (%p156) target = $region24
    $region23: #{faster_rcnn_forward.9} parent=5 // pred_region
      // Predicated region
      $region25: #{faster_rcnn_forward.9} parent=23 // pred_check
        %p159 = pneg %p41
      $region26: #{faster_rcnn_forward.9} parent=23 // pred_check_branch
        %161 = sbr.rel (%p159) target = $region28
      $region27: #{faster_rcnn_forward.9} parent=23 // pred_region
        %s162 = smul.u32 8, %s16
        %p163 = scmp.lt.s32.totalorder %s162, 15
        %s164 = scalar_select %p163, %s162, 15
        %s165 = smul.addr %s164, 2
        %s166 = smul.addr %s165, 4
        %s167 = scalar_lea.vmem %s0, %s166
        %s168 = smul.u32 8, %s16
      $region28: #{faster_rcnn_forward.9} parent=23 // pred_fallthru
        _
    $region24: #{faster_rcnn_forward.9} parent=5 // pred_fallthru
      _
    %p169 = scmp.le.s32.totalorder 1, %s9
    %p170 = scmp.lt.s32.totalorder %s9, 3
    %p171 = pnand %p169, %p170
    %p172 = pneg %p171
    // Predicated region
    $region29: #{faster_rcnn_forward.9} parent=5 // pred_check
      _
    $region30: #{faster_rcnn_forward.9} parent=5 // pred_check_branch
      %174 = sbr.rel (%p171) target = $region32
    $region31: #{faster_rcnn_forward.9} parent=5 // pred_region
      %s175 = ssub.s32 %s9, 1
      %s176 = smul.u32 8, %s18
      %p177 = scmp.lt.s32.totalorder %s176, 15
      %s178 = scalar_select %p177, %s176, 15
      %s179 = smul.addr %s178, 2
      %s180 = smul.addr %s179, 4
      %s181 = scalar_lea.vmem %s0, %s180
      %p182 = pneg %p47
      %p183 = pneg %p44
      %p184 = scmp.lt.s32.totalorder %s19, 0
      %s185 = scalar_select %p184, %s19, 0
      %s186 = smul.addr %s185, 4
      %s187 = scalar_lea.vmem %s1, %s186
      %p188 = pneg %p73
      %p189 = pneg %p70
      %p190 = scmp.lt.s32.totalorder %s19, 0
      %s191 = scalar_select %p190, %s19, 0
      %s192 = scalar_lea.vmem %s2, %s191
      %p193 = pneg %p99
      %p194 = pneg %p96
      %p195 = pneg %p127
      %p196 = pneg %p124
      %s197 = smul.u32 8, %s18
      %p198 = scmp.lt.s32.totalorder %s197, 15
      %s199 = scalar_select %p198, %s197, 15
      %p200 = scmp.lt.s32.totalorder %s19, 0
      %s201 = scalar_select %p200, %s19, 0
      %s202 = sadd.s32 %s201, %s199
      %s203 = smul.addr %s202, 4
      %s204 = scalar_lea.vmem %s3, %s203
      %s205 = smul.u32 8, %s18
      %p206 = scmp.lt.s32.totalorder %s205, 15
      %s207 = scalar_select %p206, %s205, 15
      %s208 = smul.addr %s207, 2
      %s209 = smul.addr %s208, 4
      %s210 = scalar_lea.vmem %s0, %s209
      %s211 = smul.u32 8, %s18
      %p212 = scmp.lt.s32.totalorder %s19, 0
      %s213 = scalar_select %p212, %s19, 0
      %s214 = smul.addr %s213, 4
      %s215 = scalar_lea.vmem %s1, %s214
      %p216 = scmp.lt.s32.totalorder %s19, 0
      %s217 = scalar_select %p216, %s19, 0
      %s218 = scalar_lea.vmem %s2, %s217
      %s219 = smul.u32 8, %s18
      %p220 = scmp.lt.s32.totalorder %s219, 15
      %s221 = scalar_select %p220, %s219, 15
      %p222 = scmp.lt.s32.totalorder %s19, 0
      %s223 = scalar_select %p222, %s19, 0
      %s224 = sadd.s32 %s223, %s221
      %s225 = smul.addr %s224, 4
      %s226 = scalar_lea.vmem %s3, %s225
      %s227 = smul.u32 8, %s18
      %v229 = vld [vmem:[%s210] sm:$0xff]
      %v230 = vld [vmem:[%s210 + $0x8] sm:$0xff]
      %v231 = vld [vmem:[%s210 + $0x10] sm:$0xff]
      %v232 = vld [vmem:[%s210 + $0x18] sm:$0xff]
      %v233 = vld [vmem:[%s210 + $0x20] sm:$0xff]
      %v234 = vld [vmem:[%s210 + $0x28] sm:$0xff]
      %v235 = vld [vmem:[%s210 + $0x30] sm:$0xff]
      %v236 = vld [vmem:[%s210 + $0x38] sm:$0xff]
      %v237 = vld [vmem:[%s215] sm:$0xf]
      %v238 = vld [vmem:[%s215 + $0x4] sm:$0xf]
      %v239 = vld [vmem:[%s215 + $0x8] sm:$0xf]
      %v240 = vld [vmem:[%s215 + $0xc] sm:$0xf]
      %v241 = vld [vmem:[%s215 + $0x10] sm:$0xf]
      %v242 = vld [vmem:[%s215 + $0x14] sm:$0xf]
      %v243 = vld [vmem:[%s215 + $0x18] sm:$0xf]
      %v244 = vld [vmem:[%s215 + $0x1c] sm:$0xf]
      %v245 = vld [vmem:[%s215 + $0x20] sm:$0xf]
      %v246 = vld [vmem:[%s215 + $0x24] sm:$0xf]
      %v247 = vld [vmem:[%s215 + $0x28] sm:$0xf]
      %v248 = vld [vmem:[%s215 + $0x2c] sm:$0xf]
      %v249 = vld [vmem:[%s215 + $0x30] sm:$0xf]
      %v250 = vld [vmem:[%s215 + $0x34] sm:$0xf]
      %v251 = vld [vmem:[%s215 + $0x38] sm:$0xf]
      %v252 = vld [vmem:[%s215 + $0x3c] sm:$0xf]
      %v253 = vld [vmem:[%s215 + $0x40] sm:$0xf]
      %v254 = vld [vmem:[%s215 + $0x44] sm:$0xf]
      %v255 = vld [vmem:[%s215 + $0x48] sm:$0xf]
      %v256 = vld [vmem:[%s215 + $0x4c] sm:$0xf]
      %v257 = vld [vmem:[%s215 + $0x50] sm:$0xf]
      %v258 = vld [vmem:[%s215 + $0x54] sm:$0xf]
      %v259 = vld [vmem:[%s215 + $0x58] sm:$0xf]
      %v260 = vld [vmem:[%s215 + $0x5c] sm:$0xf]
      %v261 = vld [vmem:[%s215 + $0x60] sm:$0xf]
      %v262 = vld [vmem:[%s215 + $0x64] sm:$0xf]
      %v263 = vld [vmem:[%s215 + $0x68] sm:$0xf]
      %v264 = vld [vmem:[%s215 + $0x6c] sm:$0xf]
      %v265 = vld [vmem:[%s215 + $0x70] sm:$0xf]
      %v266 = vld [vmem:[%s215 + $0x74] sm:$0xf]
      %v267 = vld [vmem:[%s215 + $0x78] sm:$0xf]
      %v268 = vld [vmem:[%s215 + $0x7c] sm:$0xf]
      %v269 = vld [vmem:[%s218] sm:$0x1]
      %v271 = vlaneseq
      %v272 = vshrl.u32 %v271, 7
      %v273 = vsub.s32 0, %v272
      %v274 = vrot.slane %v269, %v273
      %v284 = vunpack.c.l.b16 %v229
      %v285 = vunpack.c.h.b16 %v229
      %v286 = vunpack.c.l.b16 %v230
      %v287 = vunpack.c.h.b16 %v230
      %v288 = vunpack.c.l.b16 %v231
      %v289 = vunpack.c.h.b16 %v231
      %v290 = vunpack.c.l.b16 %v232
      %v291 = vunpack.c.h.b16 %v232
      %v292 = vunpack.c.l.b16 %v233
      %v293 = vunpack.c.h.b16 %v233
      %v294 = vunpack.c.l.b16 %v234
      %v295 = vunpack.c.h.b16 %v234
      %v296 = vunpack.c.l.b16 %v235
      %v297 = vunpack.c.h.b16 %v235
      %v298 = vunpack.c.l.b16 %v236
      %v299 = vunpack.c.h.b16 %v236
      %v300 = vpack.c.b16 %v286, %v284
      %v301 = vpack.c.b16 %v287, %v285
      %v302 = vpack.c.b16 %v290, %v288
      %v303 = vpack.c.b16 %v291, %v289
      %v304 = vpack.c.b16 %v294, %v292
      %v305 = vpack.c.b16 %v295, %v293
      %v306 = vpack.c.b16 %v298, %v296
      %v307 = vpack.c.b16 %v299, %v297
      %v348 = vunpack.c.l.b16 %v237
      %v349 = vunpack.c.l.b16 %v238
      %v350 = vunpack.c.l.b16 %v239
      %v351 = vunpack.c.l.b16 %v240
      %v352 = vunpack.c.l.b16 %v241
      %v353 = vunpack.c.l.b16 %v242
      %v354 = vunpack.c.l.b16 %v243
      %v355 = vunpack.c.l.b16 %v244
      %v356 = vunpack.c.l.b16 %v245
      %v357 = vunpack.c.l.b16 %v246
      %v358 = vunpack.c.l.b16 %v247
      %v359 = vunpack.c.l.b16 %v248
      %v360 = vunpack.c.l.b16 %v249
      %v361 = vunpack.c.l.b16 %v250
      %v362 = vunpack.c.l.b16 %v251
      %v363 = vunpack.c.l.b16 %v252
      %v364 = vunpack.c.l.b16 %v253
      %v365 = vunpack.c.l.b16 %v254
      %v366 = vunpack.c.l.b16 %v255
      %v367 = vunpack.c.l.b16 %v256
      %v368 = vunpack.c.l.b16 %v257
      %v369 = vunpack.c.l.b16 %v258
      %v370 = vunpack.c.l.b16 %v259
      %v371 = vunpack.c.l.b16 %v260
      %v372 = vunpack.c.l.b16 %v261
      %v373 = vunpack.c.l.b16 %v262
      %v374 = vunpack.c.l.b16 %v263
      %v375 = vunpack.c.l.b16 %v264
      %v376 = vunpack.c.l.b16 %v265
      %v377 = vunpack.c.l.b16 %v266
      %v378 = vunpack.c.l.b16 %v267
      %v379 = vunpack.c.l.b16 %v268
      %v380 = vpack.c.b16 %v349, %v348
      %v381 = vpack.c.b16 %v351, %v350
      %v382 = vpack.c.b16 %v353, %v352
      %v383 = vpack.c.b16 %v355, %v354
      %v384 = vpack.c.b16 %v357, %v356
      %v385 = vpack.c.b16 %v359, %v358
      %v386 = vpack.c.b16 %v361, %v360
      %v387 = vpack.c.b16 %v363, %v362
      %v388 = vpack.c.b16 %v365, %v364
      %v389 = vpack.c.b16 %v367, %v366
      %v390 = vpack.c.b16 %v369, %v368
      %v391 = vpack.c.b16 %v371, %v370
      %v392 = vpack.c.b16 %v373, %v372
      %v393 = vpack.c.b16 %v375, %v374
      %v394 = vpack.c.b16 %v377, %v376
      %v395 = vpack.c.b16 %v379, %v378
      %412 = vmatprep.subr.bf16.mxu0 0
      %413 = vmatpush1.bf16.msra.mxu0 %v380
      %414 = vmatprep.subr.bf16.mxu0 0
      %415 = vmatpush1.bf16.msra.mxu0 %v381
      %416 = vmatprep.subr.bf16.mxu0 0
      %417 = vmatpush1.bf16.msra.mxu0 %v382
      %418 = vmatprep.subr.bf16.mxu0 0
      %419 = vmatpush1.bf16.msra.mxu0 %v383
      %420 = vmatprep.subr.bf16.mxu0 0
      %421 = vmatpush1.bf16.msra.mxu0 %v384
      %422 = vmatprep.subr.bf16.mxu0 0
      %423 = vmatpush1.bf16.msra.mxu0 %v385
      %424 = vmatprep.subr.bf16.mxu0 0
      %425 = vmatpush1.bf16.msra.mxu0 %v386
      %426 = vmatprep.subr.bf16.mxu0 0
      %427 = vmatpush1.bf16.msra.mxu0 %v387
      %428 = vmatprep.subr.bf16.mxu0 0
      %429 = vmatpush1.bf16.msra.mxu0 %v388
      %430 = vmatprep.subr.bf16.mxu0 0
      %431 = vmatpush1.bf16.msra.mxu0 %v389
      %432 = vmatprep.subr.bf16.mxu0 0
      %433 = vmatpush1.bf16.msra.mxu0 %v390
      %434 = vmatprep.subr.bf16.mxu0 0
      %435 = vmatpush1.bf16.msra.mxu0 %v391
      %436 = vmatprep.subr.bf16.mxu0 0
      %437 = vmatpush1.bf16.msra.mxu0 %v392
      %438 = vmatprep.subr.bf16.mxu0 0
      %439 = vmatpush1.bf16.msra.mxu0 %v393
      %440 = vmatprep.subr.bf16.mxu0 0
      %441 = vmatpush1.bf16.msra.mxu0 %v394
      %442 = vmatprep.subr.bf16.mxu0 0
      %443 = vmatpush1.bf16.msra.mxu0 %v395
      %444 = vmatprep.mubr.bf16.mxu0 %v301
      %445 = vmatmul.mubr.bf16.gmra.mrb[0].mxu0 %v300
      %v446 = vpop.f32.mrb[0].mxu0
      %v447 = vadd.f32 %v274, %v446
      %v448 = vpop.f32.mrb[0].mxu0
      %v449 = vpop.f32.mrb[0].mxu0
      %v450 = vadd.f32 %v274, %v449
      %v451 = vpop.f32.mrb[0].mxu0
      %452 = vmatprep.mubr.bf16.mxu0 %v303
      %453 = vmatmul.mubr.bf16.gmra.mrb[0].mxu0 %v302
      %v454 = vpop.f32.mrb[0].mxu0
      %v455 = vadd.f32 %v274, %v454
      %v456 = vpop.f32.mrb[0].mxu0
      %v457 = vpop.f32.mrb[0].mxu0
      %v458 = vadd.f32 %v274, %v457
      %v459 = vpop.f32.mrb[0].mxu0
      %460 = vmatprep.mubr.bf16.mxu0 %v305
      %461 = vmatmul.mubr.bf16.gmra.mrb[0].mxu0 %v304
      %v462 = vpop.f32.mrb[0].mxu0
      %v463 = vadd.f32 %v274, %v462
      %v464 = vpop.f32.mrb[0].mxu0
      %v465 = vpop.f32.mrb[0].mxu0
      %v466 = vadd.f32 %v274, %v465
      %v467 = vpop.f32.mrb[0].mxu0
      %468 = vmatprep.mubr.bf16.mxu0 %v307
      %469 = vmatmul.mubr.bf16.gmra.mrb[0].mxu0 %v306
      %v470 = vpop.f32.mrb[0].mxu0
      %v471 = vadd.f32 %v274, %v470
      %v472 = vpop.f32.mrb[0].mxu0
      %v473 = vpop.f32.mrb[0].mxu0
      %v474 = vadd.f32 %v274, %v473
      %v475 = vpop.f32.mrb[0].mxu0
      %476 = vdwg.mxu0
      %v477 = vmax.f32 %v447, 0.0
      %v478 = vmax.f32 %v450, 0.0
      %v479 = vmax.f32 %v455, 0.0
      %v480 = vmax.f32 %v458, 0.0
      %v481 = vmax.f32 %v463, 0.0
      %v482 = vmax.f32 %v466, 0.0
      %v483 = vmax.f32 %v471, 0.0
      %v484 = vmax.f32 %v474, 0.0
      %v485 = vpack.c.bf16 %v478, %v477
      %v486 = vpack.c.bf16 %v480, %v479
      %v487 = vpack.c.bf16 %v482, %v481
      %v488 = vpack.c.bf16 %v484, %v483
      %v493 = vunpack.c.l.b16 %v485
      %v494 = vunpack.c.h.b16 %v485
      %v495 = vunpack.c.l.b16 %v486
      %v496 = vunpack.c.h.b16 %v486
      %v497 = vunpack.c.l.b16 %v487
      %v498 = vunpack.c.h.b16 %v487
      %v499 = vunpack.c.l.b16 %v488
      %v500 = vunpack.c.h.b16 %v488
      %v501 = vpack.c.b16 %v493, %v493
      %v502 = vpack.c.b16 %v494, %v494
      %v503 = vpack.c.b16 %v495, %v495
      %v504 = vpack.c.b16 %v496, %v496
      %v505 = vpack.c.b16 %v497, %v497
      %v506 = vpack.c.b16 %v498, %v498
      %v507 = vpack.c.b16 %v499, %v499
      %v508 = vpack.c.b16 %v500, %v500
      %517 = vst [vmem:[%s226] sm:$0xf] %v501
      %518 = vst [vmem:[%s226 + $0x4] sm:$0xf] %v502
      %519 = vst [vmem:[%s226 + $0x8] sm:$0xf] %v503
      %520 = vst [vmem:[%s226 + $0xc] sm:$0xf] %v504
      %521 = vst [vmem:[%s226 + $0x10] sm:$0xf] %v505
      %522 = vst [vmem:[%s226 + $0x14] sm:$0xf] %v506
      %523 = vst [vmem:[%s226 + $0x18] sm:$0xf] %v507
      %524 = vst [vmem:[%s226 + $0x1c] sm:$0xf] %v508
      %s525 = smul.u32 8, %s18
      %p526 = scmp.lt.s32.totalorder %s525, 15
      %s527 = scalar_select %p526, %s525, 15
      %p528 = scmp.lt.s32.totalorder %s19, 0
      %s529 = scalar_select %p528, %s19, 0
      %s530 = sadd.s32 %s529, %s527
      %s531 = smul.addr %s530, 4
      %s532 = scalar_lea.vmem %s3, %s531
      // Predicated region
      $region33: #{faster_rcnn_forward.9} parent=31 // pred_check
        %p533 = pneg %p124
      $region34: #{faster_rcnn_forward.9} parent=31 // pred_check_branch
        %535 = sbr.rel (%p533) target = $region36
      $region35: #{faster_rcnn_forward.9} parent=31 // pred_region
        %s536 = smul.u32 8, %s18
      $region36: #{faster_rcnn_forward.9} parent=31 // pred_fallthru
        _
    $region32: #{faster_rcnn_forward.9} parent=5 // pred_fallthru
      _
    %p537 = scmp.le.s32.totalorder 2, %s9
    // Predicated region
    $region37: #{faster_rcnn_forward.9} parent=5 // pred_check
      %p538 = pneg %p537
    $region38: #{faster_rcnn_forward.9} parent=5 // pred_check_branch
      %540 = sbr.rel (%p538) target = $region40
    $region39: #{faster_rcnn_forward.9} parent=5 // pred_region
      %s541 = ssub.s32 %s9, 2
      // Predicated region
      $region41: #{faster_rcnn_forward.9} parent=39 // pred_check
        %p542 = pneg %p130
      $region42: #{faster_rcnn_forward.9} parent=39 // pred_check_branch
        %544 = sbr.rel (%p542) target = $region44
      $region43: #{faster_rcnn_forward.9} parent=39 // pred_region
        %s545 = smul.u32 8, %s20
        %p546 = scmp.lt.s32.totalorder %s545, 15
        %s547 = scalar_select %p546, %s545, 15
        %p548 = scmp.lt.s32.totalorder %s21, 0
        %s549 = scalar_select %p548, %s21, 0
        %s550 = sadd.s32 %s549, %s547
        %s551 = smul.addr %s550, 4
        %s552 = scalar_lea.vmem %s3, %s551
      $region44: #{faster_rcnn_forward.9} parent=39 // pred_fallthru
        _
    $region40: #{faster_rcnn_forward.9} parent=5 // pred_fallthru
      _
  $region6: #{faster_rcnn_forward.9} parent=0 // loop_footer
    %s13 = sadd.s32 1, %s9
  $region7: #{faster_rcnn_forward.9} parent=0 // loop_footer_branch
    %8 = sbr.rel target = $region3
  $region8: #{faster_rcnn_forward.9} parent=0 // loop_exit
    _

// kernel: faster_rcnn_forward.10
$region0: #{faster_rcnn_forward.10}
  #allocation0 [shape = 'u32[]', space=smem, size = 0x4, offset = 0x4, fixed_abs, tag = 'smem constant byte address 0x4 - core index']
  #allocation1 [shape = 'u32[144,128]{1,0:T(1,128)}', space=vmem, size = 0x12000, scoped, tag = 'internal scratch']
  %s0 = inlined_call_operand.vmem [shape: bf16[32,384], index: 0, kind: input, shape index: {}]
  %s1 = inlined_call_operand.vmem [shape: bf16[384,128], index: 1, kind: input, shape index: {}]
  %s2 = inlined_call_operand.vmem [shape: f32[1,128], index: 2, kind: input, shape index: {}]
  %s3 = inlined_call_operand.vmem [shape: bf16[32,128], index: 3, kind: output, shape index: {}]
  %s4 = sld [smem:[#allocation0]]
  $region45: #{faster_rcnn_forward.10} parent=0
    _
  %s6 = ssub.s32 1, %s4
  %s7 = scalar_select 0, %s6, %s4
  loop: start=0, step=1, limit=4
  $region2: #{faster_rcnn_forward.10} parent=0 // loop_pre_header
    _
  $region3: #{faster_rcnn_forward.10} parent=0 // loop_header
    %s9 = sphi 0, %s13
    %p10 = scmp.ge.s32.totalorder %s9, 4
    %s16 = sphi 0, %s28
    %s17 = sphi 0, %s24
    %s18 = sphi 0, %s16
    %s19 = sphi 0, %s17
    %s20 = sphi 0, %s18
    %s21 = sphi 0, %s19
    %s31 = sphi 0, %s33
    %s34 = sphi 0, %s31
    %s35 = sphi 0, %s34
    %s51 = sphi 0, %s35
    %s57 = sphi 0, %s59
    %s60 = sphi 0, %s57
    %s61 = sphi 0, %s60
    %s77 = sphi 0, %s61
    %s83 = sphi 0, %s85
    %s86 = sphi 0, %s83
    %s87 = sphi 0, %s86
    %s103 = sphi 0, %s87
    %s111 = sphi 0, %s113
    %s114 = sphi 0, %s111
    %s115 = sphi 0, %s114
    %s131 = sphi 0, %s115
  $region4: #{faster_rcnn_forward.10} parent=0 // loop_header_branch
    %12 = sbr.rel (%p10) target = $region8
  $region5: #{faster_rcnn_forward.10} parent=0 // loop_body
    %s14 = ssub.s32 %s9, 1
    %s15 = ssub.s32 %s9, 2
    %s22 = sadd.s32 1, %s17
    %p23 = scmp.ge.s32.totalorder %s22, 1
    %s24 = scalar_select %p23, 0, %s22
    %s25 = sadd.s32 1, %s16
    %s26 = scalar_select %p23, %s25, %s16
    %p27 = scmp.ge.s32.totalorder %s26, 2
    %s28 = scalar_select %p27, 0, %s26
    %s29 = ssub.s32 %s16, %s28
    %p30 = scmp.eq.s32.totalorder %s29, 0
    %s32 = sadd.s32 %s31, 1
    %s33 = scalar_select %p30, %s31, %s32
    %p36 = pneg %p30
    %p37 = scmp.eq.s32.totalorder %s9, 1
    %p38 = por %p36, %p37
    %p39 = scmp.ne.s32.totalorder %s31, %s34
    %p40 = scmp.eq.s32.totalorder %s9, 0
    %p41 = por %p39, %p40
    %p42 = scmp.ne.s32.totalorder %s31, %s34
    %p43 = scmp.eq.s32.totalorder %s14, 1
    %p44 = por %p42, %p43
    %p45 = scmp.ne.s32.totalorder %s34, %s35
    %p46 = scmp.eq.s32.totalorder %s14, 0
    %p47 = por %p45, %p46
    %p48 = scmp.ne.s32.totalorder %s34, %s35
    %p49 = scmp.eq.s32.totalorder %s15, 1
    %p50 = por %p48, %p49
    %p52 = scmp.ne.s32.totalorder %s35, %s51
    %p53 = scmp.eq.s32.totalorder %s15, 0
    %p54 = por %p52, %p53
    %s55 = ssub.s32 %s17, %s24
    %p56 = scmp.eq.s32.totalorder %s55, 0
    %s58 = sadd.s32 %s57, 1
    %s59 = scalar_select %p56, %s57, %s58
    %p62 = pneg %p56
    %p63 = scmp.eq.s32.totalorder %s9, 1
    %p64 = por %p62, %p63
    %p65 = scmp.ne.s32.totalorder %s57, %s60
    %p66 = scmp.eq.s32.totalorder %s9, 0
    %p67 = por %p65, %p66
    %p68 = scmp.ne.s32.totalorder %s57, %s60
    %p69 = scmp.eq.s32.totalorder %s14, 1
    %p70 = por %p68, %p69
    %p71 = scmp.ne.s32.totalorder %s60, %s61
    %p72 = scmp.eq.s32.totalorder %s14, 0
    %p73 = por %p71, %p72
    %p74 = scmp.ne.s32.totalorder %s60, %s61
    %p75 = scmp.eq.s32.totalorder %s15, 1
    %p76 = por %p74, %p75
    %p78 = scmp.ne.s32.totalorder %s61, %s77
    %p79 = scmp.eq.s32.totalorder %s15, 0
    %p80 = por %p78, %p79
    %s81 = ssub.s32 %s17, %s24
    %p82 = scmp.eq.s32.totalorder %s81, 0
    %s84 = sadd.s32 %s83, 1
    %s85 = scalar_select %p82, %s83, %s84
    %p88 = pneg %p82
    %p89 = scmp.eq.s32.totalorder %s9, 1
    %p90 = por %p88, %p89
    %p91 = scmp.ne.s32.totalorder %s83, %s86
    %p92 = scmp.eq.s32.totalorder %s9, 0
    %p93 = por %p91, %p92
    %p94 = scmp.ne.s32.totalorder %s83, %s86
    %p95 = scmp.eq.s32.totalorder %s14, 1
    %p96 = por %p94, %p95
    %p97 = scmp.ne.s32.totalorder %s86, %s87
    %p98 = scmp.eq.s32.totalorder %s14, 0
    %p99 = por %p97, %p98
    %p100 = scmp.ne.s32.totalorder %s86, %s87
    %p101 = scmp.eq.s32.totalorder %s15, 1
    %p102 = por %p100, %p101
    %p104 = scmp.ne.s32.totalorder %s87, %s103
    %p105 = scmp.eq.s32.totalorder %s15, 0
    %p106 = por %p104, %p105
    %s107 = ssub.s32 %s16, %s28
    %s108 = ssub.s32 %s17, %s24
    %s109 = sor.u32 %s107, %s108
    %p110 = scmp.eq.s32.totalorder %s109, 0
    %s112 = sadd.s32 %s111, 1
    %s113 = scalar_select %p110, %s111, %s112
    %p116 = pneg %p110
    %p117 = scmp.eq.s32.totalorder %s9, 1
    %p118 = por %p116, %p117
    %p119 = scmp.ne.s32.totalorder %s111, %s114
    %p120 = scmp.eq.s32.totalorder %s9, 0
    %p121 = por %p119, %p120
    %p122 = scmp.ne.s32.totalorder %s111, %s114
    %p123 = scmp.eq.s32.totalorder %s14, 1
    %p124 = por %p122, %p123
    %p125 = scmp.ne.s32.totalorder %s114, %s115
    %p126 = scmp.eq.s32.totalorder %s14, 0
    %p127 = por %p125, %p126
    %p128 = scmp.ne.s32.totalorder %s114, %s115
    %p129 = scmp.eq.s32.totalorder %s15, 1
    %p130 = por %p128, %p129
    %p132 = scmp.ne.s32.totalorder %s115, %s131
    %p133 = scmp.eq.s32.totalorder %s15, 0
    %p134 = por %p132, %p133
    %p135 = scmp.le.s32.totalorder 1, %s9
    %p136 = scmp.lt.s32.totalorder %s9, 3
    %p137 = pnand %p135, %p136
    %p138 = pneg %p137
    // Predicated region
    $region9: #{faster_rcnn_forward.10} parent=5 // pred_check
      _
    $region10: #{faster_rcnn_forward.10} parent=5 // pred_check_branch
      %140 = sbr.rel (%p137) target = $region12
    $region11: #{faster_rcnn_forward.10} parent=5 // pred_region
      %s141 = ssub.s32 %s9, 1
      // Predicated region
      $region13: #{faster_rcnn_forward.10} parent=11 // pred_check
        %p142 = pneg %p73
      $region14: #{faster_rcnn_forward.10} parent=11 // pred_check_branch
        %144 = sbr.rel (%p142) target = $region16
      $region15: #{faster_rcnn_forward.10} parent=11 // pred_region
        %p145 = scmp.lt.s32.totalorder %s19, 0
        %s146 = scalar_select %p145, %s19, 0
        %s147 = smul.addr %s146, 4
        %s148 = scalar_lea.vmem %s1, %s147
      $region16: #{faster_rcnn_forward.10} parent=11 // pred_fallthru
        _
      // Predicated region
      $region17: #{faster_rcnn_forward.10} parent=11 // pred_check
        %p149 = pneg %p99
      $region18: #{faster_rcnn_forward.10} parent=11 // pred_check_branch
        %151 = sbr.rel (%p149) target = $region20
      $region19: #{faster_rcnn_forward.10} parent=11 // pred_region
        %p152 = scmp.lt.s32.totalorder %s19, 0
        %s153 = scalar_select %p152, %s19, 0
        %s154 = scalar_lea.vmem %s2, %s153
      $region20: #{faster_rcnn_forward.10} parent=11 // pred_fallthru
        _
    $region12: #{faster_rcnn_forward.10} parent=5 // pred_fallthru
      _
    %p155 = scmp.lt.s32.totalorder %s9, 2
    // Predicated region
    $region21: #{faster_rcnn_forward.10} parent=5 // pred_check
      %p156 = pneg %p155
    $region22: #{faster_rcnn_forward.10} parent=5 // pred_check_branch
      %158 = sbr.rel (%p156) target = $region24
    $region23: #{faster_rcnn_forward.10} parent=5 // pred_region
      // Predicated region
      $region25: #{faster_rcnn_forward.10} parent=23 // pred_check
        %p159 = pneg %p41
      $region26: #{faster_rcnn_forward.10} parent=23 // pred_check_branch
        %161 = sbr.rel (%p159) target = $region28
      $region27: #{faster_rcnn_forward.10} parent=23 // pred_region
        %s162 = smul.u32 2, %s16
        %p163 = scmp.lt.s32.totalorder %s162, 3
        %s164 = scalar_select %p163, %s162, 3
        %s165 = smul.addr %s164, 3
        %s166 = smul.addr %s165, 4
        %s167 = scalar_lea.vmem %s0, %s166
        %s168 = smul.u32 2, %s16
      $region28: #{faster_rcnn_forward.10} parent=23 // pred_fallthru
        _
    $region24: #{faster_rcnn_forward.10} parent=5 // pred_fallthru
      _
    %p169 = scmp.le.s32.totalorder 1, %s9
    %p170 = scmp.lt.s32.totalorder %s9, 3
    %p171 = pnand %p169, %p170
    %p172 = pneg %p171
    // Predicated region
    $region29: #{faster_rcnn_forward.10} parent=5 // pred_check
      _
    $region30: #{faster_rcnn_forward.10} parent=5 // pred_check_branch
      %174 = sbr.rel (%p171) target = $region32
    $region31: #{faster_rcnn_forward.10} parent=5 // pred_region
      %s175 = ssub.s32 %s9, 1
      %s176 = smul.u32 2, %s18
      %p177 = scmp.lt.s32.totalorder %s176, 3
      %s178 = scalar_select %p177, %s176, 3
      %s179 = smul.addr %s178, 3
      %s180 = smul.addr %s179, 4
      %s181 = scalar_lea.vmem %s0, %s180
      %p182 = pneg %p47
      %p183 = pneg %p44
      %p184 = scmp.lt.s32.totalorder %s19, 0
      %s185 = scalar_select %p184, %s19, 0
      %s186 = smul.addr %s185, 4
      %s187 = scalar_lea.vmem %s1, %s186
      %p188 = pneg %p73
      %p189 = pneg %p70
      %p190 = scmp.lt.s32.totalorder %s19, 0
      %s191 = scalar_select %p190, %s19, 0
      %s192 = scalar_lea.vmem %s2, %s191
      %p193 = pneg %p99
      %p194 = pneg %p96
      %p195 = pneg %p127
      %p196 = pneg %p124
      %s197 = smul.u32 2, %s18
      %p198 = scmp.lt.s32.totalorder %s197, 3
      %s199 = scalar_select %p198, %s197, 3
      %p200 = scmp.lt.s32.totalorder %s19, 0
      %s201 = scalar_select %p200, %s19, 0
      %s202 = sadd.s32 %s201, %s199
      %s203 = smul.addr %s202, 4
      %s204 = scalar_lea.vmem %s3, %s203
      %s205 = smul.u32 2, %s18
      %p206 = scmp.lt.s32.totalorder %s205, 3
      %s207 = scalar_select %p206, %s205, 3
      %s208 = smul.addr %s207, 3
      %s209 = smul.addr %s208, 4
      %s210 = scalar_lea.vmem %s0, %s209
      %s211 = smul.u32 2, %s18
      %p212 = scmp.lt.s32.totalorder %s19, 0
      %s213 = scalar_select %p212, %s19, 0
      %s214 = smul.addr %s213, 4
      %s215 = scalar_lea.vmem %s1, %s214
      %p216 = scmp.lt.s32.totalorder %s19, 0
      %s217 = scalar_select %p216, %s19, 0
      %s218 = scalar_lea.vmem %s2, %s217
      %s219 = smul.u32 2, %s18
      %p220 = scmp.lt.s32.totalorder %s219, 3
      %s221 = scalar_select %p220, %s219, 3
      %p222 = scmp.lt.s32.totalorder %s19, 0
      %s223 = scalar_select %p222, %s19, 0
      %s224 = sadd.s32 %s223, %s221
      %s225 = smul.addr %s224, 4
      %s226 = scalar_lea.vmem %s3, %s225
      %s227 = smul.u32 2, %s18
      %v229 = vld [vmem:[%s210] sm:$0xff]
      %v230 = vld [vmem:[%s210 + $0x8] sm:$0xf]
      %v231 = vld [vmem:[%s210 + $0xc] sm:$0xff]
      %v232 = vld [vmem:[%s210 + $0x14] sm:$0xf]
      %v233 = vld [vmem:[%s215] sm:$0xf]
      %v234 = vld [vmem:[%s215 + $0x4] sm:$0xf]
      %v235 = vld [vmem:[%s215 + $0x8] sm:$0xf]
      %v236 = vld [vmem:[%s215 + $0xc] sm:$0xf]
      %v237 = vld [vmem:[%s215 + $0x10] sm:$0xf]
      %v238 = vld [vmem:[%s215 + $0x14] sm:$0xf]
      %v239 = vld [vmem:[%s215 + $0x18] sm:$0xf]
      %v240 = vld [vmem:[%s215 + $0x1c] sm:$0xf]
      %v241 = vld [vmem:[%s215 + $0x20] sm:$0xf]
      %v242 = vld [vmem:[%s215 + $0x24] sm:$0xf]
      %v243 = vld [vmem:[%s215 + $0x28] sm:$0xf]
      %v244 = vld [vmem:[%s215 + $0x2c] sm:$0xf]
      %v245 = vld [vmem:[%s215 + $0x30] sm:$0xf]
      %v246 = vld [vmem:[%s215 + $0x34] sm:$0xf]
      %v247 = vld [vmem:[%s215 + $0x38] sm:$0xf]
      %v248 = vld [vmem:[%s215 + $0x3c] sm:$0xf]
      %v249 = vld [vmem:[%s215 + $0x40] sm:$0xf]
      %v250 = vld [vmem:[%s215 + $0x44] sm:$0xf]
      %v251 = vld [vmem:[%s215 + $0x48] sm:$0xf]
      %v252 = vld [vmem:[%s215 + $0x4c] sm:$0xf]
      %v253 = vld [vmem:[%s215 + $0x50] sm:$0xf]
      %v254 = vld [vmem:[%s215 + $0x54] sm:$0xf]
      %v255 = vld [vmem:[%s215 + $0x58] sm:$0xf]
      %v256 = vld [vmem:[%s215 + $0x5c] sm:$0xf]
      %v257 = vld [vmem:[%s215 + $0x60] sm:$0xf]
      %v258 = vld [vmem:[%s215 + $0x64] sm:$0xf]
      %v259 = vld [vmem:[%s215 + $0x68] sm:$0xf]
      %v260 = vld [vmem:[%s215 + $0x6c] sm:$0xf]
      %v261 = vld [vmem:[%s215 + $0x70] sm:$0xf]
      %v262 = vld [vmem:[%s215 + $0x74] sm:$0xf]
      %v263 = vld [vmem:[%s215 + $0x78] sm:$0xf]
      %v264 = vld [vmem:[%s215 + $0x7c] sm:$0xf]
      %v265 = vld [vmem:[%s215 + $0x80] sm:$0xf]
      %v266 = vld [vmem:[%s215 + $0x84] sm:$0xf]
      %v267 = vld [vmem:[%s215 + $0x88] sm:$0xf]
      %v268 = vld [vmem:[%s215 + $0x8c] sm:$0xf]
      %v269 = vld [vmem:[%s215 + $0x90] sm:$0xf]
      %v270 = vld [vmem:[%s215 + $0x94] sm:$0xf]
      %v271 = vld [vmem:[%s215 + $0x98] sm:$0xf]
      %v272 = vld [vmem:[%s215 + $0x9c] sm:$0xf]
      %v273 = vld [vmem:[%s215 + $0xa0] sm:$0xf]
      %v274 = vld [vmem:[%s215 + $0xa4] sm:$0xf]
      %v275 = vld [vmem:[%s215 + $0xa8] sm:$0xf]
      %v276 = vld [vmem:[%s215 + $0xac] sm:$0xf]
      %v277 = vld [vmem:[%s215 + $0xb0] sm:$0xf]
      %v278 = vld [vmem:[%s215 + $0xb4] sm:$0xf]
      %v279 = vld [vmem:[%s215 + $0xb8] sm:$0xf]
      %v280 = vld [vmem:[%s215 + $0xbc] sm:$0xf]
      %v281 = vld [vmem:[%s218] sm:$0x1]
      %v283 = vlaneseq
      %v284 = vshrl.u32 %v283, 7
      %v285 = vsub.s32 0, %v284
      %v286 = vrot.slane %v281, %v285
      %v292 = vunpack.c.l.b16 %v229
      %v293 = vunpack.c.h.b16 %v229
      %v294 = vunpack.c.l.b16 %v230
      %v295 = vunpack.c.l.b16 %v231
      %v296 = vunpack.c.h.b16 %v231
      %v297 = vunpack.c.l.b16 %v232
      %v298 = vpack.c.b16 %v295, %v292
      %v299 = vpack.c.b16 %v296, %v293
      %v300 = vpack.c.b16 %v297, %v294
      %v352 = vunpack.c.l.b16 %v233
      %v353 = vunpack.c.l.b16 %v234
      %v354 = vunpack.c.l.b16 %v235
      %v355 = vunpack.c.l.b16 %v236
      %v356 = vunpack.c.l.b16 %v237
      %v357 = vunpack.c.l.b16 %v238
      %v358 = vunpack.c.l.b16 %v239
      %v359 = vunpack.c.l.b16 %v240
      %v360 = vunpack.c.l.b16 %v241
      %v361 = vunpack.c.l.b16 %v242
      %v362 = vunpack.c.l.b16 %v243
      %v363 = vunpack.c.l.b16 %v244
      %v364 = vunpack.c.l.b16 %v245
      %v365 = vunpack.c.l.b16 %v246
      %v366 = vunpack.c.l.b16 %v247
      %v367 = vunpack.c.l.b16 %v248
      %v368 = vunpack.c.l.b16 %v249
      %v369 = vunpack.c.l.b16 %v250
      %v370 = vunpack.c.l.b16 %v251
      %v371 = vunpack.c.l.b16 %v252
      %v372 = vunpack.c.l.b16 %v253
      %v373 = vunpack.c.l.b16 %v254
      %v374 = vunpack.c.l.b16 %v255
      %v375 = vunpack.c.l.b16 %v256
      %v376 = vunpack.c.l.b16 %v257
      %v377 = vunpack.c.l.b16 %v258
      %v378 = vunpack.c.l.b16 %v259
      %v379 = vunpack.c.l.b16 %v260
      %v380 = vunpack.c.l.b16 %v261
      %v381 = vunpack.c.l.b16 %v262
      %v382 = vunpack.c.l.b16 %v263
      %v383 = vunpack.c.l.b16 %v264
      %v384 = vunpack.c.l.b16 %v265
      %v385 = vunpack.c.l.b16 %v266
      %v386 = vunpack.c.l.b16 %v267
      %v387 = vunpack.c.l.b16 %v268
      %v388 = vunpack.c.l.b16 %v269
      %v389 = vunpack.c.l.b16 %v270
      %v390 = vunpack.c.l.b16 %v271
      %v391 = vunpack.c.l.b16 %v272
      %v392 = vunpack.c.l.b16 %v273
      %v393 = vunpack.c.l.b16 %v274
      %v394 = vunpack.c.l.b16 %v275
      %v395 = vunpack.c.l.b16 %v276
      %v396 = vunpack.c.l.b16 %v277
      %v397 = vunpack.c.l.b16 %v278
      %v398 = vunpack.c.l.b16 %v279
      %v399 = vunpack.c.l.b16 %v280
      %v400 = vpack.c.b16 %v353, %v352
      %v401 = vpack.c.b16 %v355, %v354
      %v402 = vpack.c.b16 %v357, %v356
      %v403 = vpack.c.b16 %v359, %v358
      %v404 = vpack.c.b16 %v361, %v360
      %v405 = vpack.c.b16 %v363, %v362
      %v406 = vpack.c.b16 %v365, %v364
      %v407 = vpack.c.b16 %v367, %v366
      %v408 = vpack.c.b16 %v369, %v368
      %v409 = vpack.c.b16 %v371, %v370
      %v410 = vpack.c.b16 %v373, %v372
      %v411 = vpack.c.b16 %v375, %v374
      %v412 = vpack.c.b16 %v377, %v376
      %v413 = vpack.c.b16 %v379, %v378
      %v414 = vpack.c.b16 %v381, %v380
      %v415 = vpack.c.b16 %v383, %v382
      %v416 = vpack.c.b16 %v385, %v384
      %v417 = vpack.c.b16 %v387, %v386
      %v418 = vpack.c.b16 %v389, %v388
      %v419 = vpack.c.b16 %v391, %v390
      %v420 = vpack.c.b16 %v393, %v392
      %v421 = vpack.c.b16 %v395, %v394
      %v422 = vpack.c.b16 %v397, %v396
      %v423 = vpack.c.b16 %v399, %v398
      %448 = vmatprep.subr.bf16.mxu0 0
      %449 = vmatpush1.bf16.msra.mxu0 %v400
      %450 = vmatprep.subr.bf16.mxu0 0
      %451 = vmatpush1.bf16.msra.mxu0 %v401
      %452 = vmatprep.subr.bf16.mxu0 0
      %453 = vmatpush1.bf16.msra.mxu0 %v402
      %454 = vmatprep.subr.bf16.mxu0 0
      %455 = vmatpush1.bf16.msra.mxu0 %v403
      %456 = vmatprep.subr.bf16.mxu0 0
      %457 = vmatpush1.bf16.msra.mxu0 %v404
      %458 = vmatprep.subr.bf16.mxu0 0
      %459 = vmatpush1.bf16.msra.mxu0 %v405
      %460 = vmatprep.subr.bf16.mxu0 0
      %461 = vmatpush1.bf16.msra.mxu0 %v406
      %462 = vmatprep.subr.bf16.mxu0 0
      %463 = vmatpush1.bf16.msra.mxu0 %v407
      %464 = vmatprep.subr.bf16.mxu0 0
      %465 = vmatpush1.bf16.msra.mxu0 %v408
      %466 = vmatprep.subr.bf16.mxu0 0
      %467 = vmatpush1.bf16.msra.mxu0 %v409
      %468 = vmatprep.subr.bf16.mxu0 0
      %469 = vmatpush1.bf16.msra.mxu0 %v410
      %470 = vmatprep.subr.bf16.mxu0 0
      %471 = vmatpush1.bf16.msra.mxu0 %v411
      %472 = vmatprep.subr.bf16.mxu0 0
      %473 = vmatpush1.bf16.msra.mxu0 %v412
      %474 = vmatprep.subr.bf16.mxu0 0
      %475 = vmatpush1.bf16.msra.mxu0 %v413
      %476 = vmatprep.subr.bf16.mxu0 0
      %477 = vmatpush1.bf16.msra.mxu0 %v414
      %478 = vmatprep.subr.bf16.mxu0 0
      %479 = vmatpush1.bf16.msra.mxu0 %v415
      %480 = vmatprep.mubr.bf16.mxu0 %v299
      %481 = vmatmul.mubr.bf16.gmra.mrb[0].mxu0 %v298
      %v482 = vpop.f32.mrb[0].mxu0
      %v483 = vadd.f32 %v286, %v482
      %v484 = vpop.f32.mrb[0].mxu0
      %v485 = vpop.f32.mrb[0].mxu0
      %v486 = vadd.f32 %v286, %v485
      %v487 = vpop.f32.mrb[0].mxu0
      %488 = vdwg.mxu0
      %489 = vmatprep.subr.bf16.mxu0 0
      %490 = vmatpush1.bf16.msra.mxu0 %v416
      %491 = vmatprep.subr.bf16.mxu0 0
      %492 = vmatpush1.bf16.msra.mxu0 %v417
      %493 = vmatprep.subr.bf16.mxu0 0
      %494 = vmatpush1.bf16.msra.mxu0 %v418
      %495 = vmatprep.subr.bf16.mxu0 0
      %496 = vmatpush1.bf16.msra.mxu0 %v419
      %497 = vmatprep.subr.bf16.mxu0 0
      %498 = vmatpush1.bf16.msra.mxu0 %v420
      %499 = vmatprep.subr.bf16.mxu0 0
      %500 = vmatpush1.bf16.msra.mxu0 %v421
      %501 = vmatprep.subr.bf16.mxu0 0
      %502 = vmatpush1.bf16.msra.mxu0 %v422
      %503 = vmatprep.subr.bf16.mxu0 0
      %504 = vmatpush1.bf16.msra.mxu0 %v423
      %505 = vmatprep.subr.bf16.mxu0 0
      %506 = vmatpush1.bf16.msra.mxu0 0
      %507 = vmatprep.subr.bf16.mxu0 0
      %508 = vmatpush1.bf16.msra.mxu0 0
      %509 = vmatprep.subr.bf16.mxu0 0
      %510 = vmatpush1.bf16.msra.mxu0 0
      %511 = vmatprep.subr.bf16.mxu0 0
      %512 = vmatpush1.bf16.msra.mxu0 0
      %513 = vmatprep.subr.bf16.mxu0 0
      %514 = vmatpush1.bf16.msra.mxu0 0
      %515 = vmatprep.subr.bf16.mxu0 0
      %516 = vmatpush1.bf16.msra.mxu0 0
      %517 = vmatprep.subr.bf16.mxu0 0
      %518 = vmatpush1.bf16.msra.mxu0 0
      %519 = vmatprep.subr.bf16.mxu0 0
      %520 = vmatpush1.bf16.msra.mxu0 0
      %521 = vmatprep.mubr.bf16.mxu0 0
      %522 = vmatmul.mubr.bf16.gmra.mrb[0].mxu0 %v300
      %v523 = vpop.f32.mrb[0].mxu0
      %v524 = vadd.f32 %v483, %v523
      %v525 = vpop.f32.mrb[0].mxu0
      %v526 = vpop.f32.mrb[0].mxu0
      %v527 = vadd.f32 %v486, %v526
      %v528 = vpop.f32.mrb[0].mxu0
      %529 = vdwg.mxu0
      %v530 = vmax.f32 %v524, 0.0
      %v531 = vmax.f32 %v527, 0.0
      %v532 = vpack.c.bf16 %v531, %v530
      %v534 = vunpack.c.l.b16 %v532
      %v535 = vunpack.c.h.b16 %v532
      %v536 = vpack.c.b16 %v534, %v534
      %v537 = vpack.c.b16 %v535, %v535
      %540 = vst [vmem:[%s226] sm:$0xf] %v536
      %541 = vst [vmem:[%s226 + $0x4] sm:$0xf] %v537
      %s542 = smul.u32 2, %s18
      %p543 = scmp.lt.s32.totalorder %s542, 3
      %s544 = scalar_select %p543, %s542, 3
      %p545 = scmp.lt.s32.totalorder %s19, 0
      %s546 = scalar_select %p545, %s19, 0
      %s547 = sadd.s32 %s546, %s544
      %s548 = smul.addr %s547, 4
      %s549 = scalar_lea.vmem %s3, %s548
      // Predicated region
      $region33: #{faster_rcnn_forward.10} parent=31 // pred_check
        %p550 = pneg %p124
      $region34: #{faster_rcnn_forward.10} parent=31 // pred_check_branch
        %552 = sbr.rel (%p550) target = $region36
      $region35: #{faster_rcnn_forward.10} parent=31 // pred_region
        %s553 = smul.u32 2, %s18
      $region36: #{faster_rcnn_forward.10} parent=31 // pred_fallthru
        _
    $region32: #{faster_rcnn_forward.10} parent=5 // pred_fallthru
      _
    %p554 = scmp.le.s32.totalorder 2, %s9
    // Predicated region
    $region37: #{faster_rcnn_forward.10} parent=5 // pred_check
      %p555 = pneg %p554
    $region38: #{faster_rcnn_forward.10} parent=5 // pred_check_branch
      %557 = sbr.rel (%p555) target = $region40
    $region39: #{faster_rcnn_forward.10} parent=5 // pred_region
      %s558 = ssub.s32 %s9, 2
      // Predicated region
      $region41: #{faster_rcnn_forward.10} parent=39 // pred_check
        %p559 = pneg %p130
      $region42: #{faster_rcnn_forward.10} parent=39 // pred_check_branch
        %561 = sbr.rel (%p559) target = $region44
      $region43: #{faster_rcnn_forward.10} parent=39 // pred_region
        %s562 = smul.u32 2, %s20
        %p563 = scmp.lt.s32.totalorder %s562, 3
        %s564 = scalar_select %p563, %s562, 3
        %p565 = scmp.lt.s32.totalorder %s21, 0
        %s566 = scalar_select %p565, %s21, 0
        %s567 = sadd.s32 %s566, %s564
        %s568 = smul.addr %s567, 4
        %s569 = scalar_lea.vmem %s3, %s568
      $region44: #{faster_rcnn_forward.10} parent=39 // pred_fallthru
        _
    $region40: #{faster_rcnn_forward.10} parent=5 // pred_fallthru
      _
  $region6: #{faster_rcnn_forward.10} parent=0 // loop_footer
    %s13 = sadd.s32 1, %s9
  $region7: #{faster_rcnn_forward.10} parent=0 // loop_footer_branch
    %8 = sbr.rel target = $region3
  $region8: #{faster_rcnn_forward.10} parent=0 // loop_exit
    _

// kernel: faster_rcnn_forward.12
$region0: #{faster_rcnn_forward.12}
  #allocation0 [shape = 'u32[]', space=smem, size = 0x4, offset = 0x4, fixed_abs, tag = 'smem constant byte address 0x4 - core index']
  #allocation1 [shape = 'u32[144,128]{1,0:T(1,128)}', space=vmem, size = 0x12000, scoped, tag = 'internal scratch']
  %s0 = inlined_call_operand.vmem [shape: bf16[32,128], index: 0, kind: input, shape index: {}]
  %s1 = inlined_call_operand.vmem [shape: bf16[128,128], index: 1, kind: input, shape index: {}]
  %s2 = inlined_call_operand.vmem [shape: f32[1,128], index: 2, kind: input, shape index: {}]
  %s3 = inlined_call_operand.vmem [shape: f32[32,128], index: 3, kind: output, shape index: {}]
  %s4 = sld [smem:[#allocation0]]
  $region45: #{faster_rcnn_forward.12} parent=0
    _
  %s6 = ssub.s32 1, %s4
  %s7 = scalar_select 0, %s6, %s4
  loop: start=0, step=1, limit=4
  $region2: #{faster_rcnn_forward.12} parent=0 // loop_pre_header
    _
  $region3: #{faster_rcnn_forward.12} parent=0 // loop_header
    %s9 = sphi 0, %s13
    %p10 = scmp.ge.s32.totalorder %s9, 4
    %s16 = sphi 0, %s28
    %s17 = sphi 0, %s24
    %s18 = sphi 0, %s16
    %s19 = sphi 0, %s17
    %s20 = sphi 0, %s18
    %s21 = sphi 0, %s19
    %s31 = sphi 0, %s33
    %s34 = sphi 0, %s31
    %s35 = sphi 0, %s34
    %s51 = sphi 0, %s35
    %s57 = sphi 0, %s59
    %s60 = sphi 0, %s57
    %s61 = sphi 0, %s60
    %s77 = sphi 0, %s61
    %s83 = sphi 0, %s85
    %s86 = sphi 0, %s83
    %s87 = sphi 0, %s86
    %s103 = sphi 0, %s87
    %s111 = sphi 0, %s113
    %s114 = sphi 0, %s111
    %s115 = sphi 0, %s114
    %s131 = sphi 0, %s115
  $region4: #{faster_rcnn_forward.12} parent=0 // loop_header_branch
    %12 = sbr.rel (%p10) target = $region8
  $region5: #{faster_rcnn_forward.12} parent=0 // loop_body
    %s14 = ssub.s32 %s9, 1
    %s15 = ssub.s32 %s9, 2
    %s22 = sadd.s32 1, %s17
    %p23 = scmp.ge.s32.totalorder %s22, 1
    %s24 = scalar_select %p23, 0, %s22
    %s25 = sadd.s32 1, %s16
    %s26 = scalar_select %p23, %s25, %s16
    %p27 = scmp.ge.s32.totalorder %s26, 2
    %s28 = scalar_select %p27, 0, %s26
    %s29 = ssub.s32 %s16, %s28
    %p30 = scmp.eq.s32.totalorder %s29, 0
    %s32 = sadd.s32 %s31, 1
    %s33 = scalar_select %p30, %s31, %s32
    %p36 = pneg %p30
    %p37 = scmp.eq.s32.totalorder %s9, 1
    %p38 = por %p36, %p37
    %p39 = scmp.ne.s32.totalorder %s31, %s34
    %p40 = scmp.eq.s32.totalorder %s9, 0
    %p41 = por %p39, %p40
    %p42 = scmp.ne.s32.totalorder %s31, %s34
    %p43 = scmp.eq.s32.totalorder %s14, 1
    %p44 = por %p42, %p43
    %p45 = scmp.ne.s32.totalorder %s34, %s35
    %p46 = scmp.eq.s32.totalorder %s14, 0
    %p47 = por %p45, %p46
    %p48 = scmp.ne.s32.totalorder %s34, %s35
    %p49 = scmp.eq.s32.totalorder %s15, 1
    %p50 = por %p48, %p49
    %p52 = scmp.ne.s32.totalorder %s35, %s51
    %p53 = scmp.eq.s32.totalorder %s15, 0
    %p54 = por %p52, %p53
    %s55 = ssub.s32 %s17, %s24
    %p56 = scmp.eq.s32.totalorder %s55, 0
    %s58 = sadd.s32 %s57, 1
    %s59 = scalar_select %p56, %s57, %s58
    %p62 = pneg %p56
    %p63 = scmp.eq.s32.totalorder %s9, 1
    %p64 = por %p62, %p63
    %p65 = scmp.ne.s32.totalorder %s57, %s60
    %p66 = scmp.eq.s32.totalorder %s9, 0
    %p67 = por %p65, %p66
    %p68 = scmp.ne.s32.totalorder %s57, %s60
    %p69 = scmp.eq.s32.totalorder %s14, 1
    %p70 = por %p68, %p69
    %p71 = scmp.ne.s32.totalorder %s60, %s61
    %p72 = scmp.eq.s32.totalorder %s14, 0
    %p73 = por %p71, %p72
    %p74 = scmp.ne.s32.totalorder %s60, %s61
    %p75 = scmp.eq.s32.totalorder %s15, 1
    %p76 = por %p74, %p75
    %p78 = scmp.ne.s32.totalorder %s61, %s77
    %p79 = scmp.eq.s32.totalorder %s15, 0
    %p80 = por %p78, %p79
    %s81 = ssub.s32 %s17, %s24
    %p82 = scmp.eq.s32.totalorder %s81, 0
    %s84 = sadd.s32 %s83, 1
    %s85 = scalar_select %p82, %s83, %s84
    %p88 = pneg %p82
    %p89 = scmp.eq.s32.totalorder %s9, 1
    %p90 = por %p88, %p89
    %p91 = scmp.ne.s32.totalorder %s83, %s86
    %p92 = scmp.eq.s32.totalorder %s9, 0
    %p93 = por %p91, %p92
    %p94 = scmp.ne.s32.totalorder %s83, %s86
    %p95 = scmp.eq.s32.totalorder %s14, 1
    %p96 = por %p94, %p95
    %p97 = scmp.ne.s32.totalorder %s86, %s87
    %p98 = scmp.eq.s32.totalorder %s14, 0
    %p99 = por %p97, %p98
    %p100 = scmp.ne.s32.totalorder %s86, %s87
    %p101 = scmp.eq.s32.totalorder %s15, 1
    %p102 = por %p100, %p101
    %p104 = scmp.ne.s32.totalorder %s87, %s103
    %p105 = scmp.eq.s32.totalorder %s15, 0
    %p106 = por %p104, %p105
    %s107 = ssub.s32 %s16, %s28
    %s108 = ssub.s32 %s17, %s24
    %s109 = sor.u32 %s107, %s108
    %p110 = scmp.eq.s32.totalorder %s109, 0
    %s112 = sadd.s32 %s111, 1
    %s113 = scalar_select %p110, %s111, %s112
    %p116 = pneg %p110
    %p117 = scmp.eq.s32.totalorder %s9, 1
    %p118 = por %p116, %p117
    %p119 = scmp.ne.s32.totalorder %s111, %s114
    %p120 = scmp.eq.s32.totalorder %s9, 0
    %p121 = por %p119, %p120
    %p122 = scmp.ne.s32.totalorder %s111, %s114
    %p123 = scmp.eq.s32.totalorder %s14, 1
    %p124 = por %p122, %p123
    %p125 = scmp.ne.s32.totalorder %s114, %s115
    %p126 = scmp.eq.s32.totalorder %s14, 0
    %p127 = por %p125, %p126
    %p128 = scmp.ne.s32.totalorder %s114, %s115
    %p129 = scmp.eq.s32.totalorder %s15, 1
    %p130 = por %p128, %p129
    %p132 = scmp.ne.s32.totalorder %s115, %s131
    %p133 = scmp.eq.s32.totalorder %s15, 0
    %p134 = por %p132, %p133
    %p135 = scmp.le.s32.totalorder 1, %s9
    %p136 = scmp.lt.s32.totalorder %s9, 3
    %p137 = pnand %p135, %p136
    %p138 = pneg %p137
    // Predicated region
    $region9: #{faster_rcnn_forward.12} parent=5 // pred_check
      _
    $region10: #{faster_rcnn_forward.12} parent=5 // pred_check_branch
      %140 = sbr.rel (%p137) target = $region12
    $region11: #{faster_rcnn_forward.12} parent=5 // pred_region
      %s141 = ssub.s32 %s9, 1
      // Predicated region
      $region13: #{faster_rcnn_forward.12} parent=11 // pred_check
        %p142 = pneg %p73
      $region14: #{faster_rcnn_forward.12} parent=11 // pred_check_branch
        %144 = sbr.rel (%p142) target = $region16
      $region15: #{faster_rcnn_forward.12} parent=11 // pred_region
        %p145 = scmp.lt.s32.totalorder %s19, 0
        %s146 = scalar_select %p145, %s19, 0
        %s147 = smul.addr %s146, 4
        %s148 = scalar_lea.vmem %s1, %s147
      $region16: #{faster_rcnn_forward.12} parent=11 // pred_fallthru
        _
      // Predicated region
      $region17: #{faster_rcnn_forward.12} parent=11 // pred_check
        %p149 = pneg %p99
      $region18: #{faster_rcnn_forward.12} parent=11 // pred_check_branch
        %151 = sbr.rel (%p149) target = $region20
      $region19: #{faster_rcnn_forward.12} parent=11 // pred_region
        %p152 = scmp.lt.s32.totalorder %s19, 0
        %s153 = scalar_select %p152, %s19, 0
        %s154 = scalar_lea.vmem %s2, %s153
      $region20: #{faster_rcnn_forward.12} parent=11 // pred_fallthru
        _
    $region12: #{faster_rcnn_forward.12} parent=5 // pred_fallthru
      _
    %p155 = scmp.lt.s32.totalorder %s9, 2
    // Predicated region
    $region21: #{faster_rcnn_forward.12} parent=5 // pred_check
      %p156 = pneg %p155
    $region22: #{faster_rcnn_forward.12} parent=5 // pred_check_branch
      %158 = sbr.rel (%p156) target = $region24
    $region23: #{faster_rcnn_forward.12} parent=5 // pred_region
      // Predicated region
      $region25: #{faster_rcnn_forward.12} parent=23 // pred_check
        %p159 = pneg %p41
      $region26: #{faster_rcnn_forward.12} parent=23 // pred_check_branch
        %161 = sbr.rel (%p159) target = $region28
      $region27: #{faster_rcnn_forward.12} parent=23 // pred_region
        %s162 = smul.u32 2, %s16
        %p163 = scmp.lt.s32.totalorder %s162, 3
        %s164 = scalar_select %p163, %s162, 3
        %s165 = smul.addr %s164, 4
        %s166 = scalar_lea.vmem %s0, %s165
        %s167 = smul.u32 2, %s16
      $region28: #{faster_rcnn_forward.12} parent=23 // pred_fallthru
        _
    $region24: #{faster_rcnn_forward.12} parent=5 // pred_fallthru
      _
    %p168 = scmp.le.s32.totalorder 1, %s9
    %p169 = scmp.lt.s32.totalorder %s9, 3
    %p170 = pnand %p168, %p169
    %p171 = pneg %p170
    // Predicated region
    $region29: #{faster_rcnn_forward.12} parent=5 // pred_check
      _
    $region30: #{faster_rcnn_forward.12} parent=5 // pred_check_branch
      %173 = sbr.rel (%p170) target = $region32
    $region31: #{faster_rcnn_forward.12} parent=5 // pred_region
      %s174 = ssub.s32 %s9, 1
      %s175 = smul.u32 2, %s18
      %p176 = scmp.lt.s32.totalorder %s175, 3
      %s177 = scalar_select %p176, %s175, 3
      %s178 = smul.addr %s177, 4
      %s179 = scalar_lea.vmem %s0, %s178
      %p180 = pneg %p47
      %p181 = pneg %p44
      %p182 = scmp.lt.s32.totalorder %s19, 0
      %s183 = scalar_select %p182, %s19, 0
      %s184 = smul.addr %s183, 4
      %s185 = scalar_lea.vmem %s1, %s184
      %p186 = pneg %p73
      %p187 = pneg %p70
      %p188 = scmp.lt.s32.totalorder %s19, 0
      %s189 = scalar_select %p188, %s19, 0
      %s190 = scalar_lea.vmem %s2, %s189
      %p191 = pneg %p99
      %p192 = pneg %p96
      %p193 = pneg %p127
      %p194 = pneg %p124
      %s195 = smul.u32 2, %s18
      %p196 = scmp.lt.s32.totalorder %s195, 3
      %s197 = scalar_select %p196, %s195, 3
      %p198 = scmp.lt.s32.totalorder %s19, 0
      %s199 = scalar_select %p198, %s19, 0
      %s200 = sadd.s32 %s199, %s197
      %s201 = smul.addr %s200, 8
      %s202 = scalar_lea.vmem %s3, %s201
      %s203 = smul.u32 2, %s18
      %p204 = scmp.lt.s32.totalorder %s203, 3
      %s205 = scalar_select %p204, %s203, 3
      %s206 = smul.addr %s205, 4
      %s207 = scalar_lea.vmem %s0, %s206
      %s208 = smul.u32 2, %s18
      %p209 = scmp.lt.s32.totalorder %s19, 0
      %s210 = scalar_select %p209, %s19, 0
      %s211 = smul.addr %s210, 4
      %s212 = scalar_lea.vmem %s1, %s211
      %p213 = scmp.lt.s32.totalorder %s19, 0
      %s214 = scalar_select %p213, %s19, 0
      %s215 = scalar_lea.vmem %s2, %s214
      %s216 = smul.u32 2, %s18
      %p217 = scmp.lt.s32.totalorder %s216, 3
      %s218 = scalar_select %p217, %s216, 3
      %p219 = scmp.lt.s32.totalorder %s19, 0
      %s220 = scalar_select %p219, %s19, 0
      %s221 = sadd.s32 %s220, %s218
      %s222 = smul.addr %s221, 8
      %s223 = scalar_lea.vmem %s3, %s222
      %s224 = smul.u32 2, %s18
      %v226 = vld [vmem:[%s207] sm:$0xf]
      %v227 = vld [vmem:[%s207 + $0x4] sm:$0xf]
      %v228 = vld [vmem:[%s212] sm:$0xf]
      %v229 = vld [vmem:[%s212 + $0x4] sm:$0xf]
      %v230 = vld [vmem:[%s212 + $0x8] sm:$0xf]
      %v231 = vld [vmem:[%s212 + $0xc] sm:$0xf]
      %v232 = vld [vmem:[%s212 + $0x10] sm:$0xf]
      %v233 = vld [vmem:[%s212 + $0x14] sm:$0xf]
      %v234 = vld [vmem:[%s212 + $0x18] sm:$0xf]
      %v235 = vld [vmem:[%s212 + $0x1c] sm:$0xf]
      %v236 = vld [vmem:[%s212 + $0x20] sm:$0xf]
      %v237 = vld [vmem:[%s212 + $0x24] sm:$0xf]
      %v238 = vld [vmem:[%s212 + $0x28] sm:$0xf]
      %v239 = vld [vmem:[%s212 + $0x2c] sm:$0xf]
      %v240 = vld [vmem:[%s212 + $0x30] sm:$0xf]
      %v241 = vld [vmem:[%s212 + $0x34] sm:$0xf]
      %v242 = vld [vmem:[%s212 + $0x38] sm:$0xf]
      %v243 = vld [vmem:[%s212 + $0x3c] sm:$0xf]
      %v244 = vld [vmem:[%s215] sm:$0x1]
      %v246 = vlaneseq
      %v247 = vshrl.u32 %v246, 7
      %v248 = vsub.s32 0, %v247
      %v249 = vrot.slane %v244, %v248
      %v253 = vunpack.c.l.b16 %v226
      %v254 = vunpack.c.l.b16 %v227
      %v255 = vpack.c.b16 %v254, %v253
      %v273 = vunpack.c.l.b16 %v228
      %v274 = vunpack.c.l.b16 %v229
      %v275 = vunpack.c.l.b16 %v230
      %v276 = vunpack.c.l.b16 %v231
      %v277 = vunpack.c.l.b16 %v232
      %v278 = vunpack.c.l.b16 %v233
      %v279 = vunpack.c.l.b16 %v234
      %v280 = vunpack.c.l.b16 %v235
      %v281 = vunpack.c.l.b16 %v236
      %v282 = vunpack.c.l.b16 %v237
      %v283 = vunpack.c.l.b16 %v238
      %v284 = vunpack.c.l.b16 %v239
      %v285 = vunpack.c.l.b16 %v240
      %v286 = vunpack.c.l.b16 %v241
      %v287 = vunpack.c.l.b16 %v242
      %v288 = vunpack.c.l.b16 %v243
      %v289 = vpack.c.b16 %v274, %v273
      %v290 = vpack.c.b16 %v276, %v275
      %v291 = vpack.c.b16 %v278, %v277
      %v292 = vpack.c.b16 %v280, %v279
      %v293 = vpack.c.b16 %v282, %v281
      %v294 = vpack.c.b16 %v284, %v283
      %v295 = vpack.c.b16 %v286, %v285
      %v296 = vpack.c.b16 %v288, %v287
      %305 = vmatprep.subr.bf16.mxu0 0
      %306 = vmatpush1.bf16.msra.mxu0 %v289
      %307 = vmatprep.subr.bf16.mxu0 0
      %308 = vmatpush1.bf16.msra.mxu0 %v290
      %309 = vmatprep.subr.bf16.mxu0 0
      %310 = vmatpush1.bf16.msra.mxu0 %v291
      %311 = vmatprep.subr.bf16.mxu0 0
      %312 = vmatpush1.bf16.msra.mxu0 %v292
      %313 = vmatprep.subr.bf16.mxu0 0
      %314 = vmatpush1.bf16.msra.mxu0 %v293
      %315 = vmatprep.subr.bf16.mxu0 0
      %316 = vmatpush1.bf16.msra.mxu0 %v294
      %317 = vmatprep.subr.bf16.mxu0 0
      %318 = vmatpush1.bf16.msra.mxu0 %v295
      %319 = vmatprep.subr.bf16.mxu0 0
      %320 = vmatpush1.bf16.msra.mxu0 %v296
      %321 = vmatprep.subr.bf16.mxu0 0
      %322 = vmatpush1.bf16.msra.mxu0 0
      %323 = vmatprep.subr.bf16.mxu0 0
      %324 = vmatpush1.bf16.msra.mxu0 0
      %325 = vmatprep.subr.bf16.mxu0 0
      %326 = vmatpush1.bf16.msra.mxu0 0
      %327 = vmatprep.subr.bf16.mxu0 0
      %328 = vmatpush1.bf16.msra.mxu0 0
      %329 = vmatprep.subr.bf16.mxu0 0
      %330 = vmatpush1.bf16.msra.mxu0 0
      %331 = vmatprep.subr.bf16.mxu0 0
      %332 = vmatpush1.bf16.msra.mxu0 0
      %333 = vmatprep.subr.bf16.mxu0 0
      %334 = vmatpush1.bf16.msra.mxu0 0
      %335 = vmatprep.subr.bf16.mxu0 0
      %336 = vmatpush1.bf16.msra.mxu0 0
      %337 = vmatprep.mubr.bf16.mxu0 0
      %338 = vmatmul.mubr.bf16.gmra.mrb[0].mxu0 %v255
      %v339 = vpop.f32.mrb[0].mxu0
      %v340 = vadd.f32 %v249, %v339
      %v341 = vpop.f32.mrb[0].mxu0
      %v342 = vpop.f32.mrb[0].mxu0
      %v343 = vadd.f32 %v249, %v342
      %v344 = vpop.f32.mrb[0].mxu0
      %345 = vdwg.mxu0
      %346 = vst [vmem:[%s223] sm:$0xff] %v340
      %347 = vst [vmem:[%s223 + $0x8] sm:$0xff] %v343
      %s348 = smul.u32 2, %s18
      %p349 = scmp.lt.s32.totalorder %s348, 3
      %s350 = scalar_select %p349, %s348, 3
      %p351 = scmp.lt.s32.totalorder %s19, 0
      %s352 = scalar_select %p351, %s19, 0
      %s353 = sadd.s32 %s352, %s350
      %s354 = smul.addr %s353, 8
      %s355 = scalar_lea.vmem %s3, %s354
      // Predicated region
      $region33: #{faster_rcnn_forward.12} parent=31 // pred_check
        %p356 = pneg %p124
      $region34: #{faster_rcnn_forward.12} parent=31 // pred_check_branch
        %358 = sbr.rel (%p356) target = $region36
      $region35: #{faster_rcnn_forward.12} parent=31 // pred_region
        %s359 = smul.u32 2, %s18
      $region36: #{faster_rcnn_forward.12} parent=31 // pred_fallthru
        _
    $region32: #{faster_rcnn_forward.12} parent=5 // pred_fallthru
      _
    %p360 = scmp.le.s32.totalorder 2, %s9
    // Predicated region
    $region37: #{faster_rcnn_forward.12} parent=5 // pred_check
      %p361 = pneg %p360
    $region38: #{faster_rcnn_forward.12} parent=5 // pred_check_branch
      %363 = sbr.rel (%p361) target = $region40
    $region39: #{faster_rcnn_forward.12} parent=5 // pred_region
      %s364 = ssub.s32 %s9, 2
      // Predicated region
      $region41: #{faster_rcnn_forward.12} parent=39 // pred_check
        %p365 = pneg %p130
      $region42: #{faster_rcnn_forward.12} parent=39 // pred_check_branch
        %367 = sbr.rel (%p365) target = $region44
      $region43: #{faster_rcnn_forward.12} parent=39 // pred_region
        %s368 = smul.u32 2, %s20
        %p369 = scmp.lt.s32.totalorder %s368, 3
        %s370 = scalar_select %p369, %s368, 3
        %p371 = scmp.lt.s32.totalorder %s21, 0
        %s372 = scalar_select %p371, %s21, 0
        %s373 = sadd.s32 %s372, %s370
        %s374 = smul.addr %s373, 8
        %s375 = scalar_lea.vmem %s3, %s374
      $region44: #{faster_rcnn_forward.12} parent=39 // pred_fallthru
        _
    $region40: #{faster_rcnn_forward.12} parent=5 // pred_fallthru
      _
  $region6: #{faster_rcnn_forward.12} parent=0 // loop_footer
    %s13 = sadd.s32 1, %s9
  $region7: #{faster_rcnn_forward.12} parent=0 // loop_footer_branch
    %8 = sbr.rel target = $region3
  $region8: #{faster_rcnn_forward.12} parent=0 // loop_exit
    _

// kernel: faster_rcnn_forward.11
$region0: #{faster_rcnn_forward.11}
  #allocation0 [shape = 'u32[]', space=smem, size = 0x4, offset = 0x4, fixed_abs, tag = 'smem constant byte address 0x4 - core index']
  #allocation1 [shape = 'u32[144,128]{1,0:T(1,128)}', space=vmem, size = 0x12000, scoped, tag = 'internal scratch']
  %s0 = inlined_call_operand.vmem [shape: bf16[32,640], index: 0, kind: input, shape index: {}]
  %s1 = inlined_call_operand.vmem [shape: bf16[640,128], index: 1, kind: input, shape index: {}]
  %s2 = inlined_call_operand.vmem [shape: f32[1,128], index: 2, kind: input, shape index: {}]
  %s3 = inlined_call_operand.vmem [shape: bf16[32,128], index: 3, kind: output, shape index: {}]
  %s4 = sld [smem:[#allocation0]]
  $region45: #{faster_rcnn_forward.11} parent=0
    _
  %s6 = ssub.s32 1, %s4
  %s7 = scalar_select 0, %s6, %s4
  loop: start=0, step=1, limit=4
  $region2: #{faster_rcnn_forward.11} parent=0 // loop_pre_header
    _
  $region3: #{faster_rcnn_forward.11} parent=0 // loop_header
    %s9 = sphi 0, %s13
    %p10 = scmp.ge.s32.totalorder %s9, 4
    %s16 = sphi 0, %s28
    %s17 = sphi 0, %s24
    %s18 = sphi 0, %s16
    %s19 = sphi 0, %s17
    %s20 = sphi 0, %s18
    %s21 = sphi 0, %s19
    %s31 = sphi 0, %s33
    %s34 = sphi 0, %s31
    %s35 = sphi 0, %s34
    %s51 = sphi 0, %s35
    %s57 = sphi 0, %s59
    %s60 = sphi 0, %s57
    %s61 = sphi 0, %s60
    %s77 = sphi 0, %s61
    %s83 = sphi 0, %s85
    %s86 = sphi 0, %s83
    %s87 = sphi 0, %s86
    %s103 = sphi 0, %s87
    %s111 = sphi 0, %s113
    %s114 = sphi 0, %s111
    %s115 = sphi 0, %s114
    %s131 = sphi 0, %s115
  $region4: #{faster_rcnn_forward.11} parent=0 // loop_header_branch
    %12 = sbr.rel (%p10) target = $region8
  $region5: #{faster_rcnn_forward.11} parent=0 // loop_body
    %s14 = ssub.s32 %s9, 1
    %s15 = ssub.s32 %s9, 2
    %s22 = sadd.s32 1, %s17
    %p23 = scmp.ge.s32.totalorder %s22, 1
    %s24 = scalar_select %p23, 0, %s22
    %s25 = sadd.s32 1, %s16
    %s26 = scalar_select %p23, %s25, %s16
    %p27 = scmp.ge.s32.totalorder %s26, 2
    %s28 = scalar_select %p27, 0, %s26
    %s29 = ssub.s32 %s16, %s28
    %p30 = scmp.eq.s32.totalorder %s29, 0
    %s32 = sadd.s32 %s31, 1
    %s33 = scalar_select %p30, %s31, %s32
    %p36 = pneg %p30
    %p37 = scmp.eq.s32.totalorder %s9, 1
    %p38 = por %p36, %p37
    %p39 = scmp.ne.s32.totalorder %s31, %s34
    %p40 = scmp.eq.s32.totalorder %s9, 0
    %p41 = por %p39, %p40
    %p42 = scmp.ne.s32.totalorder %s31, %s34
    %p43 = scmp.eq.s32.totalorder %s14, 1
    %p44 = por %p42, %p43
    %p45 = scmp.ne.s32.totalorder %s34, %s35
    %p46 = scmp.eq.s32.totalorder %s14, 0
    %p47 = por %p45, %p46
    %p48 = scmp.ne.s32.totalorder %s34, %s35
    %p49 = scmp.eq.s32.totalorder %s15, 1
    %p50 = por %p48, %p49
    %p52 = scmp.ne.s32.totalorder %s35, %s51
    %p53 = scmp.eq.s32.totalorder %s15, 0
    %p54 = por %p52, %p53
    %s55 = ssub.s32 %s17, %s24
    %p56 = scmp.eq.s32.totalorder %s55, 0
    %s58 = sadd.s32 %s57, 1
    %s59 = scalar_select %p56, %s57, %s58
    %p62 = pneg %p56
    %p63 = scmp.eq.s32.totalorder %s9, 1
    %p64 = por %p62, %p63
    %p65 = scmp.ne.s32.totalorder %s57, %s60
    %p66 = scmp.eq.s32.totalorder %s9, 0
    %p67 = por %p65, %p66
    %p68 = scmp.ne.s32.totalorder %s57, %s60
    %p69 = scmp.eq.s32.totalorder %s14, 1
    %p70 = por %p68, %p69
    %p71 = scmp.ne.s32.totalorder %s60, %s61
    %p72 = scmp.eq.s32.totalorder %s14, 0
    %p73 = por %p71, %p72
    %p74 = scmp.ne.s32.totalorder %s60, %s61
    %p75 = scmp.eq.s32.totalorder %s15, 1
    %p76 = por %p74, %p75
    %p78 = scmp.ne.s32.totalorder %s61, %s77
    %p79 = scmp.eq.s32.totalorder %s15, 0
    %p80 = por %p78, %p79
    %s81 = ssub.s32 %s17, %s24
    %p82 = scmp.eq.s32.totalorder %s81, 0
    %s84 = sadd.s32 %s83, 1
    %s85 = scalar_select %p82, %s83, %s84
    %p88 = pneg %p82
    %p89 = scmp.eq.s32.totalorder %s9, 1
    %p90 = por %p88, %p89
    %p91 = scmp.ne.s32.totalorder %s83, %s86
    %p92 = scmp.eq.s32.totalorder %s9, 0
    %p93 = por %p91, %p92
    %p94 = scmp.ne.s32.totalorder %s83, %s86
    %p95 = scmp.eq.s32.totalorder %s14, 1
    %p96 = por %p94, %p95
    %p97 = scmp.ne.s32.totalorder %s86, %s87
    %p98 = scmp.eq.s32.totalorder %s14, 0
    %p99 = por %p97, %p98
    %p100 = scmp.ne.s32.totalorder %s86, %s87
    %p101 = scmp.eq.s32.totalorder %s15, 1
    %p102 = por %p100, %p101
    %p104 = scmp.ne.s32.totalorder %s87, %s103
    %p105 = scmp.eq.s32.totalorder %s15, 0
    %p106 = por %p104, %p105
    %s107 = ssub.s32 %s16, %s28
    %s108 = ssub.s32 %s17, %s24
    %s109 = sor.u32 %s107, %s108
    %p110 = scmp.eq.s32.totalorder %s109, 0
    %s112 = sadd.s32 %s111, 1
    %s113 = scalar_select %p110, %s111, %s112
    %p116 = pneg %p110
    %p117 = scmp.eq.s32.totalorder %s9, 1
    %p118 = por %p116, %p117
    %p119 = scmp.ne.s32.totalorder %s111, %s114
    %p120 = scmp.eq.s32.totalorder %s9, 0
    %p121 = por %p119, %p120
    %p122 = scmp.ne.s32.totalorder %s111, %s114
    %p123 = scmp.eq.s32.totalorder %s14, 1
    %p124 = por %p122, %p123
    %p125 = scmp.ne.s32.totalorder %s114, %s115
    %p126 = scmp.eq.s32.totalorder %s14, 0
    %p127 = por %p125, %p126
    %p128 = scmp.ne.s32.totalorder %s114, %s115
    %p129 = scmp.eq.s32.totalorder %s15, 1
    %p130 = por %p128, %p129
    %p132 = scmp.ne.s32.totalorder %s115, %s131
    %p133 = scmp.eq.s32.totalorder %s15, 0
    %p134 = por %p132, %p133
    %p135 = scmp.le.s32.totalorder 1, %s9
    %p136 = scmp.lt.s32.totalorder %s9, 3
    %p137 = pnand %p135, %p136
    %p138 = pneg %p137
    // Predicated region
    $region9: #{faster_rcnn_forward.11} parent=5 // pred_check
      _
    $region10: #{faster_rcnn_forward.11} parent=5 // pred_check_branch
      %140 = sbr.rel (%p137) target = $region12
    $region11: #{faster_rcnn_forward.11} parent=5 // pred_region
      %s141 = ssub.s32 %s9, 1
      // Predicated region
      $region13: #{faster_rcnn_forward.11} parent=11 // pred_check
        %p142 = pneg %p73
      $region14: #{faster_rcnn_forward.11} parent=11 // pred_check_branch
        %144 = sbr.rel (%p142) target = $region16
      $region15: #{faster_rcnn_forward.11} parent=11 // pred_region
        %p145 = scmp.lt.s32.totalorder %s19, 0
        %s146 = scalar_select %p145, %s19, 0
        %s147 = smul.addr %s146, 4
        %s148 = scalar_lea.vmem %s1, %s147
      $region16: #{faster_rcnn_forward.11} parent=11 // pred_fallthru
        _
      // Predicated region
      $region17: #{faster_rcnn_forward.11} parent=11 // pred_check
        %p149 = pneg %p99
      $region18: #{faster_rcnn_forward.11} parent=11 // pred_check_branch
        %151 = sbr.rel (%p149) target = $region20
      $region19: #{faster_rcnn_forward.11} parent=11 // pred_region
        %p152 = scmp.lt.s32.totalorder %s19, 0
        %s153 = scalar_select %p152, %s19, 0
        %s154 = scalar_lea.vmem %s2, %s153
      $region20: #{faster_rcnn_forward.11} parent=11 // pred_fallthru
        _
    $region12: #{faster_rcnn_forward.11} parent=5 // pred_fallthru
      _
    %p155 = scmp.lt.s32.totalorder %s9, 2
    // Predicated region
    $region21: #{faster_rcnn_forward.11} parent=5 // pred_check
      %p156 = pneg %p155
    $region22: #{faster_rcnn_forward.11} parent=5 // pred_check_branch
      %158 = sbr.rel (%p156) target = $region24
    $region23: #{faster_rcnn_forward.11} parent=5 // pred_region
      // Predicated region
      $region25: #{faster_rcnn_forward.11} parent=23 // pred_check
        %p159 = pneg %p41
      $region26: #{faster_rcnn_forward.11} parent=23 // pred_check_branch
        %161 = sbr.rel (%p159) target = $region28
      $region27: #{faster_rcnn_forward.11} parent=23 // pred_region
        %s162 = smul.u32 2, %s16
        %p163 = scmp.lt.s32.totalorder %s162, 3
        %s164 = scalar_select %p163, %s162, 3
        %s165 = smul.addr %s164, 5
        %s166 = smul.addr %s165, 4
        %s167 = scalar_lea.vmem %s0, %s166
        %s168 = smul.u32 2, %s16
      $region28: #{faster_rcnn_forward.11} parent=23 // pred_fallthru
        _
    $region24: #{faster_rcnn_forward.11} parent=5 // pred_fallthru
      _
    %p169 = scmp.le.s32.totalorder 1, %s9
    %p170 = scmp.lt.s32.totalorder %s9, 3
    %p171 = pnand %p169, %p170
    %p172 = pneg %p171
    // Predicated region
    $region29: #{faster_rcnn_forward.11} parent=5 // pred_check
      _
    $region30: #{faster_rcnn_forward.11} parent=5 // pred_check_branch
      %174 = sbr.rel (%p171) target = $region32
    $region31: #{faster_rcnn_forward.11} parent=5 // pred_region
      %s175 = ssub.s32 %s9, 1
      %s176 = smul.u32 2, %s18
      %p177 = scmp.lt.s32.totalorder %s176, 3
      %s178 = scalar_select %p177, %s176, 3
      %s179 = smul.addr %s178, 5
      %s180 = smul.addr %s179, 4
      %s181 = scalar_lea.vmem %s0, %s180
      %p182 = pneg %p47
      %p183 = pneg %p44
      %p184 = scmp.lt.s32.totalorder %s19, 0
      %s185 = scalar_select %p184, %s19, 0
      %s186 = smul.addr %s185, 4
      %s187 = scalar_lea.vmem %s1, %s186
      %p188 = pneg %p73
      %p189 = pneg %p70
      %p190 = scmp.lt.s32.totalorder %s19, 0
      %s191 = scalar_select %p190, %s19, 0
      %s192 = scalar_lea.vmem %s2, %s191
      %p193 = pneg %p99
      %p194 = pneg %p96
      %p195 = pneg %p127
      %p196 = pneg %p124
      %s197 = smul.u32 2, %s18
      %p198 = scmp.lt.s32.totalorder %s197, 3
      %s199 = scalar_select %p198, %s197, 3
      %p200 = scmp.lt.s32.totalorder %s19, 0
      %s201 = scalar_select %p200, %s19, 0
      %s202 = sadd.s32 %s201, %s199
      %s203 = smul.addr %s202, 4
      %s204 = scalar_lea.vmem %s3, %s203
      %s205 = smul.u32 2, %s18
      %p206 = scmp.lt.s32.totalorder %s205, 3
      %s207 = scalar_select %p206, %s205, 3
      %s208 = smul.addr %s207, 5
      %s209 = smul.addr %s208, 4
      %s210 = scalar_lea.vmem %s0, %s209
      %s211 = smul.u32 2, %s18
      %p212 = scmp.lt.s32.totalorder %s19, 0
      %s213 = scalar_select %p212, %s19, 0
      %s214 = smul.addr %s213, 4
      %s215 = scalar_lea.vmem %s1, %s214
      %p216 = scmp.lt.s32.totalorder %s19, 0
      %s217 = scalar_select %p216, %s19, 0
      %s218 = scalar_lea.vmem %s2, %s217
      %s219 = smul.u32 2, %s18
      %p220 = scmp.lt.s32.totalorder %s219, 3
      %s221 = scalar_select %p220, %s219, 3
      %p222 = scmp.lt.s32.totalorder %s19, 0
      %s223 = scalar_select %p222, %s19, 0
      %s224 = sadd.s32 %s223, %s221
      %s225 = smul.addr %s224, 4
      %s226 = scalar_lea.vmem %s3, %s225
      %s227 = smul.u32 2, %s18
      %v229 = vld [vmem:[%s210] sm:$0xff]
      %v230 = vld [vmem:[%s210 + $0x8] sm:$0xff]
      %v231 = vld [vmem:[%s210 + $0x10] sm:$0xf]
      %v232 = vld [vmem:[%s210 + $0x14] sm:$0xff]
      %v233 = vld [vmem:[%s210 + $0x1c] sm:$0xff]
      %v234 = vld [vmem:[%s210 + $0x24] sm:$0xf]
      %v235 = vld [vmem:[%s215] sm:$0xf]
      %v236 = vld [vmem:[%s215 + $0x4] sm:$0xf]
      %v237 = vld [vmem:[%s215 + $0x8] sm:$0xf]
      %v238 = vld [vmem:[%s215 + $0xc] sm:$0xf]
      %v239 = vld [vmem:[%s215 + $0x10] sm:$0xf]
      %v240 = vld [vmem:[%s215 + $0x14] sm:$0xf]
      %v241 = vld [vmem:[%s215 + $0x18] sm:$0xf]
      %v242 = vld [vmem:[%s215 + $0x1c] sm:$0xf]
      %v243 = vld [vmem:[%s215 + $0x20] sm:$0xf]
      %v244 = vld [vmem:[%s215 + $0x24] sm:$0xf]
      %v245 = vld [vmem:[%s215 + $0x28] sm:$0xf]
      %v246 = vld [vmem:[%s215 + $0x2c] sm:$0xf]
      %v247 = vld [vmem:[%s215 + $0x30] sm:$0xf]
      %v248 = vld [vmem:[%s215 + $0x34] sm:$0xf]
      %v249 = vld [vmem:[%s215 + $0x38] sm:$0xf]
      %v250 = vld [vmem:[%s215 + $0x3c] sm:$0xf]
      %v251 = vld [vmem:[%s215 + $0x40] sm:$0xf]
      %v252 = vld [vmem:[%s215 + $0x44] sm:$0xf]
      %v253 = vld [vmem:[%s215 + $0x48] sm:$0xf]
      %v254 = vld [vmem:[%s215 + $0x4c] sm:$0xf]
      %v255 = vld [vmem:[%s215 + $0x50] sm:$0xf]
      %v256 = vld [vmem:[%s215 + $0x54] sm:$0xf]
      %v257 = vld [vmem:[%s215 + $0x58] sm:$0xf]
      %v258 = vld [vmem:[%s215 + $0x5c] sm:$0xf]
      %v259 = vld [vmem:[%s215 + $0x60] sm:$0xf]
      %v260 = vld [vmem:[%s215 + $0x64] sm:$0xf]
      %v261 = vld [vmem:[%s215 + $0x68] sm:$0xf]
      %v262 = vld [vmem:[%s215 + $0x6c] sm:$0xf]
      %v263 = vld [vmem:[%s215 + $0x70] sm:$0xf]
      %v264 = vld [vmem:[%s215 + $0x74] sm:$0xf]
      %v265 = vld [vmem:[%s215 + $0x78] sm:$0xf]
      %v266 = vld [vmem:[%s215 + $0x7c] sm:$0xf]
      %v267 = vld [vmem:[%s215 + $0x80] sm:$0xf]
      %v268 = vld [vmem:[%s215 + $0x84] sm:$0xf]
      %v269 = vld [vmem:[%s215 + $0x88] sm:$0xf]
      %v270 = vld [vmem:[%s215 + $0x8c] sm:$0xf]
      %v271 = vld [vmem:[%s215 + $0x90] sm:$0xf]
      %v272 = vld [vmem:[%s215 + $0x94] sm:$0xf]
      %v273 = vld [vmem:[%s215 + $0x98] sm:$0xf]
      %v274 = vld [vmem:[%s215 + $0x9c] sm:$0xf]
      %v275 = vld [vmem:[%s215 + $0xa0] sm:$0xf]
      %v276 = vld [vmem:[%s215 + $0xa4] sm:$0xf]
      %v277 = vld [vmem:[%s215 + $0xa8] sm:$0xf]
      %v278 = vld [vmem:[%s215 + $0xac] sm:$0xf]
      %v279 = vld [vmem:[%s215 + $0xb0] sm:$0xf]
      %v280 = vld [vmem:[%s215 + $0xb4] sm:$0xf]
      %v281 = vld [vmem:[%s215 + $0xb8] sm:$0xf]
      %v282 = vld [vmem:[%s215 + $0xbc] sm:$0xf]
      %v283 = vld [vmem:[%s215 + $0xc0] sm:$0xf]
      %v284 = vld [vmem:[%s215 + $0xc4] sm:$0xf]
      %v285 = vld [vmem:[%s215 + $0xc8] sm:$0xf]
      %v286 = vld [vmem:[%s215 + $0xcc] sm:$0xf]
      %v287 = vld [vmem:[%s215 + $0xd0] sm:$0xf]
      %v288 = vld [vmem:[%s215 + $0xd4] sm:$0xf]
      %v289 = vld [vmem:[%s215 + $0xd8] sm:$0xf]
      %v290 = vld [vmem:[%s215 + $0xdc] sm:$0xf]
      %v291 = vld [vmem:[%s215 + $0xe0] sm:$0xf]
      %v292 = vld [vmem:[%s215 + $0xe4] sm:$0xf]
      %v293 = vld [vmem:[%s215 + $0xe8] sm:$0xf]
      %v294 = vld [vmem:[%s215 + $0xec] sm:$0xf]
      %v295 = vld [vmem:[%s215 + $0xf0] sm:$0xf]
      %v296 = vld [vmem:[%s215 + $0xf4] sm:$0xf]
      %v297 = vld [vmem:[%s215 + $0xf8] sm:$0xf]
      %v298 = vld [vmem:[%s215 + $0xfc] sm:$0xf]
      %v299 = vld [vmem:[%s215 + $0x100] sm:$0xf]
      %v300 = vld [vmem:[%s215 + $0x104] sm:$0xf]
      %v301 = vld [vmem:[%s215 + $0x108] sm:$0xf]
      %v302 = vld [vmem:[%s215 + $0x10c] sm:$0xf]
      %v303 = vld [vmem:[%s215 + $0x110] sm:$0xf]
      %v304 = vld [vmem:[%s215 + $0x114] sm:$0xf]
      %v305 = vld [vmem:[%s215 + $0x118] sm:$0xf]
      %v306 = vld [vmem:[%s215 + $0x11c] sm:$0xf]
      %v307 = vld [vmem:[%s215 + $0x120] sm:$0xf]
      %v308 = vld [vmem:[%s215 + $0x124] sm:$0xf]
      %v309 = vld [vmem:[%s215 + $0x128] sm:$0xf]
      %v310 = vld [vmem:[%s215 + $0x12c] sm:$0xf]
      %v311 = vld [vmem:[%s215 + $0x130] sm:$0xf]
      %v312 = vld [vmem:[%s215 + $0x134] sm:$0xf]
      %v313 = vld [vmem:[%s215 + $0x138] sm:$0xf]
      %v314 = vld [vmem:[%s215 + $0x13c] sm:$0xf]
      %v315 = vld [vmem:[%s218] sm:$0x1]
      %v317 = vlaneseq
      %v318 = vshrl.u32 %v317, 7
      %v319 = vsub.s32 0, %v318
      %v320 = vrot.slane %v315, %v319
      %v328 = vunpack.c.l.b16 %v229
      %v329 = vunpack.c.h.b16 %v229
      %v330 = vunpack.c.l.b16 %v230
      %v331 = vunpack.c.h.b16 %v230
      %v332 = vunpack.c.l.b16 %v231
      %v333 = vunpack.c.l.b16 %v232
      %v334 = vunpack.c.h.b16 %v232
      %v335 = vunpack.c.l.b16 %v233
      %v336 = vunpack.c.h.b16 %v233
      %v337 = vunpack.c.l.b16 %v234
      %v338 = vpack.c.b16 %v333, %v328
      %v339 = vpack.c.b16 %v334, %v329
      %v340 = vpack.c.b16 %v335, %v330
      %v341 = vpack.c.b16 %v336, %v331
      %v342 = vpack.c.b16 %v337, %v332
      %v428 = vunpack.c.l.b16 %v235
      %v429 = vunpack.c.l.b16 %v236
      %v430 = vunpack.c.l.b16 %v237
      %v431 = vunpack.c.l.b16 %v238
      %v432 = vunpack.c.l.b16 %v239
      %v433 = vunpack.c.l.b16 %v240
      %v434 = vunpack.c.l.b16 %v241
      %v435 = vunpack.c.l.b16 %v242
      %v436 = vunpack.c.l.b16 %v243
      %v437 = vunpack.c.l.b16 %v244
      %v438 = vunpack.c.l.b16 %v245
      %v439 = vunpack.c.l.b16 %v246
      %v440 = vunpack.c.l.b16 %v247
      %v441 = vunpack.c.l.b16 %v248
      %v442 = vunpack.c.l.b16 %v249
      %v443 = vunpack.c.l.b16 %v250
      %v444 = vunpack.c.l.b16 %v251
      %v445 = vunpack.c.l.b16 %v252
      %v446 = vunpack.c.l.b16 %v253
      %v447 = vunpack.c.l.b16 %v254
      %v448 = vunpack.c.l.b16 %v255
      %v449 = vunpack.c.l.b16 %v256
      %v450 = vunpack.c.l.b16 %v257
      %v451 = vunpack.c.l.b16 %v258
      %v452 = vunpack.c.l.b16 %v259
      %v453 = vunpack.c.l.b16 %v260
      %v454 = vunpack.c.l.b16 %v261
      %v455 = vunpack.c.l.b16 %v262
      %v456 = vunpack.c.l.b16 %v263
      %v457 = vunpack.c.l.b16 %v264
      %v458 = vunpack.c.l.b16 %v265
      %v459 = vunpack.c.l.b16 %v266
      %v460 = vunpack.c.l.b16 %v267
      %v461 = vunpack.c.l.b16 %v268
      %v462 = vunpack.c.l.b16 %v269
      %v463 = vunpack.c.l.b16 %v270
      %v464 = vunpack.c.l.b16 %v271
      %v465 = vunpack.c.l.b16 %v272
      %v466 = vunpack.c.l.b16 %v273
      %v467 = vunpack.c.l.b16 %v274
      %v468 = vunpack.c.l.b16 %v275
      %v469 = vunpack.c.l.b16 %v276
      %v470 = vunpack.c.l.b16 %v277
      %v471 = vunpack.c.l.b16 %v278
      %v472 = vunpack.c.l.b16 %v279
      %v473 = vunpack.c.l.b16 %v280
      %v474 = vunpack.c.l.b16 %v281
      %v475 = vunpack.c.l.b16 %v282
      %v476 = vunpack.c.l.b16 %v283
      %v477 = vunpack.c.l.b16 %v284
      %v478 = vunpack.c.l.b16 %v285
      %v479 = vunpack.c.l.b16 %v286
      %v480 = vunpack.c.l.b16 %v287
      %v481 = vunpack.c.l.b16 %v288
      %v482 = vunpack.c.l.b16 %v289
      %v483 = vunpack.c.l.b16 %v290
      %v484 = vunpack.c.l.b16 %v291
      %v485 = vunpack.c.l.b16 %v292
      %v486 = vunpack.c.l.b16 %v293
      %v487 = vunpack.c.l.b16 %v294
      %v488 = vunpack.c.l.b16 %v295
      %v489 = vunpack.c.l.b16 %v296
      %v490 = vunpack.c.l.b16 %v297
      %v491 = vunpack.c.l.b16 %v298
      %v492 = vunpack.c.l.b16 %v299
      %v493 = vunpack.c.l.b16 %v300
      %v494 = vunpack.c.l.b16 %v301
      %v495 = vunpack.c.l.b16 %v302
      %v496 = vunpack.c.l.b16 %v303
      %v497 = vunpack.c.l.b16 %v304
      %v498 = vunpack.c.l.b16 %v305
      %v499 = vunpack.c.l.b16 %v306
      %v500 = vunpack.c.l.b16 %v307
      %v501 = vunpack.c.l.b16 %v308
      %v502 = vunpack.c.l.b16 %v309
      %v503 = vunpack.c.l.b16 %v310
      %v504 = vunpack.c.l.b16 %v311
      %v505 = vunpack.c.l.b16 %v312
      %v506 = vunpack.c.l.b16 %v313
      %v507 = vunpack.c.l.b16 %v314
      %v508 = vpack.c.b16 %v429, %v428
      %v509 = vpack.c.b16 %v431, %v430
      %v510 = vpack.c.b16 %v433, %v432
      %v511 = vpack.c.b16 %v435, %v434
      %v512 = vpack.c.b16 %v437, %v436
      %v513 = vpack.c.b16 %v439, %v438
      %v514 = vpack.c.b16 %v441, %v440
      %v515 = vpack.c.b16 %v443, %v442
      %v516 = vpack.c.b16 %v445, %v444
      %v517 = vpack.c.b16 %v447, %v446
      %v518 = vpack.c.b16 %v449, %v448
      %v519 = vpack.c.b16 %v451, %v450
      %v520 = vpack.c.b16 %v453, %v452
      %v521 = vpack.c.b16 %v455, %v454
      %v522 = vpack.c.b16 %v457, %v456
      %v523 = vpack.c.b16 %v459, %v458
      %v524 = vpack.c.b16 %v461, %v460
      %v525 = vpack.c.b16 %v463, %v462
      %v526 = vpack.c.b16 %v465, %v464
      %v527 = vpack.c.b16 %v467, %v466
      %v528 = vpack.c.b16 %v469, %v468
      %v529 = vpack.c.b16 %v471, %v470
      %v530 = vpack.c.b16 %v473, %v472
      %v531 = vpack.c.b16 %v475, %v474
      %v532 = vpack.c.b16 %v477, %v476
      %v533 = vpack.c.b16 %v479, %v478
      %v534 = vpack.c.b16 %v481, %v480
      %v535 = vpack.c.b16 %v483, %v482
      %v536 = vpack.c.b16 %v485, %v484
      %v537 = vpack.c.b16 %v487, %v486
      %v538 = vpack.c.b16 %v489, %v488
      %v539 = vpack.c.b16 %v491, %v490
      %v540 = vpack.c.b16 %v493, %v492
      %v541 = vpack.c.b16 %v495, %v494
      %v542 = vpack.c.b16 %v497, %v496
      %v543 = vpack.c.b16 %v499, %v498
      %v544 = vpack.c.b16 %v501, %v500
      %v545 = vpack.c.b16 %v503, %v502
      %v546 = vpack.c.b16 %v505, %v504
      %v547 = vpack.c.b16 %v507, %v506
      %588 = vmatprep.subr.bf16.mxu0 0
      %589 = vmatpush1.bf16.msra.mxu0 %v508
      %590 = vmatprep.subr.bf16.mxu0 0
      %591 = vmatpush1.bf16.msra.mxu0 %v509
      %592 = vmatprep.subr.bf16.mxu0 0
      %593 = vmatpush1.bf16.msra.mxu0 %v510
      %594 = vmatprep.subr.bf16.mxu0 0
      %595 = vmatpush1.bf16.msra.mxu0 %v511
      %596 = vmatprep.subr.bf16.mxu0 0
      %597 = vmatpush1.bf16.msra.mxu0 %v512
      %598 = vmatprep.subr.bf16.mxu0 0
      %599 = vmatpush1.bf16.msra.mxu0 %v513
      %600 = vmatprep.subr.bf16.mxu0 0
      %601 = vmatpush1.bf16.msra.mxu0 %v514
      %602 = vmatprep.subr.bf16.mxu0 0
      %603 = vmatpush1.bf16.msra.mxu0 %v515
      %604 = vmatprep.subr.bf16.mxu0 0
      %605 = vmatpush1.bf16.msra.mxu0 %v516
      %606 = vmatprep.subr.bf16.mxu0 0
      %607 = vmatpush1.bf16.msra.mxu0 %v517
      %608 = vmatprep.subr.bf16.mxu0 0
      %609 = vmatpush1.bf16.msra.mxu0 %v518
      %610 = vmatprep.subr.bf16.mxu0 0
      %611 = vmatpush1.bf16.msra.mxu0 %v519
      %612 = vmatprep.subr.bf16.mxu0 0
      %613 = vmatpush1.bf16.msra.mxu0 %v520
      %614 = vmatprep.subr.bf16.mxu0 0
      %615 = vmatpush1.bf16.msra.mxu0 %v521
      %616 = vmatprep.subr.bf16.mxu0 0
      %617 = vmatpush1.bf16.msra.mxu0 %v522
      %618 = vmatprep.subr.bf16.mxu0 0
      %619 = vmatpush1.bf16.msra.mxu0 %v523
      %620 = vmatprep.mubr.bf16.mxu0 %v339
      %621 = vmatmul.mubr.bf16.gmra.mrb[0].mxu0 %v338
      %v622 = vpop.f32.mrb[0].mxu0
      %v623 = vadd.f32 %v320, %v622
      %v624 = vpop.f32.mrb[0].mxu0
      %v625 = vpop.f32.mrb[0].mxu0
      %v626 = vadd.f32 %v320, %v625
      %v627 = vpop.f32.mrb[0].mxu0
      %628 = vdwg.mxu0
      %629 = vmatprep.subr.bf16.mxu0 0
      %630 = vmatpush1.bf16.msra.mxu0 %v524
      %631 = vmatprep.subr.bf16.mxu0 0
      %632 = vmatpush1.bf16.msra.mxu0 %v525
      %633 = vmatprep.subr.bf16.mxu0 0
      %634 = vmatpush1.bf16.msra.mxu0 %v526
      %635 = vmatprep.subr.bf16.mxu0 0
      %636 = vmatpush1.bf16.msra.mxu0 %v527
      %637 = vmatprep.subr.bf16.mxu0 0
      %638 = vmatpush1.bf16.msra.mxu0 %v528
      %639 = vmatprep.subr.bf16.mxu0 0
      %640 = vmatpush1.bf16.msra.mxu0 %v529
      %641 = vmatprep.subr.bf16.mxu0 0
      %642 = vmatpush1.bf16.msra.mxu0 %v530
      %643 = vmatprep.subr.bf16.mxu0 0
      %644 = vmatpush1.bf16.msra.mxu0 %v531
      %645 = vmatprep.subr.bf16.mxu0 0
      %646 = vmatpush1.bf16.msra.mxu0 %v532
      %647 = vmatprep.subr.bf16.mxu0 0
      %648 = vmatpush1.bf16.msra.mxu0 %v533
      %649 = vmatprep.subr.bf16.mxu0 0
      %650 = vmatpush1.bf16.msra.mxu0 %v534
      %651 = vmatprep.subr.bf16.mxu0 0
      %652 = vmatpush1.bf16.msra.mxu0 %v535
      %653 = vmatprep.subr.bf16.mxu0 0
      %654 = vmatpush1.bf16.msra.mxu0 %v536
      %655 = vmatprep.subr.bf16.mxu0 0
      %656 = vmatpush1.bf16.msra.mxu0 %v537
      %657 = vmatprep.subr.bf16.mxu0 0
      %658 = vmatpush1.bf16.msra.mxu0 %v538
      %659 = vmatprep.subr.bf16.mxu0 0
      %660 = vmatpush1.bf16.msra.mxu0 %v539
      %661 = vmatprep.mubr.bf16.mxu0 %v341
      %662 = vmatmul.mubr.bf16.gmra.mrb[0].mxu0 %v340
      %v663 = vpop.f32.mrb[0].mxu0
      %v664 = vadd.f32 %v623, %v663
      %v665 = vpop.f32.mrb[0].mxu0
      %v666 = vpop.f32.mrb[0].mxu0
      %v667 = vadd.f32 %v626, %v666
      %v668 = vpop.f32.mrb[0].mxu0
      %669 = vdwg.mxu0
      %670 = vmatprep.subr.bf16.mxu0 0
      %671 = vmatpush1.bf16.msra.mxu0 %v540
      %672 = vmatprep.subr.bf16.mxu0 0
      %673 = vmatpush1.bf16.msra.mxu0 %v541
      %674 = vmatprep.subr.bf16.mxu0 0
      %675 = vmatpush1.bf16.msra.mxu0 %v542
      %676 = vmatprep.subr.bf16.mxu0 0
      %677 = vmatpush1.bf16.msra.mxu0 %v543
      %678 = vmatprep.subr.bf16.mxu0 0
      %679 = vmatpush1.bf16.msra.mxu0 %v544
      %680 = vmatprep.subr.bf16.mxu0 0
      %681 = vmatpush1.bf16.msra.mxu0 %v545
      %682 = vmatprep.subr.bf16.mxu0 0
      %683 = vmatpush1.bf16.msra.mxu0 %v546
      %684 = vmatprep.subr.bf16.mxu0 0
      %685 = vmatpush1.bf16.msra.mxu0 %v547
      %686 = vmatprep.subr.bf16.mxu0 0
      %687 = vmatpush1.bf16.msra.mxu0 0
      %688 = vmatprep.subr.bf16.mxu0 0
      %689 = vmatpush1.bf16.msra.mxu0 0
      %690 = vmatprep.subr.bf16.mxu0 0
      %691 = vmatpush1.bf16.msra.mxu0 0
      %692 = vmatprep.subr.bf16.mxu0 0
      %693 = vmatpush1.bf16.msra.mxu0 0
      %694 = vmatprep.subr.bf16.mxu0 0
      %695 = vmatpush1.bf16.msra.mxu0 0
      %696 = vmatprep.subr.bf16.mxu0 0
      %697 = vmatpush1.bf16.msra.mxu0 0
      %698 = vmatprep.subr.bf16.mxu0 0
      %699 = vmatpush1.bf16.msra.mxu0 0
      %700 = vmatprep.subr.bf16.mxu0 0
      %701 = vmatpush1.bf16.msra.mxu0 0
      %702 = vmatprep.mubr.bf16.mxu0 0
      %703 = vmatmul.mubr.bf16.gmra.mrb[0].mxu0 %v342
      %v704 = vpop.f32.mrb[0].mxu0
      %v705 = vadd.f32 %v664, %v704
      %v706 = vpop.f32.mrb[0].mxu0
      %v707 = vpop.f32.mrb[0].mxu0
      %v708 = vadd.f32 %v667, %v707
      %v709 = vpop.f32.mrb[0].mxu0
      %710 = vdwg.mxu0
      %v711 = vmax.f32 %v705, 0.0
      %v712 = vmax.f32 %v708, 0.0
      %v713 = vpack.c.bf16 %v712, %v711
      %v715 = vunpack.c.l.b16 %v713
      %v716 = vunpack.c.h.b16 %v713
      %v717 = vpack.c.b16 %v715, %v715
      %v718 = vpack.c.b16 %v716, %v716
      %721 = vst [vmem:[%s226] sm:$0xf] %v717
      %722 = vst [vmem:[%s226 + $0x4] sm:$0xf] %v718
      %s723 = smul.u32 2, %s18
      %p724 = scmp.lt.s32.totalorder %s723, 3
      %s725 = scalar_select %p724, %s723, 3
      %p726 = scmp.lt.s32.totalorder %s19, 0
      %s727 = scalar_select %p726, %s19, 0
      %s728 = sadd.s32 %s727, %s725
      %s729 = smul.addr %s728, 4
      %s730 = scalar_lea.vmem %s3, %s729
      // Predicated region
      $region33: #{faster_rcnn_forward.11} parent=31 // pred_check
        %p731 = pneg %p124
      $region34: #{faster_rcnn_forward.11} parent=31 // pred_check_branch
        %733 = sbr.rel (%p731) target = $region36
      $region35: #{faster_rcnn_forward.11} parent=31 // pred_region
        %s734 = smul.u32 2, %s18
      $region36: #{faster_rcnn_forward.11} parent=31 // pred_fallthru
        _
    $region32: #{faster_rcnn_forward.11} parent=5 // pred_fallthru
      _
    %p735 = scmp.le.s32.totalorder 2, %s9
    // Predicated region
    $region37: #{faster_rcnn_forward.11} parent=5 // pred_check
      %p736 = pneg %p735
    $region38: #{faster_rcnn_forward.11} parent=5 // pred_check_branch
      %738 = sbr.rel (%p736) target = $region40
    $region39: #{faster_rcnn_forward.11} parent=5 // pred_region
      %s739 = ssub.s32 %s9, 2
      // Predicated region
      $region41: #{faster_rcnn_forward.11} parent=39 // pred_check
        %p740 = pneg %p130
      $region42: #{faster_rcnn_forward.11} parent=39 // pred_check_branch
        %742 = sbr.rel (%p740) target = $region44
      $region43: #{faster_rcnn_forward.11} parent=39 // pred_region
        %s743 = smul.u32 2, %s20
        %p744 = scmp.lt.s32.totalorder %s743, 3
        %s745 = scalar_select %p744, %s743, 3
        %p746 = scmp.lt.s32.totalorder %s21, 0
        %s747 = scalar_select %p746, %s21, 0
        %s748 = sadd.s32 %s747, %s745
        %s749 = smul.addr %s748, 4
        %s750 = scalar_lea.vmem %s3, %s749
      $region44: #{faster_rcnn_forward.11} parent=39 // pred_fallthru
        _
    $region40: #{faster_rcnn_forward.11} parent=5 // pred_fallthru
      _
  $region6: #{faster_rcnn_forward.11} parent=0 // loop_footer
    %s13 = sadd.s32 1, %s9
  $region7: #{faster_rcnn_forward.11} parent=0 // loop_footer_branch
    %8 = sbr.rel target = $region3
  $region8: #{faster_rcnn_forward.11} parent=0 // loop_exit
    _

// kernel: faster_rcnn_forward.13
$region0: #{faster_rcnn_forward.13}
  #allocation0 [shape = 'u32[]', space=smem, size = 0x4, offset = 0x4, fixed_abs, tag = 'smem constant byte address 0x4 - core index']
  #allocation1 [shape = 'u32[144,128]{1,0:T(1,128)}', space=vmem, size = 0x12000, scoped, tag = 'internal scratch']
  %s0 = inlined_call_operand.vmem [shape: bf16[16,256], index: 0, kind: input, shape index: {}]
  %s1 = inlined_call_operand.vmem [shape: bf16[256,128], index: 1, kind: input, shape index: {}]
  %s2 = inlined_call_operand.vmem [shape: f32[1,128], index: 2, kind: input, shape index: {}]
  %s3 = inlined_call_operand.vmem [shape: bf16[128,128], index: 3, kind: input, shape index: {}]
  %s4 = inlined_call_operand.vmem [shape: f32[1,128], index: 4, kind: input, shape index: {}]
  %s5 = inlined_call_operand.vmem [shape: bf16[128,128], index: 5, kind: input, shape index: {}]
  %s6 = inlined_call_operand.vmem [shape: f32[1,128], index: 6, kind: input, shape index: {}]
  %s7 = inlined_call_operand.vmem [shape: f32[16,128], index: 7, kind: output, shape index: {}]
  %s8 = sld [smem:[#allocation0]]
  $region38: #{faster_rcnn_forward.13} parent=0
    _
  %s10 = ssub.s32 1, %s8
  %s11 = scalar_select 0, %s10, %s8
  // Predicated region
  $region2: #{faster_rcnn_forward.13} parent=0 // pred_check
    _
  $region3: #{faster_rcnn_forward.13} parent=0 // pred_check_branch
    %13 = sbr.rel (0) target = $region5
  $region4: #{faster_rcnn_forward.13} parent=0 // pred_region
    _
  $region5: #{faster_rcnn_forward.13} parent=0 // pred_fallthru
    _
  // Predicated region
  $region6: #{faster_rcnn_forward.13} parent=0 // pred_check
    _
  $region7: #{faster_rcnn_forward.13} parent=0 // pred_check_branch
    %15 = sbr.rel (0) target = $region9
  $region8: #{faster_rcnn_forward.13} parent=0 // pred_region
    _
  $region9: #{faster_rcnn_forward.13} parent=0 // pred_fallthru
    _
  // Predicated region
  $region10: #{faster_rcnn_forward.13} parent=0 // pred_check
    _
  $region11: #{faster_rcnn_forward.13} parent=0 // pred_check_branch
    %17 = sbr.rel (0) target = $region13
  $region12: #{faster_rcnn_forward.13} parent=0 // pred_region
    _
  $region13: #{faster_rcnn_forward.13} parent=0 // pred_fallthru
    _
  // Predicated region
  $region14: #{faster_rcnn_forward.13} parent=0 // pred_check
    _
  $region15: #{faster_rcnn_forward.13} parent=0 // pred_check_branch
    %19 = sbr.rel (0) target = $region17
  $region16: #{faster_rcnn_forward.13} parent=0 // pred_region
    _
  $region17: #{faster_rcnn_forward.13} parent=0 // pred_fallthru
    _
  // Predicated region
  $region18: #{faster_rcnn_forward.13} parent=0 // pred_check
    _
  $region19: #{faster_rcnn_forward.13} parent=0 // pred_check_branch
    %21 = sbr.rel (0) target = $region21
  $region20: #{faster_rcnn_forward.13} parent=0 // pred_region
    _
  $region21: #{faster_rcnn_forward.13} parent=0 // pred_fallthru
    _
  // Predicated region
  $region22: #{faster_rcnn_forward.13} parent=0 // pred_check
    _
  $region23: #{faster_rcnn_forward.13} parent=0 // pred_check_branch
    %23 = sbr.rel (0) target = $region25
  $region24: #{faster_rcnn_forward.13} parent=0 // pred_region
    _
  $region25: #{faster_rcnn_forward.13} parent=0 // pred_fallthru
    _
  // Predicated region
  $region26: #{faster_rcnn_forward.13} parent=0 // pred_check
    _
  $region27: #{faster_rcnn_forward.13} parent=0 // pred_check_branch
    %25 = sbr.rel (0) target = $region29
  $region28: #{faster_rcnn_forward.13} parent=0 // pred_region
    _
  $region29: #{faster_rcnn_forward.13} parent=0 // pred_fallthru
    _
  %v27 = vld [vmem:[%s0] sm:$0xff]
  %v28 = vld [vmem:[%s0 + $0x8] sm:$0xff]
  %v29 = vld [vmem:[%s1] sm:$0xf]
  %v30 = vld [vmem:[%s1 + $0x4] sm:$0xf]
  %v31 = vld [vmem:[%s1 + $0x8] sm:$0xf]
  %v32 = vld [vmem:[%s1 + $0xc] sm:$0xf]
  %v33 = vld [vmem:[%s1 + $0x10] sm:$0xf]
  %v34 = vld [vmem:[%s1 + $0x14] sm:$0xf]
  %v35 = vld [vmem:[%s1 + $0x18] sm:$0xf]
  %v36 = vld [vmem:[%s1 + $0x1c] sm:$0xf]
  %v37 = vld [vmem:[%s1 + $0x20] sm:$0xf]
  %v38 = vld [vmem:[%s1 + $0x24] sm:$0xf]
  %v39 = vld [vmem:[%s1 + $0x28] sm:$0xf]
  %v40 = vld [vmem:[%s1 + $0x2c] sm:$0xf]
  %v41 = vld [vmem:[%s1 + $0x30] sm:$0xf]
  %v42 = vld [vmem:[%s1 + $0x34] sm:$0xf]
  %v43 = vld [vmem:[%s1 + $0x38] sm:$0xf]
  %v44 = vld [vmem:[%s1 + $0x3c] sm:$0xf]
  %v45 = vld [vmem:[%s1 + $0x40] sm:$0xf]
  %v46 = vld [vmem:[%s1 + $0x44] sm:$0xf]
  %v47 = vld [vmem:[%s1 + $0x48] sm:$0xf]
  %v48 = vld [vmem:[%s1 + $0x4c] sm:$0xf]
  %v49 = vld [vmem:[%s1 + $0x50] sm:$0xf]
  %v50 = vld [vmem:[%s1 + $0x54] sm:$0xf]
  %v51 = vld [vmem:[%s1 + $0x58] sm:$0xf]
  %v52 = vld [vmem:[%s1 + $0x5c] sm:$0xf]
  %v53 = vld [vmem:[%s1 + $0x60] sm:$0xf]
  %v54 = vld [vmem:[%s1 + $0x64] sm:$0xf]
  %v55 = vld [vmem:[%s1 + $0x68] sm:$0xf]
  %v56 = vld [vmem:[%s1 + $0x6c] sm:$0xf]
  %v57 = vld [vmem:[%s1 + $0x70] sm:$0xf]
  %v58 = vld [vmem:[%s1 + $0x74] sm:$0xf]
  %v59 = vld [vmem:[%s1 + $0x78] sm:$0xf]
  %v60 = vld [vmem:[%s1 + $0x7c] sm:$0xf]
  %v61 = vld [vmem:[%s2] sm:$0x1]
  %v63 = vlaneseq
  %v64 = vshrl.u32 %v63, 7
  %v65 = vsub.s32 0, %v64
  %v66 = vrot.slane %v61, %v65
  %v70 = vunpack.c.l.b16 %v27
  %v71 = vunpack.c.h.b16 %v27
  %v72 = vunpack.c.l.b16 %v28
  %v73 = vunpack.c.h.b16 %v28
  %v74 = vpack.c.b16 %v72, %v70
  %v75 = vpack.c.b16 %v73, %v71
  %v110 = vunpack.c.l.b16 %v29
  %v111 = vunpack.c.l.b16 %v30
  %v112 = vunpack.c.l.b16 %v31
  %v113 = vunpack.c.l.b16 %v32
  %v114 = vunpack.c.l.b16 %v33
  %v115 = vunpack.c.l.b16 %v34
  %v116 = vunpack.c.l.b16 %v35
  %v117 = vunpack.c.l.b16 %v36
  %v118 = vunpack.c.l.b16 %v37
  %v119 = vunpack.c.l.b16 %v38
  %v120 = vunpack.c.l.b16 %v39
  %v121 = vunpack.c.l.b16 %v40
  %v122 = vunpack.c.l.b16 %v41
  %v123 = vunpack.c.l.b16 %v42
  %v124 = vunpack.c.l.b16 %v43
  %v125 = vunpack.c.l.b16 %v44
  %v126 = vunpack.c.l.b16 %v45
  %v127 = vunpack.c.l.b16 %v46
  %v128 = vunpack.c.l.b16 %v47
  %v129 = vunpack.c.l.b16 %v48
  %v130 = vunpack.c.l.b16 %v49
  %v131 = vunpack.c.l.b16 %v50
  %v132 = vunpack.c.l.b16 %v51
  %v133 = vunpack.c.l.b16 %v52
  %v134 = vunpack.c.l.b16 %v53
  %v135 = vunpack.c.l.b16 %v54
  %v136 = vunpack.c.l.b16 %v55
  %v137 = vunpack.c.l.b16 %v56
  %v138 = vunpack.c.l.b16 %v57
  %v139 = vunpack.c.l.b16 %v58
  %v140 = vunpack.c.l.b16 %v59
  %v141 = vunpack.c.l.b16 %v60
  %v142 = vpack.c.b16 %v111, %v110
  %v143 = vpack.c.b16 %v113, %v112
  %v144 = vpack.c.b16 %v115, %v114
  %v145 = vpack.c.b16 %v117, %v116
  %v146 = vpack.c.b16 %v119, %v118
  %v147 = vpack.c.b16 %v121, %v120
  %v148 = vpack.c.b16 %v123, %v122
  %v149 = vpack.c.b16 %v125, %v124
  %v150 = vpack.c.b16 %v127, %v126
  %v151 = vpack.c.b16 %v129, %v128
  %v152 = vpack.c.b16 %v131, %v130
  %v153 = vpack.c.b16 %v133, %v132
  %v154 = vpack.c.b16 %v135, %v134
  %v155 = vpack.c.b16 %v137, %v136
  %v156 = vpack.c.b16 %v139, %v138
  %v157 = vpack.c.b16 %v141, %v140
  %174 = vmatprep.subr.bf16.mxu0 0
  %175 = vmatpush1.bf16.msra.mxu0 %v142
  %176 = vmatprep.subr.bf16.mxu0 0
  %177 = vmatpush1.bf16.msra.mxu0 %v143
  %178 = vmatprep.subr.bf16.mxu0 0
  %179 = vmatpush1.bf16.msra.mxu0 %v144
  %180 = vmatprep.subr.bf16.mxu0 0
  %181 = vmatpush1.bf16.msra.mxu0 %v145
  %182 = vmatprep.subr.bf16.mxu0 0
  %183 = vmatpush1.bf16.msra.mxu0 %v146
  %184 = vmatprep.subr.bf16.mxu0 0
  %185 = vmatpush1.bf16.msra.mxu0 %v147
  %186 = vmatprep.subr.bf16.mxu0 0
  %187 = vmatpush1.bf16.msra.mxu0 %v148
  %188 = vmatprep.subr.bf16.mxu0 0
  %189 = vmatpush1.bf16.msra.mxu0 %v149
  %190 = vmatprep.subr.bf16.mxu0 0
  %191 = vmatpush1.bf16.msra.mxu0 %v150
  %192 = vmatprep.subr.bf16.mxu0 0
  %193 = vmatpush1.bf16.msra.mxu0 %v151
  %194 = vmatprep.subr.bf16.mxu0 0
  %195 = vmatpush1.bf16.msra.mxu0 %v152
  %196 = vmatprep.subr.bf16.mxu0 0
  %197 = vmatpush1.bf16.msra.mxu0 %v153
  %198 = vmatprep.subr.bf16.mxu0 0
  %199 = vmatpush1.bf16.msra.mxu0 %v154
  %200 = vmatprep.subr.bf16.mxu0 0
  %201 = vmatpush1.bf16.msra.mxu0 %v155
  %202 = vmatprep.subr.bf16.mxu0 0
  %203 = vmatpush1.bf16.msra.mxu0 %v156
  %204 = vmatprep.subr.bf16.mxu0 0
  %205 = vmatpush1.bf16.msra.mxu0 %v157
  %206 = vmatprep.mubr.bf16.mxu0 %v75
  %207 = vmatmul.mubr.bf16.gmra.mrb[0].mxu0 %v74
  %v208 = vpop.f32.mrb[0].mxu0
  %v209 = vadd.f32 %v66, %v208
  %v210 = vpop.f32.mrb[0].mxu0
  %v211 = vpop.f32.mrb[0].mxu0
  %v212 = vadd.f32 %v66, %v211
  %v213 = vpop.f32.mrb[0].mxu0
  %214 = vdwg.mxu0
  %v215 = vmax.f32 %v209, 0.0
  %v216 = vmax.f32 %v212, 0.0
  %v217 = vpack.c.bf16 %v216, %v215
  %v218 = vld [vmem:[%s3] sm:$0xf]
  %v219 = vld [vmem:[%s3 + $0x4] sm:$0xf]
  %v220 = vld [vmem:[%s3 + $0x8] sm:$0xf]
  %v221 = vld [vmem:[%s3 + $0xc] sm:$0xf]
  %v222 = vld [vmem:[%s3 + $0x10] sm:$0xf]
  %v223 = vld [vmem:[%s3 + $0x14] sm:$0xf]
  %v224 = vld [vmem:[%s3 + $0x18] sm:$0xf]
  %v225 = vld [vmem:[%s3 + $0x1c] sm:$0xf]
  %v226 = vld [vmem:[%s3 + $0x20] sm:$0xf]
  %v227 = vld [vmem:[%s3 + $0x24] sm:$0xf]
  %v228 = vld [vmem:[%s3 + $0x28] sm:$0xf]
  %v229 = vld [vmem:[%s3 + $0x2c] sm:$0xf]
  %v230 = vld [vmem:[%s3 + $0x30] sm:$0xf]
  %v231 = vld [vmem:[%s3 + $0x34] sm:$0xf]
  %v232 = vld [vmem:[%s3 + $0x38] sm:$0xf]
  %v233 = vld [vmem:[%s3 + $0x3c] sm:$0xf]
  %v234 = vld [vmem:[%s4] sm:$0x1]
  %v236 = vlaneseq
  %v237 = vshrl.u32 %v236, 7
  %v238 = vsub.s32 0, %v237
  %v239 = vrot.slane %v234, %v238
  %v257 = vunpack.c.l.b16 %v218
  %v258 = vunpack.c.l.b16 %v219
  %v259 = vunpack.c.l.b16 %v220
  %v260 = vunpack.c.l.b16 %v221
  %v261 = vunpack.c.l.b16 %v222
  %v262 = vunpack.c.l.b16 %v223
  %v263 = vunpack.c.l.b16 %v224
  %v264 = vunpack.c.l.b16 %v225
  %v265 = vunpack.c.l.b16 %v226
  %v266 = vunpack.c.l.b16 %v227
  %v267 = vunpack.c.l.b16 %v228
  %v268 = vunpack.c.l.b16 %v229
  %v269 = vunpack.c.l.b16 %v230
  %v270 = vunpack.c.l.b16 %v231
  %v271 = vunpack.c.l.b16 %v232
  %v272 = vunpack.c.l.b16 %v233
  %v273 = vpack.c.b16 %v258, %v257
  %v274 = vpack.c.b16 %v260, %v259
  %v275 = vpack.c.b16 %v262, %v261
  %v276 = vpack.c.b16 %v264, %v263
  %v277 = vpack.c.b16 %v266, %v265
  %v278 = vpack.c.b16 %v268, %v267
  %v279 = vpack.c.b16 %v270, %v269
  %v280 = vpack.c.b16 %v272, %v271
  %289 = vmatprep.subr.bf16.mxu0 0
  %290 = vmatpush1.bf16.msra.mxu0 %v273
  %291 = vmatprep.subr.bf16.mxu0 0
  %292 = vmatpush1.bf16.msra.mxu0 %v274
  %293 = vmatprep.subr.bf16.mxu0 0
  %294 = vmatpush1.bf16.msra.mxu0 %v275
  %295 = vmatprep.subr.bf16.mxu0 0
  %296 = vmatpush1.bf16.msra.mxu0 %v276
  %297 = vmatprep.subr.bf16.mxu0 0
  %298 = vmatpush1.bf16.msra.mxu0 %v277
  %299 = vmatprep.subr.bf16.mxu0 0
  %300 = vmatpush1.bf16.msra.mxu0 %v278
  %301 = vmatprep.subr.bf16.mxu0 0
  %302 = vmatpush1.bf16.msra.mxu0 %v279
  %303 = vmatprep.subr.bf16.mxu0 0
  %304 = vmatpush1.bf16.msra.mxu0 %v280
  %305 = vmatprep.subr.bf16.mxu0 0
  %306 = vmatpush1.bf16.msra.mxu0 0
  %307 = vmatprep.subr.bf16.mxu0 0
  %308 = vmatpush1.bf16.msra.mxu0 0
  %309 = vmatprep.subr.bf16.mxu0 0
  %310 = vmatpush1.bf16.msra.mxu0 0
  %311 = vmatprep.subr.bf16.mxu0 0
  %312 = vmatpush1.bf16.msra.mxu0 0
  %313 = vmatprep.subr.bf16.mxu0 0
  %314 = vmatpush1.bf16.msra.mxu0 0
  %315 = vmatprep.subr.bf16.mxu0 0
  %316 = vmatpush1.bf16.msra.mxu0 0
  %317 = vmatprep.subr.bf16.mxu0 0
  %318 = vmatpush1.bf16.msra.mxu0 0
  %319 = vmatprep.subr.bf16.mxu0 0
  %320 = vmatpush1.bf16.msra.mxu0 0
  %321 = vmatprep.mubr.bf16.mxu0 0
  %322 = vmatmul.mubr.bf16.gmra.mrb[0].mxu0 %v217
  %v323 = vpop.f32.mrb[0].mxu0
  %v324 = vadd.f32 %v239, %v323
  %v325 = vpop.f32.mrb[0].mxu0
  %v326 = vpop.f32.mrb[0].mxu0
  %v327 = vadd.f32 %v239, %v326
  %v328 = vpop.f32.mrb[0].mxu0
  %329 = vdwg.mxu0
  %v330 = vmax.f32 %v324, 0.0
  %v331 = vmax.f32 %v327, 0.0
  %v332 = vpack.c.bf16 %v331, %v330
  %v333 = vld [vmem:[%s5] sm:$0xf]
  %v334 = vld [vmem:[%s5 + $0x4] sm:$0xf]
  %v335 = vld [vmem:[%s5 + $0x8] sm:$0xf]
  %v336 = vld [vmem:[%s5 + $0xc] sm:$0xf]
  %v337 = vld [vmem:[%s5 + $0x10] sm:$0xf]
  %v338 = vld [vmem:[%s5 + $0x14] sm:$0xf]
  %v339 = vld [vmem:[%s5 + $0x18] sm:$0xf]
  %v340 = vld [vmem:[%s5 + $0x1c] sm:$0xf]
  %v341 = vld [vmem:[%s5 + $0x20] sm:$0xf]
  %v342 = vld [vmem:[%s5 + $0x24] sm:$0xf]
  %v343 = vld [vmem:[%s5 + $0x28] sm:$0xf]
  %v344 = vld [vmem:[%s5 + $0x2c] sm:$0xf]
  %v345 = vld [vmem:[%s5 + $0x30] sm:$0xf]
  %v346 = vld [vmem:[%s5 + $0x34] sm:$0xf]
  %v347 = vld [vmem:[%s5 + $0x38] sm:$0xf]
  %v348 = vld [vmem:[%s5 + $0x3c] sm:$0xf]
  %v349 = vld [vmem:[%s6] sm:$0x1]
  %v351 = vlaneseq
  %v352 = vshrl.u32 %v351, 7
  %v353 = vsub.s32 0, %v352
  %v354 = vrot.slane %v349, %v353
  %v372 = vunpack.c.l.b16 %v333
  %v373 = vunpack.c.l.b16 %v334
  %v374 = vunpack.c.l.b16 %v335
  %v375 = vunpack.c.l.b16 %v336
  %v376 = vunpack.c.l.b16 %v337
  %v377 = vunpack.c.l.b16 %v338
  %v378 = vunpack.c.l.b16 %v339
  %v379 = vunpack.c.l.b16 %v340
  %v380 = vunpack.c.l.b16 %v341
  %v381 = vunpack.c.l.b16 %v342
  %v382 = vunpack.c.l.b16 %v343
  %v383 = vunpack.c.l.b16 %v344
  %v384 = vunpack.c.l.b16 %v345
  %v385 = vunpack.c.l.b16 %v346
  %v386 = vunpack.c.l.b16 %v347
  %v387 = vunpack.c.l.b16 %v348
  %v388 = vpack.c.b16 %v373, %v372
  %v389 = vpack.c.b16 %v375, %v374
  %v390 = vpack.c.b16 %v377, %v376
  %v391 = vpack.c.b16 %v379, %v378
  %v392 = vpack.c.b16 %v381, %v380
  %v393 = vpack.c.b16 %v383, %v382
  %v394 = vpack.c.b16 %v385, %v384
  %v395 = vpack.c.b16 %v387, %v386
  %404 = vmatprep.subr.bf16.mxu0 0
  %405 = vmatpush1.bf16.msra.mxu0 %v388
  %406 = vmatprep.subr.bf16.mxu0 0
  %407 = vmatpush1.bf16.msra.mxu0 %v389
  %408 = vmatprep.subr.bf16.mxu0 0
  %409 = vmatpush1.bf16.msra.mxu0 %v390
  %410 = vmatprep.subr.bf16.mxu0 0
  %411 = vmatpush1.bf16.msra.mxu0 %v391
  %412 = vmatprep.subr.bf16.mxu0 0
  %413 = vmatpush1.bf16.msra.mxu0 %v392
  %414 = vmatprep.subr.bf16.mxu0 0
  %415 = vmatpush1.bf16.msra.mxu0 %v393
  %416 = vmatprep.subr.bf16.mxu0 0
  %417 = vmatpush1.bf16.msra.mxu0 %v394
  %418 = vmatprep.subr.bf16.mxu0 0
  %419 = vmatpush1.bf16.msra.mxu0 %v395
  %420 = vmatprep.subr.bf16.mxu0 0
  %421 = vmatpush1.bf16.msra.mxu0 0
  %422 = vmatprep.subr.bf16.mxu0 0
  %423 = vmatpush1.bf16.msra.mxu0 0
  %424 = vmatprep.subr.bf16.mxu0 0
  %425 = vmatpush1.bf16.msra.mxu0 0
  %426 = vmatprep.subr.bf16.mxu0 0
  %427 = vmatpush1.bf16.msra.mxu0 0
  %428 = vmatprep.subr.bf16.mxu0 0
  %429 = vmatpush1.bf16.msra.mxu0 0
  %430 = vmatprep.subr.bf16.mxu0 0
  %431 = vmatpush1.bf16.msra.mxu0 0
  %432 = vmatprep.subr.bf16.mxu0 0
  %433 = vmatpush1.bf16.msra.mxu0 0
  %434 = vmatprep.subr.bf16.mxu0 0
  %435 = vmatpush1.bf16.msra.mxu0 0
  %436 = vmatprep.mubr.bf16.mxu0 0
  %437 = vmatmul.mubr.bf16.gmra.mrb[0].mxu0 %v332
  %v438 = vpop.f32.mrb[0].mxu0
  %v439 = vadd.f32 %v354, %v438
  %v440 = vpop.f32.mrb[0].mxu0
  %v441 = vpop.f32.mrb[0].mxu0
  %v442 = vadd.f32 %v354, %v441
  %v443 = vpop.f32.mrb[0].mxu0
  %444 = vdwg.mxu0
  %445 = vst [vmem:[%s7] sm:$0xff] %v439
  %446 = vst [vmem:[%s7 + $0x8] sm:$0xff] %v442
  // Predicated region
  $region30: #{faster_rcnn_forward.13} parent=0 // pred_check
    _
  $region31: #{faster_rcnn_forward.13} parent=0 // pred_check_branch
    %448 = sbr.rel (0) target = $region33
  $region32: #{faster_rcnn_forward.13} parent=0 // pred_region
    _
  $region33: #{faster_rcnn_forward.13} parent=0 // pred_fallthru
    _
  // Predicated region
  $region34: #{faster_rcnn_forward.13} parent=0 // pred_check
    _
  $region35: #{faster_rcnn_forward.13} parent=0 // pred_check_branch
    %450 = sbr.rel (0) target = $region37
  $region36: #{faster_rcnn_forward.13} parent=0 // pred_region
    _
  $region37: #{faster_rcnn_forward.13} parent=0 // pred_fallthru
    _

</llo_original>
